<compile_context>
chip_gen: v5e
topology: v5e:2x2
jax: 0.10.0
libtpu: 0.0.40
codegen_flags: <defaults>
</compile_context>

<pallas_src>
import functools
import math

import jax
import jax.numpy as jnp
from jax.experimental import pallas as pl
from jax.experimental.pallas import tpu as pltpu


def _exp_dtype():
    # bf16 exp on the EUP is ~2x faster on v6e/v7x; v5-and-older chips have no bf16
    # EUP/VPU, so keep the softmax exp in f32 there.
    try:
        kind = jax.devices()[0].device_kind.lower()
    except Exception:
        return jnp.float32
    if any(v in kind for v in ("v2", "v3", "v4", "v5")):
        return jnp.float32
    return jnp.bfloat16


def residual_gat_kernel(occ_ref, h_ref, asrc_ref, adst_ref, mask_ref,
                        x_dst_ref, bias_ref, out_ref,
                        m_sc, l_sc, acc_sc, *, exp_dtype):
    i = pl.program_id(0)          # destination-node tile ("parallel")
    j = pl.program_id(1)          # source-node tile ("arbitrary" / reduction)

    @pl.when(j == 0)
    def _init():
        m_sc[...] = jnp.full_like(m_sc, -jnp.inf)
        l_sc[...] = jnp.zeros_like(l_sc)
        acc_sc[...] = jnp.zeros_like(acc_sc)

    # Skip source tiles with no edge into this destination tile (occupancy table in SMEM).
    # Skipping is exact: an all-masked block contributes 0 after the online-softmax
    # rescale, and every row's diagonal (self-loop) block is always occupied.
    @pl.when(occ_ref[i, j] != 0)
    def _block():
        # Raw logits for this (dst, src) block: LeakyReLU(a_dst_i + a_src_j, 0.2).
        e = adst_ref[...] + asrc_ref[...]                  # (tile_i, tile_j) f32
        e = jnp.maximum(e, 0.2 * e)                        # LeakyReLU as a single vmax
        # int8 adjacency (0/1) -> mask non-edges to -1e30.
        adj = mask_ref[...].astype(jnp.float32)
        e = jnp.where(adj > 0.5, e, -1e30)

        # Online (flash-style) softmax update.
        m_new = jnp.maximum(m_sc[...], jnp.max(e, axis=-1, keepdims=True))
        alpha = jnp.exp(m_sc[...] - m_new)                 # (tile_i, 1) rescale factor
        p = jnp.exp((e - m_new).astype(exp_dtype))         # bf16 exp on v6e/v7x
        l_sc[...] = alpha * l_sc[...] + jnp.sum(
            p.astype(jnp.float32), axis=-1, keepdims=True)
        # Unnormalized aggregation on the MXU (bf16 operands, f32 accumulation).
        acc_sc[...] = alpha * acc_sc[...] + jnp.dot(
            p.astype(jnp.bfloat16), h_ref[...],
            preferred_element_type=jnp.float32)
        m_sc[...] = m_new

    @pl.when(j == pl.num_programs(1) - 1)
    def _finalize():
        # Deferred softmax normalization (EUP vrcp), bias, ELU(alpha=1), residual add.
        gat = acc_sc[...] * pl.reciprocal(l_sc[...], approx=True) + bias_ref[...]
        y = jnp.where(gat > 0, gat, jnp.exp(jnp.minimum(gat, 0.0)) - 1.0)
        out_ref[...] = (y + x_dst_ref[...]).astype(out_ref.dtype)


def residual_gat_layer(x, edge_index, w, att_src, att_dst, bias,
                       *, tile_i=256, tile_j=256):
    """x: (N, F_in) float32; edge_index: (2, E) int32 with row0 = src, row1 = dst."""
    N, f_in = x.shape
    f_out = w.shape[1]
    # The residual add silently requires in_channels == heads * out_channels.
    assert f_in == f_out, "residual add requires in_channels == heads*out_channels"

    f_pad = 128 * pl.cdiv(f_out, 128)                 # lane-dense feature dim
    step = math.lcm(tile_i, tile_j)
    n_pad = step * pl.cdiv(N, step)                   # whole number of i and j tiles
    n_i = n_pad // tile_i
    n_j = n_pad // tile_j

    # ---------- prologue (plain XLA, hoisted out of the grid loop) ----------
    x_pad = jnp.zeros((n_pad, f_pad), jnp.float32).at[:N, :f_in].set(
        x.astype(jnp.float32))
    w_pad = jnp.zeros((f_pad, f_pad), jnp.float32).at[:f_in, :f_out].set(w)
    bias_pad = jnp.zeros((1, f_pad), jnp.float32).at[:, :f_out].set(bias)
    asrc_pad = jnp.zeros((f_pad, 1), jnp.float32).at[:f_out, 0].set(att_src.reshape(-1))
    adst_pad = jnp.zeros((f_pad, 1), jnp.float32).at[:f_out, 0].set(att_dst.reshape(-1))

    h = x_pad @ w_pad                                  # (n_pad, f_pad) projection, once
    a_src = (h @ asrc_pad).T                           # (1, n_pad)
    a_dst = h @ adst_pad                               # (n_pad, 1)
    h_bf16 = h.astype(jnp.bfloat16)                    # MXU operand for the kernel

    # int8 adjacency adj[dst, src] (PyG-style self-loops on every row, incl. padded rows
    # so every softmax denominator stays strictly positive). Padded rows/cols stay zero
    # through the whole computation for real nodes and are sliced off at the end.
    adj = jnp.zeros((n_pad, n_pad), jnp.int8)
    adj = adj.at[edge_index[1], edge_index[0]].set(1)
    diag = jnp.arange(n_pad)
    adj = adj.at[diag, diag].set(1)

    # Block occupancy table, scalar-prefetched into SMEM: skip all-masked (i, j) blocks.
    occ = (adj.reshape(n_i, tile_i, n_j, tile_j).astype(jnp.int32)
              .sum(axis=(1, 3)) > 0).astype(jnp.int32)

    kernel = functools.partial(residual_gat_kernel, exp_dtype=_exp_dtype())

    grid_spec = pltpu.PrefetchScalarGridSpec(
        num_scalar_prefetch=1,
        grid=(n_i, n_j),
        in_specs=[
            pl.BlockSpec((tile_j, f_pad), lambda i, j, occ: (j, 0)),    # h (bf16)
            pl.BlockSpec((1, tile_j), lambda i, j, occ: (0, j)),        # a_src
            pl.BlockSpec((tile_i, 1), lambda i, j, occ: (i, 0)),        # a_dst
            pl.BlockSpec((tile_i, tile_j), lambda i, j, occ: (i, j)),   # adjacency (int8)
            pl.BlockSpec((tile_i, f_pad), lambda i, j, occ: (i, 0)),    # x dst (residual)
            pl.BlockSpec((1, f_pad), lambda i, j, occ: (0, 0)),         # bias
        ],
        out_specs=pl.BlockSpec((tile_i, f_pad), lambda i, j, occ: (i, 0)),
        scratch_shapes=[
            pltpu.VMEM((tile_i, 1), jnp.float32),      # m: running row max
            pltpu.VMEM((tile_i, 1), jnp.float32),      # l: running denominator
            pltpu.VMEM((tile_i, f_pad), jnp.float32),  # acc: unnormalized aggregation
        ],
    )

    out_pad = pl.pallas_call(
        kernel,
        out_shape=jax.ShapeDtypeStruct((n_pad, f_pad), jnp.float32),
        grid_spec=grid_spec,
        compiler_params=pltpu.CompilerParams(
            dimension_semantics=("parallel", "arbitrary"),
            vmem_limit_bytes=48 * 1024 * 1024),
    )(occ, h_bf16, a_src, a_dst, adj, x_pad, bias_pad)

    return out_pad[:N, :f_out].astype(x.dtype)


if __name__ == "__main__":
    # Small shapes consistent with the module: residual add requires
    # in_channels == heads * out_channels.
    N = 16            # number of nodes
    IN_CH = 32
    OUT_CH = 32
    HEADS = 1         # heads=1 (GATConv default in the module)

    key = jax.random.PRNGKey(0)
    k_x, k_e, k_w, k_as, k_ad, k_b = jax.random.split(key, 6)

    x = jax.random.normal(k_x, (N, IN_CH), jnp.float32)

    # Deterministic random edge list (2, E): row0 = source, row1 = destination.
    E = 48
    src = jax.random.randint(k_e, (E,), 0, N, jnp.int32)
    dst = jax.random.randint(jax.random.fold_in(k_e, 1), (E,), 0, N, jnp.int32)
    edge_index = jnp.stack([src, dst], axis=0)

    # GATConv parameters (deterministic init):
    #   lin.weight: (heads*out, in) in torch -> use (in, heads*out) here
    #   att_src, att_dst: (1, heads, out) -> (1, out) with heads=1
    #   bias: (heads*out,) -> (1, out)
    w = jax.random.normal(k_w, (IN_CH, HEADS * OUT_CH), jnp.float32) * 0.1
    att_src = jax.random.normal(k_as, (1, HEADS * OUT_CH), jnp.float32) * 0.1
    att_dst = jax.random.normal(k_ad, (1, HEADS * OUT_CH), jnp.float32) * 0.1
    bias = jax.random.normal(k_b, (1, HEADS * OUT_CH), jnp.float32) * 0.1

    out = residual_gat_layer(x, edge_index, w, att_src, att_dst, bias)
    jax.block_until_ready(out)
    assert out.shape == (N, HEADS * OUT_CH)
    print("KERNEL_OK")
</pallas_src>

<mosaic_0001>
module attributes {stable_mosaic.version = 11 : i64} {
  func.func @residual_gat_kernel(%arg0: i32, %arg1: i32, %arg2: memref<1x1xi32, #tpu.memory_space<smem>>, %arg3: memref<256x128xbf16, #tpu.memory_space<vmem>>, %arg4: memref<1x256xf32, #tpu.memory_space<vmem>>, %arg5: memref<256x1xf32, #tpu.memory_space<vmem>>, %arg6: memref<256x256xi8, #tpu.memory_space<vmem>>, %arg7: memref<256x128xf32, #tpu.memory_space<vmem>>, %arg8: memref<1x128xf32, #tpu.memory_space<vmem>>, %arg9: memref<256x128xf32, #tpu.memory_space<vmem>>, %arg10: memref<256x1xf32, #tpu.memory_space<vmem>>, %arg11: memref<256x1xf32, #tpu.memory_space<vmem>>, %arg12: memref<256x128xf32, #tpu.memory_space<vmem>>) attributes {dimension_semantics = [#tpu.dimension_semantics<parallel>, #tpu.dimension_semantics<arbitrary>], iteration_bounds = array<i64: 1, 1>, scalar_prefetch = 1 : i64, scratch_operands = 3 : i64, tpu.core_type = #tpu.core_type<tc>, window_params = [{transform_indices = @transform_0, window_bounds = array<i64: 256, 128>}, {transform_indices = @transform_1, window_bounds = array<i64: 1, 256>}, {transform_indices = @transform_2, window_bounds = array<i64: 256, 1>}, {transform_indices = @transform_3, window_bounds = array<i64: 256, 256>}, {transform_indices = @transform_4, window_bounds = array<i64: 256, 128>}, {pipeline_mode = #tpu.pipeline_mode<synchronous>, transform_indices = @transform_5, window_bounds = array<i64: 1, 128>}, {transform_indices = @transform_6, window_bounds = array<i64: 256, 128>}]} {
    %c0_i32 = arith.constant 0 : i32
    %0 = arith.cmpi eq, %arg1, %c0_i32 : i32
    %1 = arith.extui %0 : i1 to i32
    %c0_i32_0 = arith.constant 0 : i32
    %2 = arith.cmpi ne, %1, %c0_i32_0 : i32
    scf.if %2 {
      %cst = arith.constant 0xFF800000 : f32
      %12 = vector.broadcast %cst : f32 to vector<256x1xf32>
      %c0 = arith.constant 0 : index
      %c0_5 = arith.constant 0 : index
      %13 = vector.load %arg10[%c0, %c0_5] : memref<256x1xf32, #tpu.memory_space<vmem>>, vector<256x1xf32>
      tpu.vector_store %arg10[%c0, %c0_5], %12 {strides = array<i32>} : memref<256x1xf32, #tpu.memory_space<vmem>>, vector<256x1xf32>,
      %cst_6 = arith.constant 0.000000e+00 : f32
      %14 = vector.broadcast %cst_6 : f32 to vector<256x1xf32>
      %c0_7 = arith.constant 0 : index
      %c0_8 = arith.constant 0 : index
      %15 = vector.load %arg11[%c0_7, %c0_8] : memref<256x1xf32, #tpu.memory_space<vmem>>, vector<256x1xf32>
      tpu.vector_store %arg11[%c0_7, %c0_8], %14 {strides = array<i32>} : memref<256x1xf32, #tpu.memory_space<vmem>>, vector<256x1xf32>,
      %cst_9 = arith.constant 0.000000e+00 : f32
      %16 = vector.broadcast %cst_9 : f32 to vector<256x128xf32>
      %c0_10 = arith.constant 0 : index
      %c0_11 = arith.constant 0 : index
      %17 = vector.load %arg12[%c0_10, %c0_11] : memref<256x128xf32, #tpu.memory_space<vmem>>, vector<256x128xf32>
      tpu.vector_store %arg12[%c0_10, %c0_11], %16 {strides = array<i32>} : memref<256x128xf32, #tpu.memory_space<vmem>>, vector<256x128xf32>,
    } else {
    }
    %3 = arith.index_cast %arg0 : i32 to index
    %4 = arith.index_cast %arg1 : i32 to index
    %5 = memref.load %arg2[%3, %4] : memref<1x1xi32, #tpu.memory_space<smem>>
    %c0_i32_1 = arith.constant 0 : i32
    %6 = arith.cmpi ne, %5, %c0_i32_1 : i32
    %7 = arith.extui %6 : i1 to i32
    %c0_i32_2 = arith.constant 0 : i32
    %8 = arith.cmpi ne, %7, %c0_i32_2 : i32
    scf.if %8 {
      %c0 = arith.constant 0 : index
      %c0_5 = arith.constant 0 : index
      %12 = vector.load %arg5[%c0, %c0_5] : memref<256x1xf32, #tpu.memory_space<vmem>>, vector<256x1xf32>
      %c0_6 = arith.constant 0 : index
      %c0_7 = arith.constant 0 : index
      %13 = vector.load %arg4[%c0_6, %c0_7] : memref<1x256xf32, #tpu.memory_space<vmem>>, vector<1x256xf32>
      %14 = vector.broadcast %12 : vector<256x1xf32> to vector<256x256xf32>
      %15 = vector.broadcast %13 : vector<1x256xf32> to vector<256x256xf32>
      %16 = arith.addf %14, %15 : vector<256x256xf32>
      %cst = arith.constant 2.000000e-01 : f32
      %17 = vector.broadcast %cst : f32 to vector<256x256xf32>
      %18 = arith.mulf %17, %16 : vector<256x256xf32>
      %19 = arith.maximumf %16, %18 : vector<256x256xf32>
      %c0_8 = arith.constant 0 : index
      %c0_9 = arith.constant 0 : index
      %20 = vector.load %arg6[%c0_8, %c0_9] : memref<256x256xi8, #tpu.memory_space<vmem>>, vector<256x256xi8>
      %21 = arith.sitofp %20 : vector<256x256xi8> to vector<256x256xf32>
      %cst_10 = arith.constant 5.000000e-01 : f32
      %22 = vector.broadcast %cst_10 : f32 to vector<256x256xf32>
      %23 = arith.cmpf ogt, %21, %22 : vector<256x256xf32>
      %cst_11 = arith.constant -1.000000e+30 : f32
      %24 = vector.broadcast %cst_11 : f32 to vector<256x256xf32>
      %25 = arith.select %23, %19, %24 : vector<256x256xi1>, vector<256x256xf32>
      %c0_12 = arith.constant 0 : index
      %c0_13 = arith.constant 0 : index
      %26 = vector.load %arg10[%c0_12, %c0_13] : memref<256x1xf32, #tpu.memory_space<vmem>>, vector<256x1xf32>
      %cst_14 = arith.constant dense<0xFF800000> : vector<256xf32>
      %27 = vector.multi_reduction <maximumf>, %25, %cst_14 [1] : vector<256x256xf32> to vector<256xf32>
      %28 = vector.shape_cast %27 : vector<256xf32> to vector<256x1xf32>
      %29 = arith.maximumf %26, %28 : vector<256x1xf32>
      %c0_15 = arith.constant 0 : index
      %c0_16 = arith.constant 0 : index
      %30 = vector.load %arg10[%c0_15, %c0_16] : memref<256x1xf32, #tpu.memory_space<vmem>>, vector<256x1xf32>
      %31 = arith.subf %30, %29 : vector<256x1xf32>
      %32 = math.exp %31 : vector<256x1xf32>
      %33 = vector.broadcast %29 : vector<256x1xf32> to vector<256x256xf32>
      %34 = arith.subf %25, %33 : vector<256x256xf32>
      %35 = arith.truncf %34 : vector<256x256xf32> to vector<256x256xbf16>
      %36 = math.exp %35 : vector<256x256xbf16>
      %c0_17 = arith.constant 0 : index
      %c0_18 = arith.constant 0 : index
      %37 = vector.load %arg11[%c0_17, %c0_18] : memref<256x1xf32, #tpu.memory_space<vmem>>, vector<256x1xf32>
      %38 = arith.mulf %32, %37 : vector<256x1xf32>
      %39 = arith.extf %36 : vector<256x256xbf16> to vector<256x256xf32>
      %cst_19 = arith.constant dense<0.000000e+00> : vector<256xf32>
      %40 = vector.multi_reduction <add>, %39, %cst_19 [1] : vector<256x256xf32> to vector<256xf32>
      %41 = vector.shape_cast %40 : vector<256xf32> to vector<256x1xf32>
      %42 = arith.addf %38, %41 : vector<256x1xf32>
      %c0_20 = arith.constant 0 : index
      %c0_21 = arith.constant 0 : index
      %43 = vector.load %arg11[%c0_20, %c0_21] : memref<256x1xf32, #tpu.memory_space<vmem>>, vector<256x1xf32>
      tpu.vector_store %arg11[%c0_20, %c0_21], %42 {strides = array<i32>} : memref<256x1xf32, #tpu.memory_space<vmem>>, vector<256x1xf32>,
      %c0_22 = arith.constant 0 : index
      %c0_23 = arith.constant 0 : index
      %44 = vector.load %arg12[%c0_22, %c0_23] : memref<256x128xf32, #tpu.memory_space<vmem>>, vector<256x128xf32>
      %45 = vector.broadcast %32 : vector<256x1xf32> to vector<256x128xf32>
      %46 = arith.mulf %45, %44 : vector<256x128xf32>
      %c0_24 = arith.constant 0 : index
      %c0_25 = arith.constant 0 : index
      %47 = vector.load %arg3[%c0_24, %c0_25] : memref<256x128xbf16, #tpu.memory_space<vmem>>, vector<256x128xbf16>
      %cst_26 = arith.constant dense<0.000000e+00> : vector<256x128xf32>
      %48 = tpu.matmul %36, %47, %cst_26 {dimension_numbers = #tpu.dot_dimension_numbers<[1], [0], [0], [1], [0, 0, 1, 1], [], []>} : vector<256x256xbf16>, vector<256x128xbf16>, vector<256x128xf32> -> vector<256x128xf32>
      %49 = arith.addf %46, %48 : vector<256x128xf32>
      %c0_27 = arith.constant 0 : index
      %c0_28 = arith.constant 0 : index
      %50 = vector.load %arg12[%c0_27, %c0_28] : memref<256x128xf32, #tpu.memory_space<vmem>>, vector<256x128xf32>
      tpu.vector_store %arg12[%c0_27, %c0_28], %49 {strides = array<i32>} : memref<256x128xf32, #tpu.memory_space<vmem>>, vector<256x128xf32>,
      %c0_29 = arith.constant 0 : index
      %c0_30 = arith.constant 0 : index
      %51 = vector.load %arg10[%c0_29, %c0_30] : memref<256x1xf32, #tpu.memory_space<vmem>>, vector<256x1xf32>
      tpu.vector_store %arg10[%c0_29, %c0_30], %29 {strides = array<i32>} : memref<256x1xf32, #tpu.memory_space<vmem>>, vector<256x1xf32>,
    } else {
    }
    %c0_i32_3 = arith.constant 0 : i32
    %9 = arith.cmpi eq, %arg1, %c0_i32_3 : i32
    %10 = arith.extui %9 : i1 to i32
    %c0_i32_4 = arith.constant 0 : i32
    %11 = arith.cmpi ne, %10, %c0_i32_4 : i32
    scf.if %11 {
      %c0 = arith.constant 0 : index
      %c0_5 = arith.constant 0 : index
      %12 = vector.load %arg12[%c0, %c0_5] : memref<256x128xf32, #tpu.memory_space<vmem>>, vector<256x128xf32>
      %c0_6 = arith.constant 0 : index
      %c0_7 = arith.constant 0 : index
      %13 = vector.load %arg11[%c0_6, %c0_7] : memref<256x1xf32, #tpu.memory_space<vmem>>, vector<256x1xf32>
      %14 = tpu.reciprocal %13 {approx = true} : vector<256x1xf32> -> vector<256x1xf32>
      %15 = vector.broadcast %14 : vector<256x1xf32> to vector<256x128xf32>
      %16 = arith.mulf %12, %15 : vector<256x128xf32>
      %c0_8 = arith.constant 0 : index
      %c0_9 = arith.constant 0 : index
      %17 = vector.load %arg8[%c0_8, %c0_9] : memref<1x128xf32, #tpu.memory_space<vmem>>, vector<1x128xf32>
      %18 = vector.broadcast %17 : vector<1x128xf32> to vector<256x128xf32>
      %19 = arith.addf %16, %18 : vector<256x128xf32>
      %cst = arith.constant 0.000000e+00 : f32
      %20 = vector.broadcast %cst : f32 to vector<256x128xf32>
      %21 = arith.cmpf ogt, %19, %20 : vector<256x128xf32>
      %cst_10 = arith.constant 0.000000e+00 : f32
      %22 = vector.broadcast %cst_10 : f32 to vector<256x128xf32>
      %23 = arith.minimumf %19, %22 : vector<256x128xf32>
      %24 = math.exp %23 : vector<256x128xf32>
      %cst_11 = arith.constant 1.000000e+00 : f32
      %25 = vector.broadcast %cst_11 : f32 to vector<256x128xf32>
      %26 = arith.subf %24, %25 : vector<256x128xf32>
      %27 = arith.select %21, %19, %26 : vector<256x128xi1>, vector<256x128xf32>
      %c0_12 = arith.constant 0 : index
      %c0_13 = arith.constant 0 : index
      %28 = vector.load %arg7[%c0_12, %c0_13] : memref<256x128xf32, #tpu.memory_space<vmem>>, vector<256x128xf32>
      %29 = arith.addf %27, %28 : vector<256x128xf32>
      %c0_14 = arith.constant 0 : index
      %c0_15 = arith.constant 0 : index
      %30 = vector.load %arg9[%c0_14, %c0_15] : memref<256x128xf32, #tpu.memory_space<vmem>>, vector<256x128xf32>
      tpu.vector_store %arg9[%c0_14, %c0_15], %29 {strides = array<i32>} : memref<256x128xf32, #tpu.memory_space<vmem>>, vector<256x128xf32>,
    } else {
    }
    return
  }
  func.func @transform_0(%arg0: i32, %arg1: i32, %arg2: memref<1x1xi32, #tpu.memory_space<smem>>) -> (i32, i32) {
    %c0_i32 = arith.constant 0 : i32
    %c0_i32_0 = arith.constant 0 : i32
    return %arg1, %c0_i32 : i32, i32
  }
  func.func @transform_1(%arg0: i32, %arg1: i32, %arg2: memref<1x1xi32, #tpu.memory_space<smem>>) -> (i32, i32) {
    %c0_i32 = arith.constant 0 : i32
    %c0_i32_0 = arith.constant 0 : i32
    return %c0_i32, %arg1 : i32, i32
  }
  func.func @transform_2(%arg0: i32, %arg1: i32, %arg2: memref<1x1xi32, #tpu.memory_space<smem>>) -> (i32, i32) {
    %c0_i32 = arith.constant 0 : i32
    %c0_i32_0 = arith.constant 0 : i32
    return %arg0, %c0_i32 : i32, i32
  }
  func.func @transform_3(%arg0: i32, %arg1: i32, %arg2: memref<1x1xi32, #tpu.memory_space<smem>>) -> (i32, i32) {
    %c0_i32 = arith.constant 0 : i32
    return %arg0, %arg1 : i32, i32
  }
  func.func @transform_4(%arg0: i32, %arg1: i32, %arg2: memref<1x1xi32, #tpu.memory_space<smem>>) -> (i32, i32) {
    %c0_i32 = arith.constant 0 : i32
    %c0_i32_0 = arith.constant 0 : i32
    return %arg0, %c0_i32 : i32, i32
  }
  func.func @transform_5(%arg0: i32, %arg1: i32, %arg2: memref<1x1xi32, #tpu.memory_space<smem>>) -> (i32, i32) {
    %c0_i32 = arith.constant 0 : i32
    %c0_i32_0 = arith.constant 0 : i32
    %c0_i32_1 = arith.constant 0 : i32
    return %c0_i32, %c0_i32_0 : i32, i32
  }
  func.func @transform_6(%arg0: i32, %arg1: i32, %arg2: memref<1x1xi32, #tpu.memory_space<smem>>) -> (i32, i32) {
    %c0_i32 = arith.constant 0 : i32
    %c0_i32_0 = arith.constant 0 : i32
    return %arg0, %c0_i32 : i32, i32
  }
}

</mosaic_0001>

<llo_original>
// kernel: tpu_custom_call.1
$region0: #{tpu_custom_call.1}
  #allocation0 [shape = 'u32[]', space=smem, size = 0x4, offset = 0x4, fixed_abs, tag = 'smem constant byte address 0x4 - core index']
  #allocation1 [shape = 'u32[72,128]{1,0:T(1,128)}', space=vmem, size = 0x9000, scoped, tag = 'internal scratch']
  #allocation2 [shape = 'f32[256,1]{1,0:T(8,128)}', space=vmem, size = 0x20000, scoped, tag = 'scratch operand']
  #allocation3 [shape = 'f32[256,1]{1,0:T(8,128)}', space=vmem, size = 0x20000, scoped, tag = 'scratch operand']
  #allocation4 [shape = 'f32[256,128]{1,0:T(8,128)}', space=vmem, size = 0x20000, scoped, tag = 'scratch operand']
  #allocation5 [shape = 's32[1]{0}', space=sflag, size = 0x4, scoped, tag = 'scoped memory for tpu_custom_call.1']
  #allocation6 [shape = 's32[1,1]{1,0:T(1,128)S(6)}', space=smem, size = 0x200, scoped, tag = 'prefetched SMEM operand 0']
  %s0 = inlined_call_operand.<no memory space> [shape: s32[1,1], index: 0, kind: input, shape index: {}]
  %s1 = inlined_call_operand.hbm [shape: bf16[256,128], index: 1, kind: input, shape index: {}]
  %s2 = inlined_call_operand.vmem [shape: f32[1,256], index: 2, kind: input, shape index: {}]
  %s3 = inlined_call_operand.vmem [shape: f32[256,1], index: 3, kind: input, shape index: {}]
  %s4 = inlined_call_operand.hbm [shape: s8[256,256], index: 4, kind: input, shape index: {}]
  %s5 = inlined_call_operand.vmem [shape: f32[256,128], index: 5, kind: input, shape index: {}]
  %s6 = inlined_call_operand.vmem [shape: f32[1,128], index: 6, kind: input, shape index: {}]
  %s7 = inlined_call_operand.hbm [shape: f32[256,128], index: 7, kind: output, shape index: {}]
  %s8 = sld [smem:[#allocation0]]
  $region54: #{tpu_custom_call.1} parent=0
    _
  %s10 = ssub.s32 1, %s8
  %s11 = scalar_select 0, %s10, %s8
  %12 = sst [smem:[#allocation6]] %s0
  $region1: #{tpu_custom_call.1} parent=0
    #allocation7 [shape = 'u8[65536]{0}', space=vmem, size = 0x10000, scoped, tag = 'input window, operand 1, single buffered']
    #allocation8 [shape = 's32[1]{0}', space=sflag, size = 0x4, scoped, tag = 'scoped memory for tpu_custom_call.1']
    #allocation9 [shape = 's32[1]{0}', space=sflag, size = 0x4, scoped, tag = 'scoped memory for tpu_custom_call.1']
    #allocation10 [shape = 'u8[65536]{0}', space=vmem, size = 0x10000, scoped, tag = 'input window, operand 4, single buffered']
    #allocation11 [shape = 's32[1]{0}', space=sflag, size = 0x4, scoped, tag = 'scoped memory for tpu_custom_call.1']
    #allocation12 [shape = 'u8[131072]{0}', space=vmem, size = 0x20000, scoped, tag = 'output window, operand 0, single buffered']
    %13 = vsyncpa [#allocation8], 0
    %14 = vsyncpa [#allocation11], 0
    %15 = vsyncpa [#allocation9], 0
    // Predicated region
    $region2: #{tpu_custom_call.1} parent=1 // pred_check
      _
    $region3: #{tpu_custom_call.1} parent=1 // pred_check_branch
      %17 = sbr.rel (0) target = $region5
    $region4: #{tpu_custom_call.1} parent=1 // pred_region
      %19 = vsyncadd [#allocation8], 0
      %s20 = sshll.u32 %s1, 4
      %s21 = int_to_ptr.hbm [resolvable:$true] %s20
      %s22 = sshll.u32 [#allocation7], 4
      %s23 = int_to_ptr.vmem [resolvable:$true] %s22
      %28 = dma.hbm_to_vmem [thread:$0]  %s21, 2048, %s23, [#allocation8], 64, 64, 4
    $region5: #{tpu_custom_call.1} parent=1 // pred_fallthru
      _
    // Predicated region
    $region6: #{tpu_custom_call.1} parent=1 // pred_check
      _
    $region7: #{tpu_custom_call.1} parent=1 // pred_check_branch
      %30 = sbr.rel (0) target = $region9
    $region8: #{tpu_custom_call.1} parent=1 // pred_region
      _
    $region9: #{tpu_custom_call.1} parent=1 // pred_fallthru
      _
    // Predicated region
    $region10: #{tpu_custom_call.1} parent=1 // pred_check
      _
    $region11: #{tpu_custom_call.1} parent=1 // pred_check_branch
      %32 = sbr.rel (0) target = $region13
    $region12: #{tpu_custom_call.1} parent=1 // pred_region
      _
    $region13: #{tpu_custom_call.1} parent=1 // pred_fallthru
      _
    // Predicated region
    $region14: #{tpu_custom_call.1} parent=1 // pred_check
      _
    $region15: #{tpu_custom_call.1} parent=1 // pred_check_branch
      %34 = sbr.rel (0) target = $region17
    $region16: #{tpu_custom_call.1} parent=1 // pred_region
      %36 = vsyncadd [#allocation11], 0
      %s37 = sshll.u32 %s4, 4
      %s38 = int_to_ptr.hbm [resolvable:$true] %s37
      %s39 = sshll.u32 [#allocation10], 4
      %s40 = int_to_ptr.vmem [resolvable:$true] %s39
      %45 = dma.hbm_to_vmem [thread:$0]  %s38, 2048, %s40, [#allocation11], 256, 256, 16
    $region17: #{tpu_custom_call.1} parent=1 // pred_fallthru
      _
    // Predicated region
    $region18: #{tpu_custom_call.1} parent=1 // pred_check
      _
    $region19: #{tpu_custom_call.1} parent=1 // pred_check_branch
      %47 = sbr.rel (0) target = $region21
    $region20: #{tpu_custom_call.1} parent=1 // pred_region
      _
    $region21: #{tpu_custom_call.1} parent=1 // pred_fallthru
      _
    // Predicated region
    $region22: #{tpu_custom_call.1} parent=1 // pred_check
      _
    $region23: #{tpu_custom_call.1} parent=1 // pred_check_branch
      %49 = sbr.rel (0) target = $region25
    $region24: #{tpu_custom_call.1} parent=1 // pred_region
      _
    $region25: #{tpu_custom_call.1} parent=1 // pred_fallthru
      _
    // Predicated region
    $region26: #{tpu_custom_call.1} parent=1 // pred_check
      _
    $region27: #{tpu_custom_call.1} parent=1 // pred_check_branch
      %51 = sbr.rel (0) target = $region29
    $region28: #{tpu_custom_call.1} parent=1 // pred_region
      %53 = dma.done [#allocation8], 2048
    $region29: #{tpu_custom_call.1} parent=1 // pred_fallthru
      _
    // Predicated region
    $region30: #{tpu_custom_call.1} parent=1 // pred_check
      _
    $region31: #{tpu_custom_call.1} parent=1 // pred_check_branch
      %55 = sbr.rel (0) target = $region33
    $region32: #{tpu_custom_call.1} parent=1 // pred_region
      %57 = dma.done [#allocation11], 2048
    $region33: #{tpu_custom_call.1} parent=1 // pred_fallthru
      _
    %p58 = scmp.eq.s32.totalorder 0, 0
    // Predicated region
    $region34: #{tpu_custom_call.1} parent=1 // pred_check
      %p59 = pneg %p58
    $region35: #{tpu_custom_call.1} parent=1 // pred_check_branch
      %61 = sbr.rel (%p59) target = $region37
    $region36: #{tpu_custom_call.1} parent=1 // pred_region
      %vm62 = vcmask 7168
      %63 = vst.msk [vmem:[#allocation2] sm:$0xff] %vm62, -inf
      %64 = vst.msk [vmem:[#allocation2 + $0x8] sm:$0xff] %vm62, -inf
      %65 = vst.msk [vmem:[#allocation2 + $0x10] sm:$0xff] %vm62, -inf
      %66 = vst.msk [vmem:[#allocation2 + $0x18] sm:$0xff] %vm62, -inf
      %67 = vst.msk [vmem:[#allocation2 + $0x20] sm:$0xff] %vm62, -inf
      %68 = vst.msk [vmem:[#allocation2 + $0x28] sm:$0xff] %vm62, -inf
      %69 = vst.msk [vmem:[#allocation2 + $0x30] sm:$0xff] %vm62, -inf
      %70 = vst.msk [vmem:[#allocation2 + $0x38] sm:$0xff] %vm62, -inf
      %71 = vst.msk [vmem:[#allocation2 + $0x40] sm:$0xff] %vm62, -inf
      %72 = vst.msk [vmem:[#allocation2 + $0x48] sm:$0xff] %vm62, -inf
      %73 = vst.msk [vmem:[#allocation2 + $0x50] sm:$0xff] %vm62, -inf
      %74 = vst.msk [vmem:[#allocation2 + $0x58] sm:$0xff] %vm62, -inf
      %75 = vst.msk [vmem:[#allocation2 + $0x60] sm:$0xff] %vm62, -inf
      %76 = vst.msk [vmem:[#allocation2 + $0x68] sm:$0xff] %vm62, -inf
      %77 = vst.msk [vmem:[#allocation2 + $0x70] sm:$0xff] %vm62, -inf
      %78 = vst.msk [vmem:[#allocation2 + $0x78] sm:$0xff] %vm62, -inf
      %79 = vst.msk [vmem:[#allocation2 + $0x80] sm:$0xff] %vm62, -inf
      %80 = vst.msk [vmem:[#allocation2 + $0x88] sm:$0xff] %vm62, -inf
      %81 = vst.msk [vmem:[#allocation2 + $0x90] sm:$0xff] %vm62, -inf
      %82 = vst.msk [vmem:[#allocation2 + $0x98] sm:$0xff] %vm62, -inf
      %83 = vst.msk [vmem:[#allocation2 + $0xa0] sm:$0xff] %vm62, -inf
      %84 = vst.msk [vmem:[#allocation2 + $0xa8] sm:$0xff] %vm62, -inf
      %85 = vst.msk [vmem:[#allocation2 + $0xb0] sm:$0xff] %vm62, -inf
      %86 = vst.msk [vmem:[#allocation2 + $0xb8] sm:$0xff] %vm62, -inf
      %87 = vst.msk [vmem:[#allocation2 + $0xc0] sm:$0xff] %vm62, -inf
      %88 = vst.msk [vmem:[#allocation2 + $0xc8] sm:$0xff] %vm62, -inf
      %89 = vst.msk [vmem:[#allocation2 + $0xd0] sm:$0xff] %vm62, -inf
      %90 = vst.msk [vmem:[#allocation2 + $0xd8] sm:$0xff] %vm62, -inf
      %91 = vst.msk [vmem:[#allocation2 + $0xe0] sm:$0xff] %vm62, -inf
      %92 = vst.msk [vmem:[#allocation2 + $0xe8] sm:$0xff] %vm62, -inf
      %93 = vst.msk [vmem:[#allocation2 + $0xf0] sm:$0xff] %vm62, -inf
      %94 = vst.msk [vmem:[#allocation2 + $0xf8] sm:$0xff] %vm62, -inf
      %95 = vst.msk [vmem:[#allocation3] sm:$0xff] %vm62, 0.0
      %96 = vst.msk [vmem:[#allocation3 + $0x8] sm:$0xff] %vm62, 0.0
      %97 = vst.msk [vmem:[#allocation3 + $0x10] sm:$0xff] %vm62, 0.0
      %98 = vst.msk [vmem:[#allocation3 + $0x18] sm:$0xff] %vm62, 0.0
      %99 = vst.msk [vmem:[#allocation3 + $0x20] sm:$0xff] %vm62, 0.0
      %100 = vst.msk [vmem:[#allocation3 + $0x28] sm:$0xff] %vm62, 0.0
      %101 = vst.msk [vmem:[#allocation3 + $0x30] sm:$0xff] %vm62, 0.0
      %102 = vst.msk [vmem:[#allocation3 + $0x38] sm:$0xff] %vm62, 0.0
      %103 = vst.msk [vmem:[#allocation3 + $0x40] sm:$0xff] %vm62, 0.0
      %104 = vst.msk [vmem:[#allocation3 + $0x48] sm:$0xff] %vm62, 0.0
      %105 = vst.msk [vmem:[#allocation3 + $0x50] sm:$0xff] %vm62, 0.0
      %106 = vst.msk [vmem:[#allocation3 + $0x58] sm:$0xff] %vm62, 0.0
      %107 = vst.msk [vmem:[#allocation3 + $0x60] sm:$0xff] %vm62, 0.0
      %108 = vst.msk [vmem:[#allocation3 + $0x68] sm:$0xff] %vm62, 0.0
      %109 = vst.msk [vmem:[#allocation3 + $0x70] sm:$0xff] %vm62, 0.0
      %110 = vst.msk [vmem:[#allocation3 + $0x78] sm:$0xff] %vm62, 0.0
      %111 = vst.msk [vmem:[#allocation3 + $0x80] sm:$0xff] %vm62, 0.0
      %112 = vst.msk [vmem:[#allocation3 + $0x88] sm:$0xff] %vm62, 0.0
      %113 = vst.msk [vmem:[#allocation3 + $0x90] sm:$0xff] %vm62, 0.0
      %114 = vst.msk [vmem:[#allocation3 + $0x98] sm:$0xff] %vm62, 0.0
      %115 = vst.msk [vmem:[#allocation3 + $0xa0] sm:$0xff] %vm62, 0.0
      %116 = vst.msk [vmem:[#allocation3 + $0xa8] sm:$0xff] %vm62, 0.0
      %117 = vst.msk [vmem:[#allocation3 + $0xb0] sm:$0xff] %vm62, 0.0
      %118 = vst.msk [vmem:[#allocation3 + $0xb8] sm:$0xff] %vm62, 0.0
      %119 = vst.msk [vmem:[#allocation3 + $0xc0] sm:$0xff] %vm62, 0.0
      %120 = vst.msk [vmem:[#allocation3 + $0xc8] sm:$0xff] %vm62, 0.0
      %121 = vst.msk [vmem:[#allocation3 + $0xd0] sm:$0xff] %vm62, 0.0
      %122 = vst.msk [vmem:[#allocation3 + $0xd8] sm:$0xff] %vm62, 0.0
      %123 = vst.msk [vmem:[#allocation3 + $0xe0] sm:$0xff] %vm62, 0.0
      %124 = vst.msk [vmem:[#allocation3 + $0xe8] sm:$0xff] %vm62, 0.0
      %125 = vst.msk [vmem:[#allocation3 + $0xf0] sm:$0xff] %vm62, 0.0
      %126 = vst.msk [vmem:[#allocation3 + $0xf8] sm:$0xff] %vm62, 0.0
      %127 = vst [vmem:[#allocation4] sm:$0xff] 0.0
      %128 = vst [vmem:[#allocation4 + $0x8] sm:$0xff] 0.0
      %129 = vst [vmem:[#allocation4 + $0x10] sm:$0xff] 0.0
      %130 = vst [vmem:[#allocation4 + $0x18] sm:$0xff] 0.0
      %131 = vst [vmem:[#allocation4 + $0x20] sm:$0xff] 0.0
      %132 = vst [vmem:[#allocation4 + $0x28] sm:$0xff] 0.0
      %133 = vst [vmem:[#allocation4 + $0x30] sm:$0xff] 0.0
      %134 = vst [vmem:[#allocation4 + $0x38] sm:$0xff] 0.0
      %135 = vst [vmem:[#allocation4 + $0x40] sm:$0xff] 0.0
      %136 = vst [vmem:[#allocation4 + $0x48] sm:$0xff] 0.0
      %137 = vst [vmem:[#allocation4 + $0x50] sm:$0xff] 0.0
      %138 = vst [vmem:[#allocation4 + $0x58] sm:$0xff] 0.0
      %139 = vst [vmem:[#allocation4 + $0x60] sm:$0xff] 0.0
      %140 = vst [vmem:[#allocation4 + $0x68] sm:$0xff] 0.0
      %141 = vst [vmem:[#allocation4 + $0x70] sm:$0xff] 0.0
      %142 = vst [vmem:[#allocation4 + $0x78] sm:$0xff] 0.0
      %143 = vst [vmem:[#allocation4 + $0x80] sm:$0xff] 0.0
      %144 = vst [vmem:[#allocation4 + $0x88] sm:$0xff] 0.0
      %145 = vst [vmem:[#allocation4 + $0x90] sm:$0xff] 0.0
      %146 = vst [vmem:[#allocation4 + $0x98] sm:$0xff] 0.0
      %147 = vst [vmem:[#allocation4 + $0xa0] sm:$0xff] 0.0
      %148 = vst [vmem:[#allocation4 + $0xa8] sm:$0xff] 0.0
      %149 = vst [vmem:[#allocation4 + $0xb0] sm:$0xff] 0.0
      %150 = vst [vmem:[#allocation4 + $0xb8] sm:$0xff] 0.0
      %151 = vst [vmem:[#allocation4 + $0xc0] sm:$0xff] 0.0
      %152 = vst [vmem:[#allocation4 + $0xc8] sm:$0xff] 0.0
      %153 = vst [vmem:[#allocation4 + $0xd0] sm:$0xff] 0.0
      %154 = vst [vmem:[#allocation4 + $0xd8] sm:$0xff] 0.0
      %155 = vst [vmem:[#allocation4 + $0xe0] sm:$0xff] 0.0
      %156 = vst [vmem:[#allocation4 + $0xe8] sm:$0xff] 0.0
      %157 = vst [vmem:[#allocation4 + $0xf0] sm:$0xff] 0.0
      %158 = vst [vmem:[#allocation4 + $0xf8] sm:$0xff] 0.0
    $region37: #{tpu_custom_call.1} parent=1 // pred_fallthru
      _
    %s159 = sadd.s32 0, 0
    %s160 = smul.u32 %s159, 128
    %s161 = sadd.s32 %s160, 0
    %s162 = sld [smem:[#allocation6 + %s161]]
    %p163 = scmp.ne.s32.totalorder %s162, 0
    // Predicated region
    $region38: #{tpu_custom_call.1} parent=1 // pred_check
      %p164 = pneg %p163
    $region39: #{tpu_custom_call.1} parent=1 // pred_check_branch
      %166 = sbr.rel (%p164) target = $region41
    $region40: #{tpu_custom_call.1} parent=1 // pred_region
      %v167 = vld [vmem:[%s3] sm:$0xff]
      %v168 = vld [vmem:[%s3 + $0x8] sm:$0xff]
      %v169 = vld [vmem:[%s3 + $0x10] sm:$0xff]
      %v170 = vld [vmem:[%s3 + $0x18] sm:$0xff]
      %v171 = vld [vmem:[%s3 + $0x20] sm:$0xff]
      %v172 = vld [vmem:[%s3 + $0x28] sm:$0xff]
      %v173 = vld [vmem:[%s3 + $0x30] sm:$0xff]
      %v174 = vld [vmem:[%s3 + $0x38] sm:$0xff]
      %v175 = vld [vmem:[%s3 + $0x40] sm:$0xff]
      %v176 = vld [vmem:[%s3 + $0x48] sm:$0xff]
      %v177 = vld [vmem:[%s3 + $0x50] sm:$0xff]
      %v178 = vld [vmem:[%s3 + $0x58] sm:$0xff]
      %v179 = vld [vmem:[%s3 + $0x60] sm:$0xff]
      %v180 = vld [vmem:[%s3 + $0x68] sm:$0xff]
      %v181 = vld [vmem:[%s3 + $0x70] sm:$0xff]
      %v182 = vld [vmem:[%s3 + $0x78] sm:$0xff]
      %v183 = vld [vmem:[%s3 + $0x80] sm:$0xff]
      %v184 = vld [vmem:[%s3 + $0x88] sm:$0xff]
      %v185 = vld [vmem:[%s3 + $0x90] sm:$0xff]
      %v186 = vld [vmem:[%s3 + $0x98] sm:$0xff]
      %v187 = vld [vmem:[%s3 + $0xa0] sm:$0xff]
      %v188 = vld [vmem:[%s3 + $0xa8] sm:$0xff]
      %v189 = vld [vmem:[%s3 + $0xb0] sm:$0xff]
      %v190 = vld [vmem:[%s3 + $0xb8] sm:$0xff]
      %v191 = vld [vmem:[%s3 + $0xc0] sm:$0xff]
      %v192 = vld [vmem:[%s3 + $0xc8] sm:$0xff]
      %v193 = vld [vmem:[%s3 + $0xd0] sm:$0xff]
      %v194 = vld [vmem:[%s3 + $0xd8] sm:$0xff]
      %v195 = vld [vmem:[%s3 + $0xe0] sm:$0xff]
      %v196 = vld [vmem:[%s3 + $0xe8] sm:$0xff]
      %v197 = vld [vmem:[%s3 + $0xf0] sm:$0xff]
      %v198 = vld [vmem:[%s3 + $0xf8] sm:$0xff]
      %v199 = vld [vmem:[%s2] sm:$0x3]
      %201 = vset.pattern.permute.xlu0 0
      %202 = vperm.xlu0 %201, %v167
      %v203 = vpop.permute.xlu0 %202
      %206 = vset.pattern.permute.xlu0 0
      %207 = vperm.xlu0 %206, %v168
      %v208 = vpop.permute.xlu0 %207
      %211 = vset.pattern.permute.xlu0 0
      %212 = vperm.xlu0 %211, %v169
      %v213 = vpop.permute.xlu0 %212
      %216 = vset.pattern.permute.xlu0 0
      %217 = vperm.xlu0 %216, %v170
      %v218 = vpop.permute.xlu0 %217
      %221 = vset.pattern.permute.xlu0 0
      %222 = vperm.xlu0 %221, %v171
      %v223 = vpop.permute.xlu0 %222
      %226 = vset.pattern.permute.xlu0 0
      %227 = vperm.xlu0 %226, %v172
      %v228 = vpop.permute.xlu0 %227
      %231 = vset.pattern.permute.xlu0 0
      %232 = vperm.xlu0 %231, %v173
      %v233 = vpop.permute.xlu0 %232
      %236 = vset.pattern.permute.xlu0 0
      %237 = vperm.xlu0 %236, %v174
      %v238 = vpop.permute.xlu0 %237
      %241 = vset.pattern.permute.xlu0 0
      %242 = vperm.xlu0 %241, %v175
      %v243 = vpop.permute.xlu0 %242
      %246 = vset.pattern.permute.xlu0 0
      %247 = vperm.xlu0 %246, %v176
      %v248 = vpop.permute.xlu0 %247
      %251 = vset.pattern.permute.xlu0 0
      %252 = vperm.xlu0 %251, %v177
      %v253 = vpop.permute.xlu0 %252
      %256 = vset.pattern.permute.xlu0 0
      %257 = vperm.xlu0 %256, %v178
      %v258 = vpop.permute.xlu0 %257
      %261 = vset.pattern.permute.xlu0 0
      %262 = vperm.xlu0 %261, %v179
      %v263 = vpop.permute.xlu0 %262
      %266 = vset.pattern.permute.xlu0 0
      %267 = vperm.xlu0 %266, %v180
      %v268 = vpop.permute.xlu0 %267
      %271 = vset.pattern.permute.xlu0 0
      %272 = vperm.xlu0 %271, %v181
      %v273 = vpop.permute.xlu0 %272
      %276 = vset.pattern.permute.xlu0 0
      %277 = vperm.xlu0 %276, %v182
      %v278 = vpop.permute.xlu0 %277
      %281 = vset.pattern.permute.xlu0 0
      %282 = vperm.xlu0 %281, %v183
      %v283 = vpop.permute.xlu0 %282
      %286 = vset.pattern.permute.xlu0 0
      %287 = vperm.xlu0 %286, %v184
      %v288 = vpop.permute.xlu0 %287
      %291 = vset.pattern.permute.xlu0 0
      %292 = vperm.xlu0 %291, %v185
      %v293 = vpop.permute.xlu0 %292
      %296 = vset.pattern.permute.xlu0 0
      %297 = vperm.xlu0 %296, %v186
      %v298 = vpop.permute.xlu0 %297
      %301 = vset.pattern.permute.xlu0 0
      %302 = vperm.xlu0 %301, %v187
      %v303 = vpop.permute.xlu0 %302
      %306 = vset.pattern.permute.xlu0 0
      %307 = vperm.xlu0 %306, %v188
      %v308 = vpop.permute.xlu0 %307
      %311 = vset.pattern.permute.xlu0 0
      %312 = vperm.xlu0 %311, %v189
      %v313 = vpop.permute.xlu0 %312
      %316 = vset.pattern.permute.xlu0 0
      %317 = vperm.xlu0 %316, %v190
      %v318 = vpop.permute.xlu0 %317
      %321 = vset.pattern.permute.xlu0 0
      %322 = vperm.xlu0 %321, %v191
      %v323 = vpop.permute.xlu0 %322
      %326 = vset.pattern.permute.xlu0 0
      %327 = vperm.xlu0 %326, %v192
      %v328 = vpop.permute.xlu0 %327
      %331 = vset.pattern.permute.xlu0 0
      %332 = vperm.xlu0 %331, %v193
      %v333 = vpop.permute.xlu0 %332
      %336 = vset.pattern.permute.xlu0 0
      %337 = vperm.xlu0 %336, %v194
      %v338 = vpop.permute.xlu0 %337
      %341 = vset.pattern.permute.xlu0 0
      %342 = vperm.xlu0 %341, %v195
      %v343 = vpop.permute.xlu0 %342
      %346 = vset.pattern.permute.xlu0 0
      %347 = vperm.xlu0 %346, %v196
      %v348 = vpop.permute.xlu0 %347
      %351 = vset.pattern.permute.xlu0 0
      %352 = vperm.xlu0 %351, %v197
      %v353 = vpop.permute.xlu0 %352
      %356 = vset.pattern.permute.xlu0 0
      %357 = vperm.xlu0 %356, %v198
      %v358 = vpop.permute.xlu0 %357
      %v361 = vperm.slane %v199, 0
      %v362 = vperm.slane %v199, 1
      %v365 = vadd.f32 %v203, %v361
      %v366 = vadd.f32 %v203, %v362
      %v367 = vadd.f32 %v208, %v361
      %v368 = vadd.f32 %v208, %v362
      %v369 = vadd.f32 %v213, %v361
      %v370 = vadd.f32 %v213, %v362
      %v371 = vadd.f32 %v218, %v361
      %v372 = vadd.f32 %v218, %v362
      %v373 = vadd.f32 %v223, %v361
      %v374 = vadd.f32 %v223, %v362
      %v375 = vadd.f32 %v228, %v361
      %v376 = vadd.f32 %v228, %v362
      %v377 = vadd.f32 %v233, %v361
      %v378 = vadd.f32 %v233, %v362
      %v379 = vadd.f32 %v238, %v361
      %v380 = vadd.f32 %v238, %v362
      %v381 = vadd.f32 %v243, %v361
      %v382 = vadd.f32 %v243, %v362
      %v383 = vadd.f32 %v248, %v361
      %v384 = vadd.f32 %v248, %v362
      %v385 = vadd.f32 %v253, %v361
      %v386 = vadd.f32 %v253, %v362
      %v387 = vadd.f32 %v258, %v361
      %v388 = vadd.f32 %v258, %v362
      %v389 = vadd.f32 %v263, %v361
      %v390 = vadd.f32 %v263, %v362
      %v391 = vadd.f32 %v268, %v361
      %v392 = vadd.f32 %v268, %v362
      %v393 = vadd.f32 %v273, %v361
      %v394 = vadd.f32 %v273, %v362
      %v395 = vadd.f32 %v278, %v361
      %v396 = vadd.f32 %v278, %v362
      %v397 = vadd.f32 %v283, %v361
      %v398 = vadd.f32 %v283, %v362
      %v399 = vadd.f32 %v288, %v361
      %v400 = vadd.f32 %v288, %v362
      %v401 = vadd.f32 %v293, %v361
      %v402 = vadd.f32 %v293, %v362
      %v403 = vadd.f32 %v298, %v361
      %v404 = vadd.f32 %v298, %v362
      %v405 = vadd.f32 %v303, %v361
      %v406 = vadd.f32 %v303, %v362
      %v407 = vadd.f32 %v308, %v361
      %v408 = vadd.f32 %v308, %v362
      %v409 = vadd.f32 %v313, %v361
      %v410 = vadd.f32 %v313, %v362
      %v411 = vadd.f32 %v318, %v361
      %v412 = vadd.f32 %v318, %v362
      %v413 = vadd.f32 %v323, %v361
      %v414 = vadd.f32 %v323, %v362
      %v415 = vadd.f32 %v328, %v361
      %v416 = vadd.f32 %v328, %v362
      %v417 = vadd.f32 %v333, %v361
      %v418 = vadd.f32 %v333, %v362
      %v419 = vadd.f32 %v338, %v361
      %v420 = vadd.f32 %v338, %v362
      %v421 = vadd.f32 %v343, %v361
      %v422 = vadd.f32 %v343, %v362
      %v423 = vadd.f32 %v348, %v361
      %v424 = vadd.f32 %v348, %v362
      %v425 = vadd.f32 %v353, %v361
      %v426 = vadd.f32 %v353, %v362
      %v427 = vadd.f32 %v358, %v361
      %v428 = vadd.f32 %v358, %v362
      %v429 = vmul.f32 %v365, 0.2
      %v430 = vmul.f32 %v366, 0.2
      %v431 = vmul.f32 %v367, 0.2
      %v432 = vmul.f32 %v368, 0.2
      %v433 = vmul.f32 %v369, 0.2
      %v434 = vmul.f32 %v370, 0.2
      %v435 = vmul.f32 %v371, 0.2
      %v436 = vmul.f32 %v372, 0.2
      %v437 = vmul.f32 %v373, 0.2
      %v438 = vmul.f32 %v374, 0.2
      %v439 = vmul.f32 %v375, 0.2
      %v440 = vmul.f32 %v376, 0.2
      %v441 = vmul.f32 %v377, 0.2
      %v442 = vmul.f32 %v378, 0.2
      %v443 = vmul.f32 %v379, 0.2
      %v444 = vmul.f32 %v380, 0.2
      %v445 = vmul.f32 %v381, 0.2
      %v446 = vmul.f32 %v382, 0.2
      %v447 = vmul.f32 %v383, 0.2
      %v448 = vmul.f32 %v384, 0.2
      %v449 = vmul.f32 %v385, 0.2
      %v450 = vmul.f32 %v386, 0.2
      %v451 = vmul.f32 %v387, 0.2
      %v452 = vmul.f32 %v388, 0.2
      %v453 = vmul.f32 %v389, 0.2
      %v454 = vmul.f32 %v390, 0.2
      %v455 = vmul.f32 %v391, 0.2
      %v456 = vmul.f32 %v392, 0.2
      %v457 = vmul.f32 %v393, 0.2
      %v458 = vmul.f32 %v394, 0.2
      %v459 = vmul.f32 %v395, 0.2
      %v460 = vmul.f32 %v396, 0.2
      %v461 = vmul.f32 %v397, 0.2
      %v462 = vmul.f32 %v398, 0.2
      %v463 = vmul.f32 %v399, 0.2
      %v464 = vmul.f32 %v400, 0.2
      %v465 = vmul.f32 %v401, 0.2
      %v466 = vmul.f32 %v402, 0.2
      %v467 = vmul.f32 %v403, 0.2
      %v468 = vmul.f32 %v404, 0.2
      %v469 = vmul.f32 %v405, 0.2
      %v470 = vmul.f32 %v406, 0.2
      %v471 = vmul.f32 %v407, 0.2
      %v472 = vmul.f32 %v408, 0.2
      %v473 = vmul.f32 %v409, 0.2
      %v474 = vmul.f32 %v410, 0.2
      %v475 = vmul.f32 %v411, 0.2
      %v476 = vmul.f32 %v412, 0.2
      %v477 = vmul.f32 %v413, 0.2
      %v478 = vmul.f32 %v414, 0.2
      %v479 = vmul.f32 %v415, 0.2
      %v480 = vmul.f32 %v416, 0.2
      %v481 = vmul.f32 %v417, 0.2
      %v482 = vmul.f32 %v418, 0.2
      %v483 = vmul.f32 %v419, 0.2
      %v484 = vmul.f32 %v420, 0.2
      %v485 = vmul.f32 %v421, 0.2
      %v486 = vmul.f32 %v422, 0.2
      %v487 = vmul.f32 %v423, 0.2
      %v488 = vmul.f32 %v424, 0.2
      %v489 = vmul.f32 %v425, 0.2
      %v490 = vmul.f32 %v426, 0.2
      %v491 = vmul.f32 %v427, 0.2
      %v492 = vmul.f32 %v428, 0.2
      %v493 = vmax.f32 %v365, %v429
      %v494 = vmax.f32 %v366, %v430
      %v495 = vmax.f32 %v367, %v431
      %v496 = vmax.f32 %v368, %v432
      %v497 = vmax.f32 %v369, %v433
      %v498 = vmax.f32 %v370, %v434
      %v499 = vmax.f32 %v371, %v435
      %v500 = vmax.f32 %v372, %v436
      %v501 = vmax.f32 %v373, %v437
      %v502 = vmax.f32 %v374, %v438
      %v503 = vmax.f32 %v375, %v439
      %v504 = vmax.f32 %v376, %v440
      %v505 = vmax.f32 %v377, %v441
      %v506 = vmax.f32 %v378, %v442
      %v507 = vmax.f32 %v379, %v443
      %v508 = vmax.f32 %v380, %v444
      %v509 = vmax.f32 %v381, %v445
      %v510 = vmax.f32 %v382, %v446
      %v511 = vmax.f32 %v383, %v447
      %v512 = vmax.f32 %v384, %v448
      %v513 = vmax.f32 %v385, %v449
      %v514 = vmax.f32 %v386, %v450
      %v515 = vmax.f32 %v387, %v451
      %v516 = vmax.f32 %v388, %v452
      %v517 = vmax.f32 %v389, %v453
      %v518 = vmax.f32 %v390, %v454
      %v519 = vmax.f32 %v391, %v455
      %v520 = vmax.f32 %v392, %v456
      %v521 = vmax.f32 %v393, %v457
      %v522 = vmax.f32 %v394, %v458
      %v523 = vmax.f32 %v395, %v459
      %v524 = vmax.f32 %v396, %v460
      %v525 = vmax.f32 %v397, %v461
      %v526 = vmax.f32 %v398, %v462
      %v527 = vmax.f32 %v399, %v463
      %v528 = vmax.f32 %v400, %v464
      %v529 = vmax.f32 %v401, %v465
      %v530 = vmax.f32 %v402, %v466
      %v531 = vmax.f32 %v403, %v467
      %v532 = vmax.f32 %v404, %v468
      %v533 = vmax.f32 %v405, %v469
      %v534 = vmax.f32 %v406, %v470
      %v535 = vmax.f32 %v407, %v471
      %v536 = vmax.f32 %v408, %v472
      %v537 = vmax.f32 %v409, %v473
      %v538 = vmax.f32 %v410, %v474
      %v539 = vmax.f32 %v411, %v475
      %v540 = vmax.f32 %v412, %v476
      %v541 = vmax.f32 %v413, %v477
      %v542 = vmax.f32 %v414, %v478
      %v543 = vmax.f32 %v415, %v479
      %v544 = vmax.f32 %v416, %v480
      %v545 = vmax.f32 %v417, %v481
      %v546 = vmax.f32 %v418, %v482
      %v547 = vmax.f32 %v419, %v483
      %v548 = vmax.f32 %v420, %v484
      %v549 = vmax.f32 %v421, %v485
      %v550 = vmax.f32 %v422, %v486
      %v551 = vmax.f32 %v423, %v487
      %v552 = vmax.f32 %v424, %v488
      %v553 = vmax.f32 %v425, %v489
      %v554 = vmax.f32 %v426, %v490
      %v555 = vmax.f32 %v427, %v491
      %v556 = vmax.f32 %v428, %v492
      %v557 = vld [vmem:[#allocation10] sm:$0xff]
      %v558 = vld [vmem:[#allocation10 + $0x8] sm:$0xff]
      %v559 = vld [vmem:[#allocation10 + $0x10] sm:$0xff]
      %v560 = vld [vmem:[#allocation10 + $0x18] sm:$0xff]
      %v561 = vld [vmem:[#allocation10 + $0x20] sm:$0xff]
      %v562 = vld [vmem:[#allocation10 + $0x28] sm:$0xff]
      %v563 = vld [vmem:[#allocation10 + $0x30] sm:$0xff]
      %v564 = vld [vmem:[#allocation10 + $0x38] sm:$0xff]
      %v565 = vld [vmem:[#allocation10 + $0x40] sm:$0xff]
      %v566 = vld [vmem:[#allocation10 + $0x48] sm:$0xff]
      %v567 = vld [vmem:[#allocation10 + $0x50] sm:$0xff]
      %v568 = vld [vmem:[#allocation10 + $0x58] sm:$0xff]
      %v569 = vld [vmem:[#allocation10 + $0x60] sm:$0xff]
      %v570 = vld [vmem:[#allocation10 + $0x68] sm:$0xff]
      %v571 = vld [vmem:[#allocation10 + $0x70] sm:$0xff]
      %v572 = vld [vmem:[#allocation10 + $0x78] sm:$0xff]
      %v573 = vunpack.c.0.s8 %v557
      %v574 = vunpack.c.0.s8 %v558
      %v575 = vunpack.c.1.s8 %v557
      %v576 = vunpack.c.1.s8 %v558
      %v577 = vunpack.c.2.s8 %v557
      %v578 = vunpack.c.2.s8 %v558
      %v579 = vunpack.c.3.s8 %v557
      %v580 = vunpack.c.3.s8 %v558
      %v581 = vunpack.c.0.s8 %v559
      %v582 = vunpack.c.0.s8 %v560
      %v583 = vunpack.c.1.s8 %v559
      %v584 = vunpack.c.1.s8 %v560
      %v585 = vunpack.c.2.s8 %v559
      %v586 = vunpack.c.2.s8 %v560
      %v587 = vunpack.c.3.s8 %v559
      %v588 = vunpack.c.3.s8 %v560
      %v589 = vunpack.c.0.s8 %v561
      %v590 = vunpack.c.0.s8 %v562
      %v591 = vunpack.c.1.s8 %v561
      %v592 = vunpack.c.1.s8 %v562
      %v593 = vunpack.c.2.s8 %v561
      %v594 = vunpack.c.2.s8 %v562
      %v595 = vunpack.c.3.s8 %v561
      %v596 = vunpack.c.3.s8 %v562
      %v597 = vunpack.c.0.s8 %v563
      %v598 = vunpack.c.0.s8 %v564
      %v599 = vunpack.c.1.s8 %v563
      %v600 = vunpack.c.1.s8 %v564
      %v601 = vunpack.c.2.s8 %v563
      %v602 = vunpack.c.2.s8 %v564
      %v603 = vunpack.c.3.s8 %v563
      %v604 = vunpack.c.3.s8 %v564
      %v605 = vunpack.c.0.s8 %v565
      %v606 = vunpack.c.0.s8 %v566
      %v607 = vunpack.c.1.s8 %v565
      %v608 = vunpack.c.1.s8 %v566
      %v609 = vunpack.c.2.s8 %v565
      %v610 = vunpack.c.2.s8 %v566
      %v611 = vunpack.c.3.s8 %v565
      %v612 = vunpack.c.3.s8 %v566
      %v613 = vunpack.c.0.s8 %v567
      %v614 = vunpack.c.0.s8 %v568
      %v615 = vunpack.c.1.s8 %v567
      %v616 = vunpack.c.1.s8 %v568
      %v617 = vunpack.c.2.s8 %v567
      %v618 = vunpack.c.2.s8 %v568
      %v619 = vunpack.c.3.s8 %v567
      %v620 = vunpack.c.3.s8 %v568
      %v621 = vunpack.c.0.s8 %v569
      %v622 = vunpack.c.0.s8 %v570
      %v623 = vunpack.c.1.s8 %v569
      %v624 = vunpack.c.1.s8 %v570
      %v625 = vunpack.c.2.s8 %v569
      %v626 = vunpack.c.2.s8 %v570
      %v627 = vunpack.c.3.s8 %v569
      %v628 = vunpack.c.3.s8 %v570
      %v629 = vunpack.c.0.s8 %v571
      %v630 = vunpack.c.0.s8 %v572
      %v631 = vunpack.c.1.s8 %v571
      %v632 = vunpack.c.1.s8 %v572
      %v633 = vunpack.c.2.s8 %v571
      %v634 = vunpack.c.2.s8 %v572
      %v635 = vunpack.c.3.s8 %v571
      %v636 = vunpack.c.3.s8 %v572
      %v637 = vcvt.s32.f32 %v573
      %v638 = vcvt.s32.f32 %v574
      %v639 = vcvt.s32.f32 %v575
      %v640 = vcvt.s32.f32 %v576
      %v641 = vcvt.s32.f32 %v577
      %v642 = vcvt.s32.f32 %v578
      %v643 = vcvt.s32.f32 %v579
      %v644 = vcvt.s32.f32 %v580
      %v645 = vcvt.s32.f32 %v581
      %v646 = vcvt.s32.f32 %v582
      %v647 = vcvt.s32.f32 %v583
      %v648 = vcvt.s32.f32 %v584
      %v649 = vcvt.s32.f32 %v585
      %v650 = vcvt.s32.f32 %v586
      %v651 = vcvt.s32.f32 %v587
      %v652 = vcvt.s32.f32 %v588
      %v653 = vcvt.s32.f32 %v589
      %v654 = vcvt.s32.f32 %v590
      %v655 = vcvt.s32.f32 %v591
      %v656 = vcvt.s32.f32 %v592
      %v657 = vcvt.s32.f32 %v593
      %v658 = vcvt.s32.f32 %v594
      %v659 = vcvt.s32.f32 %v595
      %v660 = vcvt.s32.f32 %v596
      %v661 = vcvt.s32.f32 %v597
      %v662 = vcvt.s32.f32 %v598
      %v663 = vcvt.s32.f32 %v599
      %v664 = vcvt.s32.f32 %v600
      %v665 = vcvt.s32.f32 %v601
      %v666 = vcvt.s32.f32 %v602
      %v667 = vcvt.s32.f32 %v603
      %v668 = vcvt.s32.f32 %v604
      %v669 = vcvt.s32.f32 %v605
      %v670 = vcvt.s32.f32 %v606
      %v671 = vcvt.s32.f32 %v607
      %v672 = vcvt.s32.f32 %v608
      %v673 = vcvt.s32.f32 %v609
      %v674 = vcvt.s32.f32 %v610
      %v675 = vcvt.s32.f32 %v611
      %v676 = vcvt.s32.f32 %v612
      %v677 = vcvt.s32.f32 %v613
      %v678 = vcvt.s32.f32 %v614
      %v679 = vcvt.s32.f32 %v615
      %v680 = vcvt.s32.f32 %v616
      %v681 = vcvt.s32.f32 %v617
      %v682 = vcvt.s32.f32 %v618
      %v683 = vcvt.s32.f32 %v619
      %v684 = vcvt.s32.f32 %v620
      %v685 = vcvt.s32.f32 %v621
      %v686 = vcvt.s32.f32 %v622
      %v687 = vcvt.s32.f32 %v623
      %v688 = vcvt.s32.f32 %v624
      %v689 = vcvt.s32.f32 %v625
      %v690 = vcvt.s32.f32 %v626
      %v691 = vcvt.s32.f32 %v627
      %v692 = vcvt.s32.f32 %v628
      %v693 = vcvt.s32.f32 %v629
      %v694 = vcvt.s32.f32 %v630
      %v695 = vcvt.s32.f32 %v631
      %v696 = vcvt.s32.f32 %v632
      %v697 = vcvt.s32.f32 %v633
      %v698 = vcvt.s32.f32 %v634
      %v699 = vcvt.s32.f32 %v635
      %v700 = vcvt.s32.f32 %v636
      %vm701 = vcmp.gt.f32.partialorder %v637, 0.5
      %vm702 = vcmp.gt.f32.partialorder %v638, 0.5
      %vm703 = vcmp.gt.f32.partialorder %v639, 0.5
      %vm704 = vcmp.gt.f32.partialorder %v640, 0.5
      %vm705 = vcmp.gt.f32.partialorder %v641, 0.5
      %vm706 = vcmp.gt.f32.partialorder %v642, 0.5
      %vm707 = vcmp.gt.f32.partialorder %v643, 0.5
      %vm708 = vcmp.gt.f32.partialorder %v644, 0.5
      %vm709 = vcmp.gt.f32.partialorder %v645, 0.5
      %vm710 = vcmp.gt.f32.partialorder %v646, 0.5
      %vm711 = vcmp.gt.f32.partialorder %v647, 0.5
      %vm712 = vcmp.gt.f32.partialorder %v648, 0.5
      %vm713 = vcmp.gt.f32.partialorder %v649, 0.5
      %vm714 = vcmp.gt.f32.partialorder %v650, 0.5
      %vm715 = vcmp.gt.f32.partialorder %v651, 0.5
      %vm716 = vcmp.gt.f32.partialorder %v652, 0.5
      %vm717 = vcmp.gt.f32.partialorder %v653, 0.5
      %vm718 = vcmp.gt.f32.partialorder %v654, 0.5
      %vm719 = vcmp.gt.f32.partialorder %v655, 0.5
      %vm720 = vcmp.gt.f32.partialorder %v656, 0.5
      %vm721 = vcmp.gt.f32.partialorder %v657, 0.5
      %vm722 = vcmp.gt.f32.partialorder %v658, 0.5
      %vm723 = vcmp.gt.f32.partialorder %v659, 0.5
      %vm724 = vcmp.gt.f32.partialorder %v660, 0.5
      %vm725 = vcmp.gt.f32.partialorder %v661, 0.5
      %vm726 = vcmp.gt.f32.partialorder %v662, 0.5
      %vm727 = vcmp.gt.f32.partialorder %v663, 0.5
      %vm728 = vcmp.gt.f32.partialorder %v664, 0.5
      %vm729 = vcmp.gt.f32.partialorder %v665, 0.5
      %vm730 = vcmp.gt.f32.partialorder %v666, 0.5
      %vm731 = vcmp.gt.f32.partialorder %v667, 0.5
      %vm732 = vcmp.gt.f32.partialorder %v668, 0.5
      %vm733 = vcmp.gt.f32.partialorder %v669, 0.5
      %vm734 = vcmp.gt.f32.partialorder %v670, 0.5
      %vm735 = vcmp.gt.f32.partialorder %v671, 0.5
      %vm736 = vcmp.gt.f32.partialorder %v672, 0.5
      %vm737 = vcmp.gt.f32.partialorder %v673, 0.5
      %vm738 = vcmp.gt.f32.partialorder %v674, 0.5
      %vm739 = vcmp.gt.f32.partialorder %v675, 0.5
      %vm740 = vcmp.gt.f32.partialorder %v676, 0.5
      %vm741 = vcmp.gt.f32.partialorder %v677, 0.5
      %vm742 = vcmp.gt.f32.partialorder %v678, 0.5
      %vm743 = vcmp.gt.f32.partialorder %v679, 0.5
      %vm744 = vcmp.gt.f32.partialorder %v680, 0.5
      %vm745 = vcmp.gt.f32.partialorder %v681, 0.5
      %vm746 = vcmp.gt.f32.partialorder %v682, 0.5
      %vm747 = vcmp.gt.f32.partialorder %v683, 0.5
      %vm748 = vcmp.gt.f32.partialorder %v684, 0.5
      %vm749 = vcmp.gt.f32.partialorder %v685, 0.5
      %vm750 = vcmp.gt.f32.partialorder %v686, 0.5
      %vm751 = vcmp.gt.f32.partialorder %v687, 0.5
      %vm752 = vcmp.gt.f32.partialorder %v688, 0.5
      %vm753 = vcmp.gt.f32.partialorder %v689, 0.5
      %vm754 = vcmp.gt.f32.partialorder %v690, 0.5
      %vm755 = vcmp.gt.f32.partialorder %v691, 0.5
      %vm756 = vcmp.gt.f32.partialorder %v692, 0.5
      %vm757 = vcmp.gt.f32.partialorder %v693, 0.5
      %vm758 = vcmp.gt.f32.partialorder %v694, 0.5
      %vm759 = vcmp.gt.f32.partialorder %v695, 0.5
      %vm760 = vcmp.gt.f32.partialorder %v696, 0.5
      %vm761 = vcmp.gt.f32.partialorder %v697, 0.5
      %vm762 = vcmp.gt.f32.partialorder %v698, 0.5
      %vm763 = vcmp.gt.f32.partialorder %v699, 0.5
      %vm764 = vcmp.gt.f32.partialorder %v700, 0.5
      %v765 = vsel %vm701, %v493, -1e+30
      %v766 = vsel %vm702, %v494, -1e+30
      %v767 = vsel %vm703, %v495, -1e+30
      %v768 = vsel %vm704, %v496, -1e+30
      %v769 = vsel %vm705, %v497, -1e+30
      %v770 = vsel %vm706, %v498, -1e+30
      %v771 = vsel %vm707, %v499, -1e+30
      %v772 = vsel %vm708, %v500, -1e+30
      %v773 = vsel %vm709, %v501, -1e+30
      %v774 = vsel %vm710, %v502, -1e+30
      %v775 = vsel %vm711, %v503, -1e+30
      %v776 = vsel %vm712, %v504, -1e+30
      %v777 = vsel %vm713, %v505, -1e+30
      %v778 = vsel %vm714, %v506, -1e+30
      %v779 = vsel %vm715, %v507, -1e+30
      %v780 = vsel %vm716, %v508, -1e+30
      %v781 = vsel %vm717, %v509, -1e+30
      %v782 = vsel %vm718, %v510, -1e+30
      %v783 = vsel %vm719, %v511, -1e+30
      %v784 = vsel %vm720, %v512, -1e+30
      %v785 = vsel %vm721, %v513, -1e+30
      %v786 = vsel %vm722, %v514, -1e+30
      %v787 = vsel %vm723, %v515, -1e+30
      %v788 = vsel %vm724, %v516, -1e+30
      %v789 = vsel %vm725, %v517, -1e+30
      %v790 = vsel %vm726, %v518, -1e+30
      %v791 = vsel %vm727, %v519, -1e+30
      %v792 = vsel %vm728, %v520, -1e+30
      %v793 = vsel %vm729, %v521, -1e+30
      %v794 = vsel %vm730, %v522, -1e+30
      %v795 = vsel %vm731, %v523, -1e+30
      %v796 = vsel %vm732, %v524, -1e+30
      %v797 = vsel %vm733, %v525, -1e+30
      %v798 = vsel %vm734, %v526, -1e+30
      %v799 = vsel %vm735, %v527, -1e+30
      %v800 = vsel %vm736, %v528, -1e+30
      %v801 = vsel %vm737, %v529, -1e+30
      %v802 = vsel %vm738, %v530, -1e+30
      %v803 = vsel %vm739, %v531, -1e+30
      %v804 = vsel %vm740, %v532, -1e+30
      %v805 = vsel %vm741, %v533, -1e+30
      %v806 = vsel %vm742, %v534, -1e+30
      %v807 = vsel %vm743, %v535, -1e+30
      %v808 = vsel %vm744, %v536, -1e+30
      %v809 = vsel %vm745, %v537, -1e+30
      %v810 = vsel %vm746, %v538, -1e+30
      %v811 = vsel %vm747, %v539, -1e+30
      %v812 = vsel %vm748, %v540, -1e+30
      %v813 = vsel %vm749, %v541, -1e+30
      %v814 = vsel %vm750, %v542, -1e+30
      %v815 = vsel %vm751, %v543, -1e+30
      %v816 = vsel %vm752, %v544, -1e+30
      %v817 = vsel %vm753, %v545, -1e+30
      %v818 = vsel %vm754, %v546, -1e+30
      %v819 = vsel %vm755, %v547, -1e+30
      %v820 = vsel %vm756, %v548, -1e+30
      %v821 = vsel %vm757, %v549, -1e+30
      %v822 = vsel %vm758, %v550, -1e+30
      %v823 = vsel %vm759, %v551, -1e+30
      %v824 = vsel %vm760, %v552, -1e+30
      %v825 = vsel %vm761, %v553, -1e+30
      %v826 = vsel %vm762, %v554, -1e+30
      %v827 = vsel %vm763, %v555, -1e+30
      %v828 = vsel %vm764, %v556, -1e+30
      %v829 = vld [vmem:[#allocation2] sm:$0xff]
      %v830 = vld [vmem:[#allocation2 + $0x8] sm:$0xff]
      %v831 = vld [vmem:[#allocation2 + $0x10] sm:$0xff]
      %v832 = vld [vmem:[#allocation2 + $0x18] sm:$0xff]
      %v833 = vld [vmem:[#allocation2 + $0x20] sm:$0xff]
      %v834 = vld [vmem:[#allocation2 + $0x28] sm:$0xff]
      %v835 = vld [vmem:[#allocation2 + $0x30] sm:$0xff]
      %v836 = vld [vmem:[#allocation2 + $0x38] sm:$0xff]
      %v837 = vld [vmem:[#allocation2 + $0x40] sm:$0xff]
      %v838 = vld [vmem:[#allocation2 + $0x48] sm:$0xff]
      %v839 = vld [vmem:[#allocation2 + $0x50] sm:$0xff]
      %v840 = vld [vmem:[#allocation2 + $0x58] sm:$0xff]
      %v841 = vld [vmem:[#allocation2 + $0x60] sm:$0xff]
      %v842 = vld [vmem:[#allocation2 + $0x68] sm:$0xff]
      %v843 = vld [vmem:[#allocation2 + $0x70] sm:$0xff]
      %v844 = vld [vmem:[#allocation2 + $0x78] sm:$0xff]
      %v845 = vld [vmem:[#allocation2 + $0x80] sm:$0xff]
      %v846 = vld [vmem:[#allocation2 + $0x88] sm:$0xff]
      %v847 = vld [vmem:[#allocation2 + $0x90] sm:$0xff]
      %v848 = vld [vmem:[#allocation2 + $0x98] sm:$0xff]
      %v849 = vld [vmem:[#allocation2 + $0xa0] sm:$0xff]
      %v850 = vld [vmem:[#allocation2 + $0xa8] sm:$0xff]
      %v851 = vld [vmem:[#allocation2 + $0xb0] sm:$0xff]
      %v852 = vld [vmem:[#allocation2 + $0xb8] sm:$0xff]
      %v853 = vld [vmem:[#allocation2 + $0xc0] sm:$0xff]
      %v854 = vld [vmem:[#allocation2 + $0xc8] sm:$0xff]
      %v855 = vld [vmem:[#allocation2 + $0xd0] sm:$0xff]
      %v856 = vld [vmem:[#allocation2 + $0xd8] sm:$0xff]
      %v857 = vld [vmem:[#allocation2 + $0xe0] sm:$0xff]
      %v858 = vld [vmem:[#allocation2 + $0xe8] sm:$0xff]
      %v859 = vld [vmem:[#allocation2 + $0xf0] sm:$0xff]
      %v860 = vld [vmem:[#allocation2 + $0xf8] sm:$0xff]
      %v861 = vmax.f32 %v765, %v766
      %862 = vmax.xlane.f32.xlu0 %v861
      %v863 = vpop.xlane.xlu0 %862
      %v864 = vmax.f32 %v767, %v768
      %865 = vmax.xlane.f32.xlu0 %v864
      %v866 = vpop.xlane.xlu0 %865
      %v867 = vmax.f32 %v769, %v770
      %868 = vmax.xlane.f32.xlu0 %v867
      %v869 = vpop.xlane.xlu0 %868
      %v870 = vmax.f32 %v771, %v772
      %871 = vmax.xlane.f32.xlu0 %v870
      %v872 = vpop.xlane.xlu0 %871
      %v873 = vmax.f32 %v773, %v774
      %874 = vmax.xlane.f32.xlu0 %v873
      %v875 = vpop.xlane.xlu0 %874
      %v876 = vmax.f32 %v775, %v776
      %877 = vmax.xlane.f32.xlu0 %v876
      %v878 = vpop.xlane.xlu0 %877
      %v879 = vmax.f32 %v777, %v778
      %880 = vmax.xlane.f32.xlu0 %v879
      %v881 = vpop.xlane.xlu0 %880
      %v882 = vmax.f32 %v779, %v780
      %883 = vmax.xlane.f32.xlu0 %v882
      %v884 = vpop.xlane.xlu0 %883
      %v885 = vmax.f32 %v781, %v782
      %886 = vmax.xlane.f32.xlu0 %v885
      %v887 = vpop.xlane.xlu0 %886
      %v888 = vmax.f32 %v783, %v784
      %889 = vmax.xlane.f32.xlu0 %v888
      %v890 = vpop.xlane.xlu0 %889
      %v891 = vmax.f32 %v785, %v786
      %892 = vmax.xlane.f32.xlu0 %v891
      %v893 = vpop.xlane.xlu0 %892
      %v894 = vmax.f32 %v787, %v788
      %895 = vmax.xlane.f32.xlu0 %v894
      %v896 = vpop.xlane.xlu0 %895
      %v897 = vmax.f32 %v789, %v790
      %898 = vmax.xlane.f32.xlu0 %v897
      %v899 = vpop.xlane.xlu0 %898
      %v900 = vmax.f32 %v791, %v792
      %901 = vmax.xlane.f32.xlu0 %v900
      %v902 = vpop.xlane.xlu0 %901
      %v903 = vmax.f32 %v793, %v794
      %904 = vmax.xlane.f32.xlu0 %v903
      %v905 = vpop.xlane.xlu0 %904
      %v906 = vmax.f32 %v795, %v796
      %907 = vmax.xlane.f32.xlu0 %v906
      %v908 = vpop.xlane.xlu0 %907
      %v909 = vmax.f32 %v797, %v798
      %910 = vmax.xlane.f32.xlu0 %v909
      %v911 = vpop.xlane.xlu0 %910
      %v912 = vmax.f32 %v799, %v800
      %913 = vmax.xlane.f32.xlu0 %v912
      %v914 = vpop.xlane.xlu0 %913
      %v915 = vmax.f32 %v801, %v802
      %916 = vmax.xlane.f32.xlu0 %v915
      %v917 = vpop.xlane.xlu0 %916
      %v918 = vmax.f32 %v803, %v804
      %919 = vmax.xlane.f32.xlu0 %v918
      %v920 = vpop.xlane.xlu0 %919
      %v921 = vmax.f32 %v805, %v806
      %922 = vmax.xlane.f32.xlu0 %v921
      %v923 = vpop.xlane.xlu0 %922
      %v924 = vmax.f32 %v807, %v808
      %925 = vmax.xlane.f32.xlu0 %v924
      %v926 = vpop.xlane.xlu0 %925
      %v927 = vmax.f32 %v809, %v810
      %928 = vmax.xlane.f32.xlu0 %v927
      %v929 = vpop.xlane.xlu0 %928
      %v930 = vmax.f32 %v811, %v812
      %931 = vmax.xlane.f32.xlu0 %v930
      %v932 = vpop.xlane.xlu0 %931
      %v933 = vmax.f32 %v813, %v814
      %934 = vmax.xlane.f32.xlu0 %v933
      %v935 = vpop.xlane.xlu0 %934
      %v936 = vmax.f32 %v815, %v816
      %937 = vmax.xlane.f32.xlu0 %v936
      %v938 = vpop.xlane.xlu0 %937
      %v939 = vmax.f32 %v817, %v818
      %940 = vmax.xlane.f32.xlu0 %v939
      %v941 = vpop.xlane.xlu0 %940
      %v942 = vmax.f32 %v819, %v820
      %943 = vmax.xlane.f32.xlu0 %v942
      %v944 = vpop.xlane.xlu0 %943
      %v945 = vmax.f32 %v821, %v822
      %946 = vmax.xlane.f32.xlu0 %v945
      %v947 = vpop.xlane.xlu0 %946
      %v948 = vmax.f32 %v823, %v824
      %949 = vmax.xlane.f32.xlu0 %v948
      %v950 = vpop.xlane.xlu0 %949
      %v951 = vmax.f32 %v825, %v826
      %952 = vmax.xlane.f32.xlu0 %v951
      %v953 = vpop.xlane.xlu0 %952
      %v954 = vmax.f32 %v827, %v828
      %955 = vmax.xlane.f32.xlu0 %v954
      %v956 = vpop.xlane.xlu0 %955
      %v957 = vmax.f32 %v829, %v863
      %v958 = vmax.f32 %v830, %v866
      %v959 = vmax.f32 %v831, %v869
      %v960 = vmax.f32 %v832, %v872
      %v961 = vmax.f32 %v833, %v875
      %v962 = vmax.f32 %v834, %v878
      %v963 = vmax.f32 %v835, %v881
      %v964 = vmax.f32 %v836, %v884
      %v965 = vmax.f32 %v837, %v887
      %v966 = vmax.f32 %v838, %v890
      %v967 = vmax.f32 %v839, %v893
      %v968 = vmax.f32 %v840, %v896
      %v969 = vmax.f32 %v841, %v899
      %v970 = vmax.f32 %v842, %v902
      %v971 = vmax.f32 %v843, %v905
      %v972 = vmax.f32 %v844, %v908
      %v973 = vmax.f32 %v845, %v911
      %v974 = vmax.f32 %v846, %v914
      %v975 = vmax.f32 %v847, %v917
      %v976 = vmax.f32 %v848, %v920
      %v977 = vmax.f32 %v849, %v923
      %v978 = vmax.f32 %v850, %v926
      %v979 = vmax.f32 %v851, %v929
      %v980 = vmax.f32 %v852, %v932
      %v981 = vmax.f32 %v853, %v935
      %v982 = vmax.f32 %v854, %v938
      %v983 = vmax.f32 %v855, %v941
      %v984 = vmax.f32 %v856, %v944
      %v985 = vmax.f32 %v857, %v947
      %v986 = vmax.f32 %v858, %v950
      %v987 = vmax.f32 %v859, %v953
      %v988 = vmax.f32 %v860, %v956
      %v989 = vsub.f32 %v829, %v957
      %v990 = vsub.f32 %v830, %v958
      %v991 = vsub.f32 %v831, %v959
      %v992 = vsub.f32 %v832, %v960
      %v993 = vsub.f32 %v833, %v961
      %v994 = vsub.f32 %v834, %v962
      %v995 = vsub.f32 %v835, %v963
      %v996 = vsub.f32 %v836, %v964
      %v997 = vsub.f32 %v837, %v965
      %v998 = vsub.f32 %v838, %v966
      %v999 = vsub.f32 %v839, %v967
      %v1000 = vsub.f32 %v840, %v968
      %v1001 = vsub.f32 %v841, %v969
      %v1002 = vsub.f32 %v842, %v970
      %v1003 = vsub.f32 %v843, %v971
      %v1004 = vsub.f32 %v844, %v972
      %v1005 = vsub.f32 %v845, %v973
      %v1006 = vsub.f32 %v846, %v974
      %v1007 = vsub.f32 %v847, %v975
      %v1008 = vsub.f32 %v848, %v976
      %v1009 = vsub.f32 %v849, %v977
      %v1010 = vsub.f32 %v850, %v978
      %v1011 = vsub.f32 %v851, %v979
      %v1012 = vsub.f32 %v852, %v980
      %v1013 = vsub.f32 %v853, %v981
      %v1014 = vsub.f32 %v854, %v982
      %v1015 = vsub.f32 %v855, %v983
      %v1016 = vsub.f32 %v856, %v984
      %v1017 = vsub.f32 %v857, %v985
      %v1018 = vsub.f32 %v858, %v986
      %v1019 = vsub.f32 %v859, %v987
      %v1020 = vsub.f32 %v860, %v988
      %v1021 = vmul.f32 %v989, 1.442695
      %v1022 = vpow.pop %v1021
      %v1023 = vmul.f32 %v990, 1.442695
      %v1024 = vpow.pop %v1023
      %v1025 = vmul.f32 %v991, 1.442695
      %v1026 = vpow.pop %v1025
      %v1027 = vmul.f32 %v992, 1.442695
      %v1028 = vpow.pop %v1027
      %v1029 = vmul.f32 %v993, 1.442695
      %v1030 = vpow.pop %v1029
      %v1031 = vmul.f32 %v994, 1.442695
      %v1032 = vpow.pop %v1031
      %v1033 = vmul.f32 %v995, 1.442695
      %v1034 = vpow.pop %v1033
      %v1035 = vmul.f32 %v996, 1.442695
      %v1036 = vpow.pop %v1035
      %v1037 = vmul.f32 %v997, 1.442695
      %v1038 = vpow.pop %v1037
      %v1039 = vmul.f32 %v998, 1.442695
      %v1040 = vpow.pop %v1039
      %v1041 = vmul.f32 %v999, 1.442695
      %v1042 = vpow.pop %v1041
      %v1043 = vmul.f32 %v1000, 1.442695
      %v1044 = vpow.pop %v1043
      %v1045 = vmul.f32 %v1001, 1.442695
      %v1046 = vpow.pop %v1045
      %v1047 = vmul.f32 %v1002, 1.442695
      %v1048 = vpow.pop %v1047
      %v1049 = vmul.f32 %v1003, 1.442695
      %v1050 = vpow.pop %v1049
      %v1051 = vmul.f32 %v1004, 1.442695
      %v1052 = vpow.pop %v1051
      %v1053 = vmul.f32 %v1005, 1.442695
      %v1054 = vpow.pop %v1053
      %v1055 = vmul.f32 %v1006, 1.442695
      %v1056 = vpow.pop %v1055
      %v1057 = vmul.f32 %v1007, 1.442695
      %v1058 = vpow.pop %v1057
      %v1059 = vmul.f32 %v1008, 1.442695
      %v1060 = vpow.pop %v1059
      %v1061 = vmul.f32 %v1009, 1.442695
      %v1062 = vpow.pop %v1061
      %v1063 = vmul.f32 %v1010, 1.442695
      %v1064 = vpow.pop %v1063
      %v1065 = vmul.f32 %v1011, 1.442695
      %v1066 = vpow.pop %v1065
      %v1067 = vmul.f32 %v1012, 1.442695
      %v1068 = vpow.pop %v1067
      %v1069 = vmul.f32 %v1013, 1.442695
      %v1070 = vpow.pop %v1069
      %v1071 = vmul.f32 %v1014, 1.442695
      %v1072 = vpow.pop %v1071
      %v1073 = vmul.f32 %v1015, 1.442695
      %v1074 = vpow.pop %v1073
      %v1075 = vmul.f32 %v1016, 1.442695
      %v1076 = vpow.pop %v1075
      %v1077 = vmul.f32 %v1017, 1.442695
      %v1078 = vpow.pop %v1077
      %v1079 = vmul.f32 %v1018, 1.442695
      %v1080 = vpow.pop %v1079
      %v1081 = vmul.f32 %v1019, 1.442695
      %v1082 = vpow.pop %v1081
      %v1083 = vmul.f32 %v1020, 1.442695
      %v1084 = vpow.pop %v1083
      %1086 = vset.pattern.permute.xlu0 0
      %1087 = vperm.xlu0 %1086, %v957
      %v1088 = vpop.permute.xlu0 %1087
      %1091 = vset.pattern.permute.xlu0 0
      %1092 = vperm.xlu0 %1091, %v958
      %v1093 = vpop.permute.xlu0 %1092
      %1096 = vset.pattern.permute.xlu0 0
      %1097 = vperm.xlu0 %1096, %v959
      %v1098 = vpop.permute.xlu0 %1097
      %1101 = vset.pattern.permute.xlu0 0
      %1102 = vperm.xlu0 %1101, %v960
      %v1103 = vpop.permute.xlu0 %1102
      %1106 = vset.pattern.permute.xlu0 0
      %1107 = vperm.xlu0 %1106, %v961
      %v1108 = vpop.permute.xlu0 %1107
      %1111 = vset.pattern.permute.xlu0 0
      %1112 = vperm.xlu0 %1111, %v962
      %v1113 = vpop.permute.xlu0 %1112
      %1116 = vset.pattern.permute.xlu0 0
      %1117 = vperm.xlu0 %1116, %v963
      %v1118 = vpop.permute.xlu0 %1117
      %1121 = vset.pattern.permute.xlu0 0
      %1122 = vperm.xlu0 %1121, %v964
      %v1123 = vpop.permute.xlu0 %1122
      %1126 = vset.pattern.permute.xlu0 0
      %1127 = vperm.xlu0 %1126, %v965
      %v1128 = vpop.permute.xlu0 %1127
      %1131 = vset.pattern.permute.xlu0 0
      %1132 = vperm.xlu0 %1131, %v966
      %v1133 = vpop.permute.xlu0 %1132
      %1136 = vset.pattern.permute.xlu0 0
      %1137 = vperm.xlu0 %1136, %v967
      %v1138 = vpop.permute.xlu0 %1137
      %1141 = vset.pattern.permute.xlu0 0
      %1142 = vperm.xlu0 %1141, %v968
      %v1143 = vpop.permute.xlu0 %1142
      %1146 = vset.pattern.permute.xlu0 0
      %1147 = vperm.xlu0 %1146, %v969
      %v1148 = vpop.permute.xlu0 %1147
      %1151 = vset.pattern.permute.xlu0 0
      %1152 = vperm.xlu0 %1151, %v970
      %v1153 = vpop.permute.xlu0 %1152
      %1156 = vset.pattern.permute.xlu0 0
      %1157 = vperm.xlu0 %1156, %v971
      %v1158 = vpop.permute.xlu0 %1157
      %1161 = vset.pattern.permute.xlu0 0
      %1162 = vperm.xlu0 %1161, %v972
      %v1163 = vpop.permute.xlu0 %1162
      %1166 = vset.pattern.permute.xlu0 0
      %1167 = vperm.xlu0 %1166, %v973
      %v1168 = vpop.permute.xlu0 %1167
      %1171 = vset.pattern.permute.xlu0 0
      %1172 = vperm.xlu0 %1171, %v974
      %v1173 = vpop.permute.xlu0 %1172
      %1176 = vset.pattern.permute.xlu0 0
      %1177 = vperm.xlu0 %1176, %v975
      %v1178 = vpop.permute.xlu0 %1177
      %1181 = vset.pattern.permute.xlu0 0
      %1182 = vperm.xlu0 %1181, %v976
      %v1183 = vpop.permute.xlu0 %1182
      %1186 = vset.pattern.permute.xlu0 0
      %1187 = vperm.xlu0 %1186, %v977
      %v1188 = vpop.permute.xlu0 %1187
      %1191 = vset.pattern.permute.xlu0 0
      %1192 = vperm.xlu0 %1191, %v978
      %v1193 = vpop.permute.xlu0 %1192
      %1196 = vset.pattern.permute.xlu0 0
      %1197 = vperm.xlu0 %1196, %v979
      %v1198 = vpop.permute.xlu0 %1197
      %1201 = vset.pattern.permute.xlu0 0
      %1202 = vperm.xlu0 %1201, %v980
      %v1203 = vpop.permute.xlu0 %1202
      %1206 = vset.pattern.permute.xlu0 0
      %1207 = vperm.xlu0 %1206, %v981
      %v1208 = vpop.permute.xlu0 %1207
      %1211 = vset.pattern.permute.xlu0 0
      %1212 = vperm.xlu0 %1211, %v982
      %v1213 = vpop.permute.xlu0 %1212
      %1216 = vset.pattern.permute.xlu0 0
      %1217 = vperm.xlu0 %1216, %v983
      %v1218 = vpop.permute.xlu0 %1217
      %1221 = vset.pattern.permute.xlu0 0
      %1222 = vperm.xlu0 %1221, %v984
      %v1223 = vpop.permute.xlu0 %1222
      %1226 = vset.pattern.permute.xlu0 0
      %1227 = vperm.xlu0 %1226, %v985
      %v1228 = vpop.permute.xlu0 %1227
      %1231 = vset.pattern.permute.xlu0 0
      %1232 = vperm.xlu0 %1231, %v986
      %v1233 = vpop.permute.xlu0 %1232
      %1236 = vset.pattern.permute.xlu0 0
      %1237 = vperm.xlu0 %1236, %v987
      %v1238 = vpop.permute.xlu0 %1237
      %1241 = vset.pattern.permute.xlu0 0
      %1242 = vperm.xlu0 %1241, %v988
      %v1243 = vpop.permute.xlu0 %1242
      %v1245 = vsub.f32 %v765, %v1088
      %v1246 = vsub.f32 %v766, %v1088
      %v1247 = vsub.f32 %v767, %v1093
      %v1248 = vsub.f32 %v768, %v1093
      %v1249 = vsub.f32 %v769, %v1098
      %v1250 = vsub.f32 %v770, %v1098
      %v1251 = vsub.f32 %v771, %v1103
      %v1252 = vsub.f32 %v772, %v1103
      %v1253 = vsub.f32 %v773, %v1108
      %v1254 = vsub.f32 %v774, %v1108
      %v1255 = vsub.f32 %v775, %v1113
      %v1256 = vsub.f32 %v776, %v1113
      %v1257 = vsub.f32 %v777, %v1118
      %v1258 = vsub.f32 %v778, %v1118
      %v1259 = vsub.f32 %v779, %v1123
      %v1260 = vsub.f32 %v780, %v1123
      %v1261 = vsub.f32 %v781, %v1128
      %v1262 = vsub.f32 %v782, %v1128
      %v1263 = vsub.f32 %v783, %v1133
      %v1264 = vsub.f32 %v784, %v1133
      %v1265 = vsub.f32 %v785, %v1138
      %v1266 = vsub.f32 %v786, %v1138
      %v1267 = vsub.f32 %v787, %v1143
      %v1268 = vsub.f32 %v788, %v1143
      %v1269 = vsub.f32 %v789, %v1148
      %v1270 = vsub.f32 %v790, %v1148
      %v1271 = vsub.f32 %v791, %v1153
      %v1272 = vsub.f32 %v792, %v1153
      %v1273 = vsub.f32 %v793, %v1158
      %v1274 = vsub.f32 %v794, %v1158
      %v1275 = vsub.f32 %v795, %v1163
      %v1276 = vsub.f32 %v796, %v1163
      %v1277 = vsub.f32 %v797, %v1168
      %v1278 = vsub.f32 %v798, %v1168
      %v1279 = vsub.f32 %v799, %v1173
      %v1280 = vsub.f32 %v800, %v1173
      %v1281 = vsub.f32 %v801, %v1178
      %v1282 = vsub.f32 %v802, %v1178
      %v1283 = vsub.f32 %v803, %v1183
      %v1284 = vsub.f32 %v804, %v1183
      %v1285 = vsub.f32 %v805, %v1188
      %v1286 = vsub.f32 %v806, %v1188
      %v1287 = vsub.f32 %v807, %v1193
      %v1288 = vsub.f32 %v808, %v1193
      %v1289 = vsub.f32 %v809, %v1198
      %v1290 = vsub.f32 %v810, %v1198
      %v1291 = vsub.f32 %v811, %v1203
      %v1292 = vsub.f32 %v812, %v1203
      %v1293 = vsub.f32 %v813, %v1208
      %v1294 = vsub.f32 %v814, %v1208
      %v1295 = vsub.f32 %v815, %v1213
      %v1296 = vsub.f32 %v816, %v1213
      %v1297 = vsub.f32 %v817, %v1218
      %v1298 = vsub.f32 %v818, %v1218
      %v1299 = vsub.f32 %v819, %v1223
      %v1300 = vsub.f32 %v820, %v1223
      %v1301 = vsub.f32 %v821, %v1228
      %v1302 = vsub.f32 %v822, %v1228
      %v1303 = vsub.f32 %v823, %v1233
      %v1304 = vsub.f32 %v824, %v1233
      %v1305 = vsub.f32 %v825, %v1238
      %v1306 = vsub.f32 %v826, %v1238
      %v1307 = vsub.f32 %v827, %v1243
      %v1308 = vsub.f32 %v828, %v1243
      %v1309 = vpack.c.bf16 %v1247, %v1245
      %v1310 = vpack.c.bf16 %v1248, %v1246
      %v1311 = vpack.c.bf16 %v1251, %v1249
      %v1312 = vpack.c.bf16 %v1252, %v1250
      %v1313 = vpack.c.bf16 %v1255, %v1253
      %v1314 = vpack.c.bf16 %v1256, %v1254
      %v1315 = vpack.c.bf16 %v1259, %v1257
      %v1316 = vpack.c.bf16 %v1260, %v1258
      %v1317 = vpack.c.bf16 %v1263, %v1261
      %v1318 = vpack.c.bf16 %v1264, %v1262
      %v1319 = vpack.c.bf16 %v1267, %v1265
      %v1320 = vpack.c.bf16 %v1268, %v1266
      %v1321 = vpack.c.bf16 %v1271, %v1269
      %v1322 = vpack.c.bf16 %v1272, %v1270
      %v1323 = vpack.c.bf16 %v1275, %v1273
      %v1324 = vpack.c.bf16 %v1276, %v1274
      %v1325 = vpack.c.bf16 %v1279, %v1277
      %v1326 = vpack.c.bf16 %v1280, %v1278
      %v1327 = vpack.c.bf16 %v1283, %v1281
      %v1328 = vpack.c.bf16 %v1284, %v1282
      %v1329 = vpack.c.bf16 %v1287, %v1285
      %v1330 = vpack.c.bf16 %v1288, %v1286
      %v1331 = vpack.c.bf16 %v1291, %v1289
      %v1332 = vpack.c.bf16 %v1292, %v1290
      %v1333 = vpack.c.bf16 %v1295, %v1293
      %v1334 = vpack.c.bf16 %v1296, %v1294
      %v1335 = vpack.c.bf16 %v1299, %v1297
      %v1336 = vpack.c.bf16 %v1300, %v1298
      %v1337 = vpack.c.bf16 %v1303, %v1301
      %v1338 = vpack.c.bf16 %v1304, %v1302
      %v1339 = vpack.c.bf16 %v1307, %v1305
      %v1340 = vpack.c.bf16 %v1308, %v1306
      %v1341 = vunpack.c.l.bf16 %v1309
      %v1342 = vunpack.c.l.bf16 %v1310
      %v1343 = vunpack.c.h.bf16 %v1309
      %v1344 = vunpack.c.h.bf16 %v1310
      %v1345 = vunpack.c.l.bf16 %v1311
      %v1346 = vunpack.c.l.bf16 %v1312
      %v1347 = vunpack.c.h.bf16 %v1311
      %v1348 = vunpack.c.h.bf16 %v1312
      %v1349 = vunpack.c.l.bf16 %v1313
      %v1350 = vunpack.c.l.bf16 %v1314
      %v1351 = vunpack.c.h.bf16 %v1313
      %v1352 = vunpack.c.h.bf16 %v1314
      %v1353 = vunpack.c.l.bf16 %v1315
      %v1354 = vunpack.c.l.bf16 %v1316
      %v1355 = vunpack.c.h.bf16 %v1315
      %v1356 = vunpack.c.h.bf16 %v1316
      %v1357 = vunpack.c.l.bf16 %v1317
      %v1358 = vunpack.c.l.bf16 %v1318
      %v1359 = vunpack.c.h.bf16 %v1317
      %v1360 = vunpack.c.h.bf16 %v1318
      %v1361 = vunpack.c.l.bf16 %v1319
      %v1362 = vunpack.c.l.bf16 %v1320
      %v1363 = vunpack.c.h.bf16 %v1319
      %v1364 = vunpack.c.h.bf16 %v1320
      %v1365 = vunpack.c.l.bf16 %v1321
      %v1366 = vunpack.c.l.bf16 %v1322
      %v1367 = vunpack.c.h.bf16 %v1321
      %v1368 = vunpack.c.h.bf16 %v1322
      %v1369 = vunpack.c.l.bf16 %v1323
      %v1370 = vunpack.c.l.bf16 %v1324
      %v1371 = vunpack.c.h.bf16 %v1323
      %v1372 = vunpack.c.h.bf16 %v1324
      %v1373 = vunpack.c.l.bf16 %v1325
      %v1374 = vunpack.c.l.bf16 %v1326
      %v1375 = vunpack.c.h.bf16 %v1325
      %v1376 = vunpack.c.h.bf16 %v1326
      %v1377 = vunpack.c.l.bf16 %v1327
      %v1378 = vunpack.c.l.bf16 %v1328
      %v1379 = vunpack.c.h.bf16 %v1327
      %v1380 = vunpack.c.h.bf16 %v1328
      %v1381 = vunpack.c.l.bf16 %v1329
      %v1382 = vunpack.c.l.bf16 %v1330
      %v1383 = vunpack.c.h.bf16 %v1329
      %v1384 = vunpack.c.h.bf16 %v1330
      %v1385 = vunpack.c.l.bf16 %v1331
      %v1386 = vunpack.c.l.bf16 %v1332
      %v1387 = vunpack.c.h.bf16 %v1331
      %v1388 = vunpack.c.h.bf16 %v1332
      %v1389 = vunpack.c.l.bf16 %v1333
      %v1390 = vunpack.c.l.bf16 %v1334
      %v1391 = vunpack.c.h.bf16 %v1333
      %v1392 = vunpack.c.h.bf16 %v1334
      %v1393 = vunpack.c.l.bf16 %v1335
      %v1394 = vunpack.c.l.bf16 %v1336
      %v1395 = vunpack.c.h.bf16 %v1335
      %v1396 = vunpack.c.h.bf16 %v1336
      %v1397 = vunpack.c.l.bf16 %v1337
      %v1398 = vunpack.c.l.bf16 %v1338
      %v1399 = vunpack.c.h.bf16 %v1337
      %v1400 = vunpack.c.h.bf16 %v1338
      %v1401 = vunpack.c.l.bf16 %v1339
      %v1402 = vunpack.c.l.bf16 %v1340
      %v1403 = vunpack.c.h.bf16 %v1339
      %v1404 = vunpack.c.h.bf16 %v1340
      %v1405 = vmul.f32 %v1341, 1.442695
      %v1406 = vpow.pop %v1405
      %v1407 = vmul.f32 %v1342, 1.442695
      %v1408 = vpow.pop %v1407
      %v1409 = vmul.f32 %v1343, 1.442695
      %v1410 = vpow.pop %v1409
      %v1411 = vmul.f32 %v1344, 1.442695
      %v1412 = vpow.pop %v1411
      %v1413 = vmul.f32 %v1345, 1.442695
      %v1414 = vpow.pop %v1413
      %v1415 = vmul.f32 %v1346, 1.442695
      %v1416 = vpow.pop %v1415
      %v1417 = vmul.f32 %v1347, 1.442695
      %v1418 = vpow.pop %v1417
      %v1419 = vmul.f32 %v1348, 1.442695
      %v1420 = vpow.pop %v1419
      %v1421 = vmul.f32 %v1349, 1.442695
      %v1422 = vpow.pop %v1421
      %v1423 = vmul.f32 %v1350, 1.442695
      %v1424 = vpow.pop %v1423
      %v1425 = vmul.f32 %v1351, 1.442695
      %v1426 = vpow.pop %v1425
      %v1427 = vmul.f32 %v1352, 1.442695
      %v1428 = vpow.pop %v1427
      %v1429 = vmul.f32 %v1353, 1.442695
      %v1430 = vpow.pop %v1429
      %v1431 = vmul.f32 %v1354, 1.442695
      %v1432 = vpow.pop %v1431
      %v1433 = vmul.f32 %v1355, 1.442695
      %v1434 = vpow.pop %v1433
      %v1435 = vmul.f32 %v1356, 1.442695
      %v1436 = vpow.pop %v1435
      %v1437 = vmul.f32 %v1357, 1.442695
      %v1438 = vpow.pop %v1437
      %v1439 = vmul.f32 %v1358, 1.442695
      %v1440 = vpow.pop %v1439
      %v1441 = vmul.f32 %v1359, 1.442695
      %v1442 = vpow.pop %v1441
      %v1443 = vmul.f32 %v1360, 1.442695
      %v1444 = vpow.pop %v1443
      %v1445 = vmul.f32 %v1361, 1.442695
      %v1446 = vpow.pop %v1445
      %v1447 = vmul.f32 %v1362, 1.442695
      %v1448 = vpow.pop %v1447
      %v1449 = vmul.f32 %v1363, 1.442695
      %v1450 = vpow.pop %v1449
      %v1451 = vmul.f32 %v1364, 1.442695
      %v1452 = vpow.pop %v1451
      %v1453 = vmul.f32 %v1365, 1.442695
      %v1454 = vpow.pop %v1453
      %v1455 = vmul.f32 %v1366, 1.442695
      %v1456 = vpow.pop %v1455
      %v1457 = vmul.f32 %v1367, 1.442695
      %v1458 = vpow.pop %v1457
      %v1459 = vmul.f32 %v1368, 1.442695
      %v1460 = vpow.pop %v1459
      %v1461 = vmul.f32 %v1369, 1.442695
      %v1462 = vpow.pop %v1461
      %v1463 = vmul.f32 %v1370, 1.442695
      %v1464 = vpow.pop %v1463
      %v1465 = vmul.f32 %v1371, 1.442695
      %v1466 = vpow.pop %v1465
      %v1467 = vmul.f32 %v1372, 1.442695
      %v1468 = vpow.pop %v1467
      %v1469 = vmul.f32 %v1373, 1.442695
      %v1470 = vpow.pop %v1469
      %v1471 = vmul.f32 %v1374, 1.442695
      %v1472 = vpow.pop %v1471
      %v1473 = vmul.f32 %v1375, 1.442695
      %v1474 = vpow.pop %v1473
      %v1475 = vmul.f32 %v1376, 1.442695
      %v1476 = vpow.pop %v1475
      %v1477 = vmul.f32 %v1377, 1.442695
      %v1478 = vpow.pop %v1477
      %v1479 = vmul.f32 %v1378, 1.442695
      %v1480 = vpow.pop %v1479
      %v1481 = vmul.f32 %v1379, 1.442695
      %v1482 = vpow.pop %v1481
      %v1483 = vmul.f32 %v1380, 1.442695
      %v1484 = vpow.pop %v1483
      %v1485 = vmul.f32 %v1381, 1.442695
      %v1486 = vpow.pop %v1485
      %v1487 = vmul.f32 %v1382, 1.442695
      %v1488 = vpow.pop %v1487
      %v1489 = vmul.f32 %v1383, 1.442695
      %v1490 = vpow.pop %v1489
      %v1491 = vmul.f32 %v1384, 1.442695
      %v1492 = vpow.pop %v1491
      %v1493 = vmul.f32 %v1385, 1.442695
      %v1494 = vpow.pop %v1493
      %v1495 = vmul.f32 %v1386, 1.442695
      %v1496 = vpow.pop %v1495
      %v1497 = vmul.f32 %v1387, 1.442695
      %v1498 = vpow.pop %v1497
      %v1499 = vmul.f32 %v1388, 1.442695
      %v1500 = vpow.pop %v1499
      %v1501 = vmul.f32 %v1389, 1.442695
      %v1502 = vpow.pop %v1501
      %v1503 = vmul.f32 %v1390, 1.442695
      %v1504 = vpow.pop %v1503
      %v1505 = vmul.f32 %v1391, 1.442695
      %v1506 = vpow.pop %v1505
      %v1507 = vmul.f32 %v1392, 1.442695
      %v1508 = vpow.pop %v1507
      %v1509 = vmul.f32 %v1393, 1.442695
      %v1510 = vpow.pop %v1509
      %v1511 = vmul.f32 %v1394, 1.442695
      %v1512 = vpow.pop %v1511
      %v1513 = vmul.f32 %v1395, 1.442695
      %v1514 = vpow.pop %v1513
      %v1515 = vmul.f32 %v1396, 1.442695
      %v1516 = vpow.pop %v1515
      %v1517 = vmul.f32 %v1397, 1.442695
      %v1518 = vpow.pop %v1517
      %v1519 = vmul.f32 %v1398, 1.442695
      %v1520 = vpow.pop %v1519
      %v1521 = vmul.f32 %v1399, 1.442695
      %v1522 = vpow.pop %v1521
      %v1523 = vmul.f32 %v1400, 1.442695
      %v1524 = vpow.pop %v1523
      %v1525 = vmul.f32 %v1401, 1.442695
      %v1526 = vpow.pop %v1525
      %v1527 = vmul.f32 %v1402, 1.442695
      %v1528 = vpow.pop %v1527
      %v1529 = vmul.f32 %v1403, 1.442695
      %v1530 = vpow.pop %v1529
      %v1531 = vmul.f32 %v1404, 1.442695
      %v1532 = vpow.pop %v1531
      %v1533 = vpack.c.bf16 %v1410, %v1406
      %v1534 = vpack.c.bf16 %v1412, %v1408
      %v1535 = vpack.c.bf16 %v1418, %v1414
      %v1536 = vpack.c.bf16 %v1420, %v1416
      %v1537 = vpack.c.bf16 %v1426, %v1422
      %v1538 = vpack.c.bf16 %v1428, %v1424
      %v1539 = vpack.c.bf16 %v1434, %v1430
      %v1540 = vpack.c.bf16 %v1436, %v1432
      %v1541 = vpack.c.bf16 %v1442, %v1438
      %v1542 = vpack.c.bf16 %v1444, %v1440
      %v1543 = vpack.c.bf16 %v1450, %v1446
      %v1544 = vpack.c.bf16 %v1452, %v1448
      %v1545 = vpack.c.bf16 %v1458, %v1454
      %v1546 = vpack.c.bf16 %v1460, %v1456
      %v1547 = vpack.c.bf16 %v1466, %v1462
      %v1548 = vpack.c.bf16 %v1468, %v1464
      %v1549 = vpack.c.bf16 %v1474, %v1470
      %v1550 = vpack.c.bf16 %v1476, %v1472
      %v1551 = vpack.c.bf16 %v1482, %v1478
      %v1552 = vpack.c.bf16 %v1484, %v1480
      %v1553 = vpack.c.bf16 %v1490, %v1486
      %v1554 = vpack.c.bf16 %v1492, %v1488
      %v1555 = vpack.c.bf16 %v1498, %v1494
      %v1556 = vpack.c.bf16 %v1500, %v1496
      %v1557 = vpack.c.bf16 %v1506, %v1502
      %v1558 = vpack.c.bf16 %v1508, %v1504
      %v1559 = vpack.c.bf16 %v1514, %v1510
      %v1560 = vpack.c.bf16 %v1516, %v1512
      %v1561 = vpack.c.bf16 %v1522, %v1518
      %v1562 = vpack.c.bf16 %v1524, %v1520
      %v1563 = vpack.c.bf16 %v1530, %v1526
      %v1564 = vpack.c.bf16 %v1532, %v1528
      %v1565 = vld [vmem:[#allocation3] sm:$0xff]
      %v1566 = vld [vmem:[#allocation3 + $0x8] sm:$0xff]
      %v1567 = vld [vmem:[#allocation3 + $0x10] sm:$0xff]
      %v1568 = vld [vmem:[#allocation3 + $0x18] sm:$0xff]
      %v1569 = vld [vmem:[#allocation3 + $0x20] sm:$0xff]
      %v1570 = vld [vmem:[#allocation3 + $0x28] sm:$0xff]
      %v1571 = vld [vmem:[#allocation3 + $0x30] sm:$0xff]
      %v1572 = vld [vmem:[#allocation3 + $0x38] sm:$0xff]
      %v1573 = vld [vmem:[#allocation3 + $0x40] sm:$0xff]
      %v1574 = vld [vmem:[#allocation3 + $0x48] sm:$0xff]
      %v1575 = vld [vmem:[#allocation3 + $0x50] sm:$0xff]
      %v1576 = vld [vmem:[#allocation3 + $0x58] sm:$0xff]
      %v1577 = vld [vmem:[#allocation3 + $0x60] sm:$0xff]
      %v1578 = vld [vmem:[#allocation3 + $0x68] sm:$0xff]
      %v1579 = vld [vmem:[#allocation3 + $0x70] sm:$0xff]
      %v1580 = vld [vmem:[#allocation3 + $0x78] sm:$0xff]
      %v1581 = vld [vmem:[#allocation3 + $0x80] sm:$0xff]
      %v1582 = vld [vmem:[#allocation3 + $0x88] sm:$0xff]
      %v1583 = vld [vmem:[#allocation3 + $0x90] sm:$0xff]
      %v1584 = vld [vmem:[#allocation3 + $0x98] sm:$0xff]
      %v1585 = vld [vmem:[#allocation3 + $0xa0] sm:$0xff]
      %v1586 = vld [vmem:[#allocation3 + $0xa8] sm:$0xff]
      %v1587 = vld [vmem:[#allocation3 + $0xb0] sm:$0xff]
      %v1588 = vld [vmem:[#allocation3 + $0xb8] sm:$0xff]
      %v1589 = vld [vmem:[#allocation3 + $0xc0] sm:$0xff]
      %v1590 = vld [vmem:[#allocation3 + $0xc8] sm:$0xff]
      %v1591 = vld [vmem:[#allocation3 + $0xd0] sm:$0xff]
      %v1592 = vld [vmem:[#allocation3 + $0xd8] sm:$0xff]
      %v1593 = vld [vmem:[#allocation3 + $0xe0] sm:$0xff]
      %v1594 = vld [vmem:[#allocation3 + $0xe8] sm:$0xff]
      %v1595 = vld [vmem:[#allocation3 + $0xf0] sm:$0xff]
      %v1596 = vld [vmem:[#allocation3 + $0xf8] sm:$0xff]
      %v1597 = vmul.f32 %v1022, %v1565
      %v1598 = vmul.f32 %v1024, %v1566
      %v1599 = vmul.f32 %v1026, %v1567
      %v1600 = vmul.f32 %v1028, %v1568
      %v1601 = vmul.f32 %v1030, %v1569
      %v1602 = vmul.f32 %v1032, %v1570
      %v1603 = vmul.f32 %v1034, %v1571
      %v1604 = vmul.f32 %v1036, %v1572
      %v1605 = vmul.f32 %v1038, %v1573
      %v1606 = vmul.f32 %v1040, %v1574
      %v1607 = vmul.f32 %v1042, %v1575
      %v1608 = vmul.f32 %v1044, %v1576
      %v1609 = vmul.f32 %v1046, %v1577
      %v1610 = vmul.f32 %v1048, %v1578
      %v1611 = vmul.f32 %v1050, %v1579
      %v1612 = vmul.f32 %v1052, %v1580
      %v1613 = vmul.f32 %v1054, %v1581
      %v1614 = vmul.f32 %v1056, %v1582
      %v1615 = vmul.f32 %v1058, %v1583
      %v1616 = vmul.f32 %v1060, %v1584
      %v1617 = vmul.f32 %v1062, %v1585
      %v1618 = vmul.f32 %v1064, %v1586
      %v1619 = vmul.f32 %v1066, %v1587
      %v1620 = vmul.f32 %v1068, %v1588
      %v1621 = vmul.f32 %v1070, %v1589
      %v1622 = vmul.f32 %v1072, %v1590
      %v1623 = vmul.f32 %v1074, %v1591
      %v1624 = vmul.f32 %v1076, %v1592
      %v1625 = vmul.f32 %v1078, %v1593
      %v1626 = vmul.f32 %v1080, %v1594
      %v1627 = vmul.f32 %v1082, %v1595
      %v1628 = vmul.f32 %v1084, %v1596
      %v1629 = vunpack.c.l.bf16 %v1533
      %v1630 = vunpack.c.l.bf16 %v1534
      %v1631 = vunpack.c.h.bf16 %v1533
      %v1632 = vunpack.c.h.bf16 %v1534
      %v1633 = vunpack.c.l.bf16 %v1535
      %v1634 = vunpack.c.l.bf16 %v1536
      %v1635 = vunpack.c.h.bf16 %v1535
      %v1636 = vunpack.c.h.bf16 %v1536
      %v1637 = vunpack.c.l.bf16 %v1537
      %v1638 = vunpack.c.l.bf16 %v1538
      %v1639 = vunpack.c.h.bf16 %v1537
      %v1640 = vunpack.c.h.bf16 %v1538
      %v1641 = vunpack.c.l.bf16 %v1539
      %v1642 = vunpack.c.l.bf16 %v1540
      %v1643 = vunpack.c.h.bf16 %v1539
      %v1644 = vunpack.c.h.bf16 %v1540
      %v1645 = vunpack.c.l.bf16 %v1541
      %v1646 = vunpack.c.l.bf16 %v1542
      %v1647 = vunpack.c.h.bf16 %v1541
      %v1648 = vunpack.c.h.bf16 %v1542
      %v1649 = vunpack.c.l.bf16 %v1543
      %v1650 = vunpack.c.l.bf16 %v1544
      %v1651 = vunpack.c.h.bf16 %v1543
      %v1652 = vunpack.c.h.bf16 %v1544
      %v1653 = vunpack.c.l.bf16 %v1545
      %v1654 = vunpack.c.l.bf16 %v1546
      %v1655 = vunpack.c.h.bf16 %v1545
      %v1656 = vunpack.c.h.bf16 %v1546
      %v1657 = vunpack.c.l.bf16 %v1547
      %v1658 = vunpack.c.l.bf16 %v1548
      %v1659 = vunpack.c.h.bf16 %v1547
      %v1660 = vunpack.c.h.bf16 %v1548
      %v1661 = vunpack.c.l.bf16 %v1549
      %v1662 = vunpack.c.l.bf16 %v1550
      %v1663 = vunpack.c.h.bf16 %v1549
      %v1664 = vunpack.c.h.bf16 %v1550
      %v1665 = vunpack.c.l.bf16 %v1551
      %v1666 = vunpack.c.l.bf16 %v1552
      %v1667 = vunpack.c.h.bf16 %v1551
      %v1668 = vunpack.c.h.bf16 %v1552
      %v1669 = vunpack.c.l.bf16 %v1553
      %v1670 = vunpack.c.l.bf16 %v1554
      %v1671 = vunpack.c.h.bf16 %v1553
      %v1672 = vunpack.c.h.bf16 %v1554
      %v1673 = vunpack.c.l.bf16 %v1555
      %v1674 = vunpack.c.l.bf16 %v1556
      %v1675 = vunpack.c.h.bf16 %v1555
      %v1676 = vunpack.c.h.bf16 %v1556
      %v1677 = vunpack.c.l.bf16 %v1557
      %v1678 = vunpack.c.l.bf16 %v1558
      %v1679 = vunpack.c.h.bf16 %v1557
      %v1680 = vunpack.c.h.bf16 %v1558
      %v1681 = vunpack.c.l.bf16 %v1559
      %v1682 = vunpack.c.l.bf16 %v1560
      %v1683 = vunpack.c.h.bf16 %v1559
      %v1684 = vunpack.c.h.bf16 %v1560
      %v1685 = vunpack.c.l.bf16 %v1561
      %v1686 = vunpack.c.l.bf16 %v1562
      %v1687 = vunpack.c.h.bf16 %v1561
      %v1688 = vunpack.c.h.bf16 %v1562
      %v1689 = vunpack.c.l.bf16 %v1563
      %v1690 = vunpack.c.l.bf16 %v1564
      %v1691 = vunpack.c.h.bf16 %v1563
      %v1692 = vunpack.c.h.bf16 %v1564
      %v1693 = vadd.f32 %v1629, %v1630
      %1694 = vadd.xlane.f32.xlu0 %v1693
      %v1695 = vpop.xlane.xlu0 %1694
      %v1696 = vadd.f32 %v1631, %v1632
      %1697 = vadd.xlane.f32.xlu0 %v1696
      %v1698 = vpop.xlane.xlu0 %1697
      %v1699 = vadd.f32 %v1633, %v1634
      %1700 = vadd.xlane.f32.xlu0 %v1699
      %v1701 = vpop.xlane.xlu0 %1700
      %v1702 = vadd.f32 %v1635, %v1636
      %1703 = vadd.xlane.f32.xlu0 %v1702
      %v1704 = vpop.xlane.xlu0 %1703
      %v1705 = vadd.f32 %v1637, %v1638
      %1706 = vadd.xlane.f32.xlu0 %v1705
      %v1707 = vpop.xlane.xlu0 %1706
      %v1708 = vadd.f32 %v1639, %v1640
      %1709 = vadd.xlane.f32.xlu0 %v1708
      %v1710 = vpop.xlane.xlu0 %1709
      %v1711 = vadd.f32 %v1641, %v1642
      %1712 = vadd.xlane.f32.xlu0 %v1711
      %v1713 = vpop.xlane.xlu0 %1712
      %v1714 = vadd.f32 %v1643, %v1644
      %1715 = vadd.xlane.f32.xlu0 %v1714
      %v1716 = vpop.xlane.xlu0 %1715
      %v1717 = vadd.f32 %v1645, %v1646
      %1718 = vadd.xlane.f32.xlu0 %v1717
      %v1719 = vpop.xlane.xlu0 %1718
      %v1720 = vadd.f32 %v1647, %v1648
      %1721 = vadd.xlane.f32.xlu0 %v1720
      %v1722 = vpop.xlane.xlu0 %1721
      %v1723 = vadd.f32 %v1649, %v1650
      %1724 = vadd.xlane.f32.xlu0 %v1723
      %v1725 = vpop.xlane.xlu0 %1724
      %v1726 = vadd.f32 %v1651, %v1652
      %1727 = vadd.xlane.f32.xlu0 %v1726
      %v1728 = vpop.xlane.xlu0 %1727
      %v1729 = vadd.f32 %v1653, %v1654
      %1730 = vadd.xlane.f32.xlu0 %v1729
      %v1731 = vpop.xlane.xlu0 %1730
      %v1732 = vadd.f32 %v1655, %v1656
      %1733 = vadd.xlane.f32.xlu0 %v1732
      %v1734 = vpop.xlane.xlu0 %1733
      %v1735 = vadd.f32 %v1657, %v1658
      %1736 = vadd.xlane.f32.xlu0 %v1735
      %v1737 = vpop.xlane.xlu0 %1736
      %v1738 = vadd.f32 %v1659, %v1660
      %1739 = vadd.xlane.f32.xlu0 %v1738
      %v1740 = vpop.xlane.xlu0 %1739
      %v1741 = vadd.f32 %v1661, %v1662
      %1742 = vadd.xlane.f32.xlu0 %v1741
      %v1743 = vpop.xlane.xlu0 %1742
      %v1744 = vadd.f32 %v1663, %v1664
      %1745 = vadd.xlane.f32.xlu0 %v1744
      %v1746 = vpop.xlane.xlu0 %1745
      %v1747 = vadd.f32 %v1665, %v1666
      %1748 = vadd.xlane.f32.xlu0 %v1747
      %v1749 = vpop.xlane.xlu0 %1748
      %v1750 = vadd.f32 %v1667, %v1668
      %1751 = vadd.xlane.f32.xlu0 %v1750
      %v1752 = vpop.xlane.xlu0 %1751
      %v1753 = vadd.f32 %v1669, %v1670
      %1754 = vadd.xlane.f32.xlu0 %v1753
      %v1755 = vpop.xlane.xlu0 %1754
      %v1756 = vadd.f32 %v1671, %v1672
      %1757 = vadd.xlane.f32.xlu0 %v1756
      %v1758 = vpop.xlane.xlu0 %1757
      %v1759 = vadd.f32 %v1673, %v1674
      %1760 = vadd.xlane.f32.xlu0 %v1759
      %v1761 = vpop.xlane.xlu0 %1760
      %v1762 = vadd.f32 %v1675, %v1676
      %1763 = vadd.xlane.f32.xlu0 %v1762
      %v1764 = vpop.xlane.xlu0 %1763
      %v1765 = vadd.f32 %v1677, %v1678
      %1766 = vadd.xlane.f32.xlu0 %v1765
      %v1767 = vpop.xlane.xlu0 %1766
      %v1768 = vadd.f32 %v1679, %v1680
      %1769 = vadd.xlane.f32.xlu0 %v1768
      %v1770 = vpop.xlane.xlu0 %1769
      %v1771 = vadd.f32 %v1681, %v1682
      %1772 = vadd.xlane.f32.xlu0 %v1771
      %v1773 = vpop.xlane.xlu0 %1772
      %v1774 = vadd.f32 %v1683, %v1684
      %1775 = vadd.xlane.f32.xlu0 %v1774
      %v1776 = vpop.xlane.xlu0 %1775
      %v1777 = vadd.f32 %v1685, %v1686
      %1778 = vadd.xlane.f32.xlu0 %v1777
      %v1779 = vpop.xlane.xlu0 %1778
      %v1780 = vadd.f32 %v1687, %v1688
      %1781 = vadd.xlane.f32.xlu0 %v1780
      %v1782 = vpop.xlane.xlu0 %1781
      %v1783 = vadd.f32 %v1689, %v1690
      %1784 = vadd.xlane.f32.xlu0 %v1783
      %v1785 = vpop.xlane.xlu0 %1784
      %v1786 = vadd.f32 %v1691, %v1692
      %1787 = vadd.xlane.f32.xlu0 %v1786
      %v1788 = vpop.xlane.xlu0 %1787
      %v1789 = vadd.f32 %v1597, %v1695
      %v1790 = vadd.f32 %v1598, %v1698
      %v1791 = vadd.f32 %v1599, %v1701
      %v1792 = vadd.f32 %v1600, %v1704
      %v1793 = vadd.f32 %v1601, %v1707
      %v1794 = vadd.f32 %v1602, %v1710
      %v1795 = vadd.f32 %v1603, %v1713
      %v1796 = vadd.f32 %v1604, %v1716
      %v1797 = vadd.f32 %v1605, %v1719
      %v1798 = vadd.f32 %v1606, %v1722
      %v1799 = vadd.f32 %v1607, %v1725
      %v1800 = vadd.f32 %v1608, %v1728
      %v1801 = vadd.f32 %v1609, %v1731
      %v1802 = vadd.f32 %v1610, %v1734
      %v1803 = vadd.f32 %v1611, %v1737
      %v1804 = vadd.f32 %v1612, %v1740
      %v1805 = vadd.f32 %v1613, %v1743
      %v1806 = vadd.f32 %v1614, %v1746
      %v1807 = vadd.f32 %v1615, %v1749
      %v1808 = vadd.f32 %v1616, %v1752
      %v1809 = vadd.f32 %v1617, %v1755
      %v1810 = vadd.f32 %v1618, %v1758
      %v1811 = vadd.f32 %v1619, %v1761
      %v1812 = vadd.f32 %v1620, %v1764
      %v1813 = vadd.f32 %v1621, %v1767
      %v1814 = vadd.f32 %v1622, %v1770
      %v1815 = vadd.f32 %v1623, %v1773
      %v1816 = vadd.f32 %v1624, %v1776
      %v1817 = vadd.f32 %v1625, %v1779
      %v1818 = vadd.f32 %v1626, %v1782
      %v1819 = vadd.f32 %v1627, %v1785
      %v1820 = vadd.f32 %v1628, %v1788
      %vm1821 = vcmask 7168
      %1822 = vst.msk [vmem:[#allocation3] sm:$0xff] %vm1821, %v1789
      %1823 = vst.msk [vmem:[#allocation3 + $0x8] sm:$0xff] %vm1821, %v1790
      %1824 = vst.msk [vmem:[#allocation3 + $0x10] sm:$0xff] %vm1821, %v1791
      %1825 = vst.msk [vmem:[#allocation3 + $0x18] sm:$0xff] %vm1821, %v1792
      %1826 = vst.msk [vmem:[#allocation3 + $0x20] sm:$0xff] %vm1821, %v1793
      %1827 = vst.msk [vmem:[#allocation3 + $0x28] sm:$0xff] %vm1821, %v1794
      %1828 = vst.msk [vmem:[#allocation3 + $0x30] sm:$0xff] %vm1821, %v1795
      %1829 = vst.msk [vmem:[#allocation3 + $0x38] sm:$0xff] %vm1821, %v1796
      %1830 = vst.msk [vmem:[#allocation3 + $0x40] sm:$0xff] %vm1821, %v1797
      %1831 = vst.msk [vmem:[#allocation3 + $0x48] sm:$0xff] %vm1821, %v1798
      %1832 = vst.msk [vmem:[#allocation3 + $0x50] sm:$0xff] %vm1821, %v1799
      %1833 = vst.msk [vmem:[#allocation3 + $0x58] sm:$0xff] %vm1821, %v1800
      %1834 = vst.msk [vmem:[#allocation3 + $0x60] sm:$0xff] %vm1821, %v1801
      %1835 = vst.msk [vmem:[#allocation3 + $0x68] sm:$0xff] %vm1821, %v1802
      %1836 = vst.msk [vmem:[#allocation3 + $0x70] sm:$0xff] %vm1821, %v1803
      %1837 = vst.msk [vmem:[#allocation3 + $0x78] sm:$0xff] %vm1821, %v1804
      %1838 = vst.msk [vmem:[#allocation3 + $0x80] sm:$0xff] %vm1821, %v1805
      %1839 = vst.msk [vmem:[#allocation3 + $0x88] sm:$0xff] %vm1821, %v1806
      %1840 = vst.msk [vmem:[#allocation3 + $0x90] sm:$0xff] %vm1821, %v1807
      %1841 = vst.msk [vmem:[#allocation3 + $0x98] sm:$0xff] %vm1821, %v1808
      %1842 = vst.msk [vmem:[#allocation3 + $0xa0] sm:$0xff] %vm1821, %v1809
      %1843 = vst.msk [vmem:[#allocation3 + $0xa8] sm:$0xff] %vm1821, %v1810
      %1844 = vst.msk [vmem:[#allocation3 + $0xb0] sm:$0xff] %vm1821, %v1811
      %1845 = vst.msk [vmem:[#allocation3 + $0xb8] sm:$0xff] %vm1821, %v1812
      %1846 = vst.msk [vmem:[#allocation3 + $0xc0] sm:$0xff] %vm1821, %v1813
      %1847 = vst.msk [vmem:[#allocation3 + $0xc8] sm:$0xff] %vm1821, %v1814
      %1848 = vst.msk [vmem:[#allocation3 + $0xd0] sm:$0xff] %vm1821, %v1815
      %1849 = vst.msk [vmem:[#allocation3 + $0xd8] sm:$0xff] %vm1821, %v1816
      %1850 = vst.msk [vmem:[#allocation3 + $0xe0] sm:$0xff] %vm1821, %v1817
      %1851 = vst.msk [vmem:[#allocation3 + $0xe8] sm:$0xff] %vm1821, %v1818
      %1852 = vst.msk [vmem:[#allocation3 + $0xf0] sm:$0xff] %vm1821, %v1819
      %1853 = vst.msk [vmem:[#allocation3 + $0xf8] sm:$0xff] %vm1821, %v1820
      %v1854 = vld [vmem:[#allocation4] sm:$0xff]
      %v1855 = vld [vmem:[#allocation4 + $0x8] sm:$0xff]
      %v1856 = vld [vmem:[#allocation4 + $0x10] sm:$0xff]
      %v1857 = vld [vmem:[#allocation4 + $0x18] sm:$0xff]
      %v1858 = vld [vmem:[#allocation4 + $0x20] sm:$0xff]
      %v1859 = vld [vmem:[#allocation4 + $0x28] sm:$0xff]
      %v1860 = vld [vmem:[#allocation4 + $0x30] sm:$0xff]
      %v1861 = vld [vmem:[#allocation4 + $0x38] sm:$0xff]
      %v1862 = vld [vmem:[#allocation4 + $0x40] sm:$0xff]
      %v1863 = vld [vmem:[#allocation4 + $0x48] sm:$0xff]
      %v1864 = vld [vmem:[#allocation4 + $0x50] sm:$0xff]
      %v1865 = vld [vmem:[#allocation4 + $0x58] sm:$0xff]
      %v1866 = vld [vmem:[#allocation4 + $0x60] sm:$0xff]
      %v1867 = vld [vmem:[#allocation4 + $0x68] sm:$0xff]
      %v1868 = vld [vmem:[#allocation4 + $0x70] sm:$0xff]
      %v1869 = vld [vmem:[#allocation4 + $0x78] sm:$0xff]
      %v1870 = vld [vmem:[#allocation4 + $0x80] sm:$0xff]
      %v1871 = vld [vmem:[#allocation4 + $0x88] sm:$0xff]
      %v1872 = vld [vmem:[#allocation4 + $0x90] sm:$0xff]
      %v1873 = vld [vmem:[#allocation4 + $0x98] sm:$0xff]
      %v1874 = vld [vmem:[#allocation4 + $0xa0] sm:$0xff]
      %v1875 = vld [vmem:[#allocation4 + $0xa8] sm:$0xff]
      %v1876 = vld [vmem:[#allocation4 + $0xb0] sm:$0xff]
      %v1877 = vld [vmem:[#allocation4 + $0xb8] sm:$0xff]
      %v1878 = vld [vmem:[#allocation4 + $0xc0] sm:$0xff]
      %v1879 = vld [vmem:[#allocation4 + $0xc8] sm:$0xff]
      %v1880 = vld [vmem:[#allocation4 + $0xd0] sm:$0xff]
      %v1881 = vld [vmem:[#allocation4 + $0xd8] sm:$0xff]
      %v1882 = vld [vmem:[#allocation4 + $0xe0] sm:$0xff]
      %v1883 = vld [vmem:[#allocation4 + $0xe8] sm:$0xff]
      %v1884 = vld [vmem:[#allocation4 + $0xf0] sm:$0xff]
      %v1885 = vld [vmem:[#allocation4 + $0xf8] sm:$0xff]
      %1887 = vset.pattern.permute.xlu0 0
      %1888 = vperm.xlu0 %1887, %v1022
      %v1889 = vpop.permute.xlu0 %1888
      %1892 = vset.pattern.permute.xlu0 0
      %1893 = vperm.xlu0 %1892, %v1024
      %v1894 = vpop.permute.xlu0 %1893
      %1897 = vset.pattern.permute.xlu0 0
      %1898 = vperm.xlu0 %1897, %v1026
      %v1899 = vpop.permute.xlu0 %1898
      %1902 = vset.pattern.permute.xlu0 0
      %1903 = vperm.xlu0 %1902, %v1028
      %v1904 = vpop.permute.xlu0 %1903
      %1907 = vset.pattern.permute.xlu0 0
      %1908 = vperm.xlu0 %1907, %v1030
      %v1909 = vpop.permute.xlu0 %1908
      %1912 = vset.pattern.permute.xlu0 0
      %1913 = vperm.xlu0 %1912, %v1032
      %v1914 = vpop.permute.xlu0 %1913
      %1917 = vset.pattern.permute.xlu0 0
      %1918 = vperm.xlu0 %1917, %v1034
      %v1919 = vpop.permute.xlu0 %1918
      %1922 = vset.pattern.permute.xlu0 0
      %1923 = vperm.xlu0 %1922, %v1036
      %v1924 = vpop.permute.xlu0 %1923
      %1927 = vset.pattern.permute.xlu0 0
      %1928 = vperm.xlu0 %1927, %v1038
      %v1929 = vpop.permute.xlu0 %1928
      %1932 = vset.pattern.permute.xlu0 0
      %1933 = vperm.xlu0 %1932, %v1040
      %v1934 = vpop.permute.xlu0 %1933
      %1937 = vset.pattern.permute.xlu0 0
      %1938 = vperm.xlu0 %1937, %v1042
      %v1939 = vpop.permute.xlu0 %1938
      %1942 = vset.pattern.permute.xlu0 0
      %1943 = vperm.xlu0 %1942, %v1044
      %v1944 = vpop.permute.xlu0 %1943
      %1947 = vset.pattern.permute.xlu0 0
      %1948 = vperm.xlu0 %1947, %v1046
      %v1949 = vpop.permute.xlu0 %1948
      %1952 = vset.pattern.permute.xlu0 0
      %1953 = vperm.xlu0 %1952, %v1048
      %v1954 = vpop.permute.xlu0 %1953
      %1957 = vset.pattern.permute.xlu0 0
      %1958 = vperm.xlu0 %1957, %v1050
      %v1959 = vpop.permute.xlu0 %1958
      %1962 = vset.pattern.permute.xlu0 0
      %1963 = vperm.xlu0 %1962, %v1052
      %v1964 = vpop.permute.xlu0 %1963
      %1967 = vset.pattern.permute.xlu0 0
      %1968 = vperm.xlu0 %1967, %v1054
      %v1969 = vpop.permute.xlu0 %1968
      %1972 = vset.pattern.permute.xlu0 0
      %1973 = vperm.xlu0 %1972, %v1056
      %v1974 = vpop.permute.xlu0 %1973
      %1977 = vset.pattern.permute.xlu0 0
      %1978 = vperm.xlu0 %1977, %v1058
      %v1979 = vpop.permute.xlu0 %1978
      %1982 = vset.pattern.permute.xlu0 0
      %1983 = vperm.xlu0 %1982, %v1060
      %v1984 = vpop.permute.xlu0 %1983
      %1987 = vset.pattern.permute.xlu0 0
      %1988 = vperm.xlu0 %1987, %v1062
      %v1989 = vpop.permute.xlu0 %1988
      %1992 = vset.pattern.permute.xlu0 0
      %1993 = vperm.xlu0 %1992, %v1064
      %v1994 = vpop.permute.xlu0 %1993
      %1997 = vset.pattern.permute.xlu0 0
      %1998 = vperm.xlu0 %1997, %v1066
      %v1999 = vpop.permute.xlu0 %1998
      %2002 = vset.pattern.permute.xlu0 0
      %2003 = vperm.xlu0 %2002, %v1068
      %v2004 = vpop.permute.xlu0 %2003
      %2007 = vset.pattern.permute.xlu0 0
      %2008 = vperm.xlu0 %2007, %v1070
      %v2009 = vpop.permute.xlu0 %2008
      %2012 = vset.pattern.permute.xlu0 0
      %2013 = vperm.xlu0 %2012, %v1072
      %v2014 = vpop.permute.xlu0 %2013
      %2017 = vset.pattern.permute.xlu0 0
      %2018 = vperm.xlu0 %2017, %v1074
      %v2019 = vpop.permute.xlu0 %2018
      %2022 = vset.pattern.permute.xlu0 0
      %2023 = vperm.xlu0 %2022, %v1076
      %v2024 = vpop.permute.xlu0 %2023
      %2027 = vset.pattern.permute.xlu0 0
      %2028 = vperm.xlu0 %2027, %v1078
      %v2029 = vpop.permute.xlu0 %2028
      %2032 = vset.pattern.permute.xlu0 0
      %2033 = vperm.xlu0 %2032, %v1080
      %v2034 = vpop.permute.xlu0 %2033
      %2037 = vset.pattern.permute.xlu0 0
      %2038 = vperm.xlu0 %2037, %v1082
      %v2039 = vpop.permute.xlu0 %2038
      %2042 = vset.pattern.permute.xlu0 0
      %2043 = vperm.xlu0 %2042, %v1084
      %v2044 = vpop.permute.xlu0 %2043
      %v2046 = vmul.f32 %v1889, %v1854
      %v2047 = vmul.f32 %v1894, %v1855
      %v2048 = vmul.f32 %v1899, %v1856
      %v2049 = vmul.f32 %v1904, %v1857
      %v2050 = vmul.f32 %v1909, %v1858
      %v2051 = vmul.f32 %v1914, %v1859
      %v2052 = vmul.f32 %v1919, %v1860
      %v2053 = vmul.f32 %v1924, %v1861
      %v2054 = vmul.f32 %v1929, %v1862
      %v2055 = vmul.f32 %v1934, %v1863
      %v2056 = vmul.f32 %v1939, %v1864
      %v2057 = vmul.f32 %v1944, %v1865
      %v2058 = vmul.f32 %v1949, %v1866
      %v2059 = vmul.f32 %v1954, %v1867
      %v2060 = vmul.f32 %v1959, %v1868
      %v2061 = vmul.f32 %v1964, %v1869
      %v2062 = vmul.f32 %v1969, %v1870
      %v2063 = vmul.f32 %v1974, %v1871
      %v2064 = vmul.f32 %v1979, %v1872
      %v2065 = vmul.f32 %v1984, %v1873
      %v2066 = vmul.f32 %v1989, %v1874
      %v2067 = vmul.f32 %v1994, %v1875
      %v2068 = vmul.f32 %v1999, %v1876
      %v2069 = vmul.f32 %v2004, %v1877
      %v2070 = vmul.f32 %v2009, %v1878
      %v2071 = vmul.f32 %v2014, %v1879
      %v2072 = vmul.f32 %v2019, %v1880
      %v2073 = vmul.f32 %v2024, %v1881
      %v2074 = vmul.f32 %v2029, %v1882
      %v2075 = vmul.f32 %v2034, %v1883
      %v2076 = vmul.f32 %v2039, %v1884
      %v2077 = vmul.f32 %v2044, %v1885
      %v2078 = vld [vmem:[#allocation7] sm:$0xf]
      %v2079 = vld [vmem:[#allocation7 + $0x4] sm:$0xf]
      %v2080 = vld [vmem:[#allocation7 + $0x8] sm:$0xf]
      %v2081 = vld [vmem:[#allocation7 + $0xc] sm:$0xf]
      %v2082 = vld [vmem:[#allocation7 + $0x10] sm:$0xf]
      %v2083 = vld [vmem:[#allocation7 + $0x14] sm:$0xf]
      %v2084 = vld [vmem:[#allocation7 + $0x18] sm:$0xf]
      %v2085 = vld [vmem:[#allocation7 + $0x1c] sm:$0xf]
      %v2086 = vld [vmem:[#allocation7 + $0x20] sm:$0xf]
      %v2087 = vld [vmem:[#allocation7 + $0x24] sm:$0xf]
      %v2088 = vld [vmem:[#allocation7 + $0x28] sm:$0xf]
      %v2089 = vld [vmem:[#allocation7 + $0x2c] sm:$0xf]
      %v2090 = vld [vmem:[#allocation7 + $0x30] sm:$0xf]
      %v2091 = vld [vmem:[#allocation7 + $0x34] sm:$0xf]
      %v2092 = vld [vmem:[#allocation7 + $0x38] sm:$0xf]
      %v2093 = vld [vmem:[#allocation7 + $0x3c] sm:$0xf]
      %v2094 = vld [vmem:[#allocation7 + $0x40] sm:$0xf]
      %v2095 = vld [vmem:[#allocation7 + $0x44] sm:$0xf]
      %v2096 = vld [vmem:[#allocation7 + $0x48] sm:$0xf]
      %v2097 = vld [vmem:[#allocation7 + $0x4c] sm:$0xf]
      %v2098 = vld [vmem:[#allocation7 + $0x50] sm:$0xf]
      %v2099 = vld [vmem:[#allocation7 + $0x54] sm:$0xf]
      %v2100 = vld [vmem:[#allocation7 + $0x58] sm:$0xf]
      %v2101 = vld [vmem:[#allocation7 + $0x5c] sm:$0xf]
      %v2102 = vld [vmem:[#allocation7 + $0x60] sm:$0xf]
      %v2103 = vld [vmem:[#allocation7 + $0x64] sm:$0xf]
      %v2104 = vld [vmem:[#allocation7 + $0x68] sm:$0xf]
      %v2105 = vld [vmem:[#allocation7 + $0x6c] sm:$0xf]
      %v2106 = vld [vmem:[#allocation7 + $0x70] sm:$0xf]
      %v2107 = vld [vmem:[#allocation7 + $0x74] sm:$0xf]
      %v2108 = vld [vmem:[#allocation7 + $0x78] sm:$0xf]
      %v2109 = vld [vmem:[#allocation7 + $0x7c] sm:$0xf]
      %v2142 = vunpack.c.l.b16 %v2078
      %v2143 = vunpack.c.l.b16 %v2079
      %v2144 = vunpack.c.l.b16 %v2080
      %v2145 = vunpack.c.l.b16 %v2081
      %v2146 = vunpack.c.l.b16 %v2082
      %v2147 = vunpack.c.l.b16 %v2083
      %v2148 = vunpack.c.l.b16 %v2084
      %v2149 = vunpack.c.l.b16 %v2085
      %v2150 = vunpack.c.l.b16 %v2086
      %v2151 = vunpack.c.l.b16 %v2087
      %v2152 = vunpack.c.l.b16 %v2088
      %v2153 = vunpack.c.l.b16 %v2089
      %v2154 = vunpack.c.l.b16 %v2090
      %v2155 = vunpack.c.l.b16 %v2091
      %v2156 = vunpack.c.l.b16 %v2092
      %v2157 = vunpack.c.l.b16 %v2093
      %v2158 = vunpack.c.l.b16 %v2094
      %v2159 = vunpack.c.l.b16 %v2095
      %v2160 = vunpack.c.l.b16 %v2096
      %v2161 = vunpack.c.l.b16 %v2097
      %v2162 = vunpack.c.l.b16 %v2098
      %v2163 = vunpack.c.l.b16 %v2099
      %v2164 = vunpack.c.l.b16 %v2100
      %v2165 = vunpack.c.l.b16 %v2101
      %v2166 = vunpack.c.l.b16 %v2102
      %v2167 = vunpack.c.l.b16 %v2103
      %v2168 = vunpack.c.l.b16 %v2104
      %v2169 = vunpack.c.l.b16 %v2105
      %v2170 = vunpack.c.l.b16 %v2106
      %v2171 = vunpack.c.l.b16 %v2107
      %v2172 = vunpack.c.l.b16 %v2108
      %v2173 = vunpack.c.l.b16 %v2109
      %v2174 = vpack.c.b16 %v2143, %v2142
      %v2175 = vpack.c.b16 %v2145, %v2144
      %v2176 = vpack.c.b16 %v2147, %v2146
      %v2177 = vpack.c.b16 %v2149, %v2148
      %v2178 = vpack.c.b16 %v2151, %v2150
      %v2179 = vpack.c.b16 %v2153, %v2152
      %v2180 = vpack.c.b16 %v2155, %v2154
      %v2181 = vpack.c.b16 %v2157, %v2156
      %v2182 = vpack.c.b16 %v2159, %v2158
      %v2183 = vpack.c.b16 %v2161, %v2160
      %v2184 = vpack.c.b16 %v2163, %v2162
      %v2185 = vpack.c.b16 %v2165, %v2164
      %v2186 = vpack.c.b16 %v2167, %v2166
      %v2187 = vpack.c.b16 %v2169, %v2168
      %v2188 = vpack.c.b16 %v2171, %v2170
      %v2189 = vpack.c.b16 %v2173, %v2172
      %2206 = vmatpush.bf16.msra.mxu0 %v2181
      %2207 = vmatpush.bf16.msra.mxu0 %v2180
      %2208 = vmatpush.bf16.msra.mxu0 %v2179
      %2209 = vmatpush.bf16.msra.mxu0 %v2178
      %2210 = vmatpush.bf16.msra.mxu0 %v2177
      %2211 = vmatpush.bf16.msra.mxu0 %v2176
      %2212 = vmatpush.bf16.msra.mxu0 %v2175
      %2213 = vmatpush.bf16.msra.mxu0 %v2174
      %2214 = vmatmul.bf16.gmra.mxu0 %v1533
      %v2215 = vpop.f32.mrf.mxu0
      %v2216 = vadd.f32 0.0, %v2215
      %v2217 = vpop.f32.mrf.mxu0
      %v2218 = vadd.f32 0.0, %v2217
      %2219 = vmatmul.bf16.gmra.mxu0 %v1535
      %v2220 = vpop.f32.mrf.mxu0
      %v2221 = vadd.f32 0.0, %v2220
      %v2222 = vpop.f32.mrf.mxu0
      %v2223 = vadd.f32 0.0, %v2222
      %2224 = vmatmul.bf16.gmra.mxu0 %v1537
      %v2225 = vpop.f32.mrf.mxu0
      %v2226 = vadd.f32 0.0, %v2225
      %v2227 = vpop.f32.mrf.mxu0
      %v2228 = vadd.f32 0.0, %v2227
      %2229 = vmatmul.bf16.gmra.mxu0 %v1539
      %v2230 = vpop.f32.mrf.mxu0
      %v2231 = vadd.f32 0.0, %v2230
      %v2232 = vpop.f32.mrf.mxu0
      %v2233 = vadd.f32 0.0, %v2232
      %2234 = vmatmul.bf16.gmra.mxu0 %v1541
      %v2235 = vpop.f32.mrf.mxu0
      %v2236 = vadd.f32 0.0, %v2235
      %v2237 = vpop.f32.mrf.mxu0
      %v2238 = vadd.f32 0.0, %v2237
      %2239 = vmatmul.bf16.gmra.mxu0 %v1543
      %v2240 = vpop.f32.mrf.mxu0
      %v2241 = vadd.f32 0.0, %v2240
      %v2242 = vpop.f32.mrf.mxu0
      %v2243 = vadd.f32 0.0, %v2242
      %2244 = vmatmul.bf16.gmra.mxu0 %v1545
      %v2245 = vpop.f32.mrf.mxu0
      %v2246 = vadd.f32 0.0, %v2245
      %v2247 = vpop.f32.mrf.mxu0
      %v2248 = vadd.f32 0.0, %v2247
      %2249 = vmatmul.bf16.gmra.mxu0 %v1547
      %v2250 = vpop.f32.mrf.mxu0
      %v2251 = vadd.f32 0.0, %v2250
      %v2252 = vpop.f32.mrf.mxu0
      %v2253 = vadd.f32 0.0, %v2252
      %2254 = vmatmul.bf16.gmra.mxu0 %v1549
      %v2255 = vpop.f32.mrf.mxu0
      %v2256 = vadd.f32 0.0, %v2255
      %v2257 = vpop.f32.mrf.mxu0
      %v2258 = vadd.f32 0.0, %v2257
      %2259 = vmatmul.bf16.gmra.mxu0 %v1551
      %v2260 = vpop.f32.mrf.mxu0
      %v2261 = vadd.f32 0.0, %v2260
      %v2262 = vpop.f32.mrf.mxu0
      %v2263 = vadd.f32 0.0, %v2262
      %2264 = vmatmul.bf16.gmra.mxu0 %v1553
      %v2265 = vpop.f32.mrf.mxu0
      %v2266 = vadd.f32 0.0, %v2265
      %v2267 = vpop.f32.mrf.mxu0
      %v2268 = vadd.f32 0.0, %v2267
      %2269 = vmatmul.bf16.gmra.mxu0 %v1555
      %v2270 = vpop.f32.mrf.mxu0
      %v2271 = vadd.f32 0.0, %v2270
      %v2272 = vpop.f32.mrf.mxu0
      %v2273 = vadd.f32 0.0, %v2272
      %2274 = vmatmul.bf16.gmra.mxu0 %v1557
      %v2275 = vpop.f32.mrf.mxu0
      %v2276 = vadd.f32 0.0, %v2275
      %v2277 = vpop.f32.mrf.mxu0
      %v2278 = vadd.f32 0.0, %v2277
      %2279 = vmatmul.bf16.gmra.mxu0 %v1559
      %v2280 = vpop.f32.mrf.mxu0
      %v2281 = vadd.f32 0.0, %v2280
      %v2282 = vpop.f32.mrf.mxu0
      %v2283 = vadd.f32 0.0, %v2282
      %2284 = vmatmul.bf16.gmra.mxu0 %v1561
      %v2285 = vpop.f32.mrf.mxu0
      %v2286 = vadd.f32 0.0, %v2285
      %v2287 = vpop.f32.mrf.mxu0
      %v2288 = vadd.f32 0.0, %v2287
      %2289 = vmatmul.bf16.gmra.mxu0 %v1563
      %v2290 = vpop.f32.mrf.mxu0
      %v2291 = vadd.f32 0.0, %v2290
      %v2292 = vpop.f32.mrf.mxu0
      %v2293 = vadd.f32 0.0, %v2292
      %2294 = vdwg.mxu0
      %2295 = vmatpush.bf16.msra.mxu0 %v2189
      %2296 = vmatpush.bf16.msra.mxu0 %v2188
      %2297 = vmatpush.bf16.msra.mxu0 %v2187
      %2298 = vmatpush.bf16.msra.mxu0 %v2186
      %2299 = vmatpush.bf16.msra.mxu0 %v2185
      %2300 = vmatpush.bf16.msra.mxu0 %v2184
      %2301 = vmatpush.bf16.msra.mxu0 %v2183
      %2302 = vmatpush.bf16.msra.mxu0 %v2182
      %2303 = vmatmul.bf16.gmra.mxu0 %v1534
      %v2304 = vpop.f32.mrf.mxu0
      %v2305 = vadd.f32 %v2216, %v2304
      %v2306 = vpop.f32.mrf.mxu0
      %v2307 = vadd.f32 %v2218, %v2306
      %2308 = vmatmul.bf16.gmra.mxu0 %v1536
      %v2309 = vpop.f32.mrf.mxu0
      %v2310 = vadd.f32 %v2221, %v2309
      %v2311 = vpop.f32.mrf.mxu0
      %v2312 = vadd.f32 %v2223, %v2311
      %2313 = vmatmul.bf16.gmra.mxu0 %v1538
      %v2314 = vpop.f32.mrf.mxu0
      %v2315 = vadd.f32 %v2226, %v2314
      %v2316 = vpop.f32.mrf.mxu0
      %v2317 = vadd.f32 %v2228, %v2316
      %2318 = vmatmul.bf16.gmra.mxu0 %v1540
      %v2319 = vpop.f32.mrf.mxu0
      %v2320 = vadd.f32 %v2231, %v2319
      %v2321 = vpop.f32.mrf.mxu0
      %v2322 = vadd.f32 %v2233, %v2321
      %2323 = vmatmul.bf16.gmra.mxu0 %v1542
      %v2324 = vpop.f32.mrf.mxu0
      %v2325 = vadd.f32 %v2236, %v2324
      %v2326 = vpop.f32.mrf.mxu0
      %v2327 = vadd.f32 %v2238, %v2326
      %2328 = vmatmul.bf16.gmra.mxu0 %v1544
      %v2329 = vpop.f32.mrf.mxu0
      %v2330 = vadd.f32 %v2241, %v2329
      %v2331 = vpop.f32.mrf.mxu0
      %v2332 = vadd.f32 %v2243, %v2331
      %2333 = vmatmul.bf16.gmra.mxu0 %v1546
      %v2334 = vpop.f32.mrf.mxu0
      %v2335 = vadd.f32 %v2246, %v2334
      %v2336 = vpop.f32.mrf.mxu0
      %v2337 = vadd.f32 %v2248, %v2336
      %2338 = vmatmul.bf16.gmra.mxu0 %v1548
      %v2339 = vpop.f32.mrf.mxu0
      %v2340 = vadd.f32 %v2251, %v2339
      %v2341 = vpop.f32.mrf.mxu0
      %v2342 = vadd.f32 %v2253, %v2341
      %2343 = vmatmul.bf16.gmra.mxu0 %v1550
      %v2344 = vpop.f32.mrf.mxu0
      %v2345 = vadd.f32 %v2256, %v2344
      %v2346 = vpop.f32.mrf.mxu0
      %v2347 = vadd.f32 %v2258, %v2346
      %2348 = vmatmul.bf16.gmra.mxu0 %v1552
      %v2349 = vpop.f32.mrf.mxu0
      %v2350 = vadd.f32 %v2261, %v2349
      %v2351 = vpop.f32.mrf.mxu0
      %v2352 = vadd.f32 %v2263, %v2351
      %2353 = vmatmul.bf16.gmra.mxu0 %v1554
      %v2354 = vpop.f32.mrf.mxu0
      %v2355 = vadd.f32 %v2266, %v2354
      %v2356 = vpop.f32.mrf.mxu0
      %v2357 = vadd.f32 %v2268, %v2356
      %2358 = vmatmul.bf16.gmra.mxu0 %v1556
      %v2359 = vpop.f32.mrf.mxu0
      %v2360 = vadd.f32 %v2271, %v2359
      %v2361 = vpop.f32.mrf.mxu0
      %v2362 = vadd.f32 %v2273, %v2361
      %2363 = vmatmul.bf16.gmra.mxu0 %v1558
      %v2364 = vpop.f32.mrf.mxu0
      %v2365 = vadd.f32 %v2276, %v2364
      %v2366 = vpop.f32.mrf.mxu0
      %v2367 = vadd.f32 %v2278, %v2366
      %2368 = vmatmul.bf16.gmra.mxu0 %v1560
      %v2369 = vpop.f32.mrf.mxu0
      %v2370 = vadd.f32 %v2281, %v2369
      %v2371 = vpop.f32.mrf.mxu0
      %v2372 = vadd.f32 %v2283, %v2371
      %2373 = vmatmul.bf16.gmra.mxu0 %v1562
      %v2374 = vpop.f32.mrf.mxu0
      %v2375 = vadd.f32 %v2286, %v2374
      %v2376 = vpop.f32.mrf.mxu0
      %v2377 = vadd.f32 %v2288, %v2376
      %2378 = vmatmul.bf16.gmra.mxu0 %v1564
      %v2379 = vpop.f32.mrf.mxu0
      %v2380 = vadd.f32 %v2291, %v2379
      %v2381 = vpop.f32.mrf.mxu0
      %v2382 = vadd.f32 %v2293, %v2381
      %2383 = vdwg.mxu0
      %v2384 = vadd.f32 %v2046, %v2305
      %v2385 = vadd.f32 %v2047, %v2307
      %v2386 = vadd.f32 %v2048, %v2310
      %v2387 = vadd.f32 %v2049, %v2312
      %v2388 = vadd.f32 %v2050, %v2315
      %v2389 = vadd.f32 %v2051, %v2317
      %v2390 = vadd.f32 %v2052, %v2320
      %v2391 = vadd.f32 %v2053, %v2322
      %v2392 = vadd.f32 %v2054, %v2325
      %v2393 = vadd.f32 %v2055, %v2327
      %v2394 = vadd.f32 %v2056, %v2330
      %v2395 = vadd.f32 %v2057, %v2332
      %v2396 = vadd.f32 %v2058, %v2335
      %v2397 = vadd.f32 %v2059, %v2337
      %v2398 = vadd.f32 %v2060, %v2340
      %v2399 = vadd.f32 %v2061, %v2342
      %v2400 = vadd.f32 %v2062, %v2345
      %v2401 = vadd.f32 %v2063, %v2347
      %v2402 = vadd.f32 %v2064, %v2350
      %v2403 = vadd.f32 %v2065, %v2352
      %v2404 = vadd.f32 %v2066, %v2355
      %v2405 = vadd.f32 %v2067, %v2357
      %v2406 = vadd.f32 %v2068, %v2360
      %v2407 = vadd.f32 %v2069, %v2362
      %v2408 = vadd.f32 %v2070, %v2365
      %v2409 = vadd.f32 %v2071, %v2367
      %v2410 = vadd.f32 %v2072, %v2370
      %v2411 = vadd.f32 %v2073, %v2372
      %v2412 = vadd.f32 %v2074, %v2375
      %v2413 = vadd.f32 %v2075, %v2377
      %v2414 = vadd.f32 %v2076, %v2380
      %v2415 = vadd.f32 %v2077, %v2382
      %2416 = vst [vmem:[#allocation4] sm:$0xff] %v2384
      %2417 = vst [vmem:[#allocation4 + $0x8] sm:$0xff] %v2385
      %2418 = vst [vmem:[#allocation4 + $0x10] sm:$0xff] %v2386
      %2419 = vst [vmem:[#allocation4 + $0x18] sm:$0xff] %v2387
      %2420 = vst [vmem:[#allocation4 + $0x20] sm:$0xff] %v2388
      %2421 = vst [vmem:[#allocation4 + $0x28] sm:$0xff] %v2389
      %2422 = vst [vmem:[#allocation4 + $0x30] sm:$0xff] %v2390
      %2423 = vst [vmem:[#allocation4 + $0x38] sm:$0xff] %v2391
      %2424 = vst [vmem:[#allocation4 + $0x40] sm:$0xff] %v2392
      %2425 = vst [vmem:[#allocation4 + $0x48] sm:$0xff] %v2393
      %2426 = vst [vmem:[#allocation4 + $0x50] sm:$0xff] %v2394
      %2427 = vst [vmem:[#allocation4 + $0x58] sm:$0xff] %v2395
      %2428 = vst [vmem:[#allocation4 + $0x60] sm:$0xff] %v2396
      %2429 = vst [vmem:[#allocation4 + $0x68] sm:$0xff] %v2397
      %2430 = vst [vmem:[#allocation4 + $0x70] sm:$0xff] %v2398
      %2431 = vst [vmem:[#allocation4 + $0x78] sm:$0xff] %v2399
      %2432 = vst [vmem:[#allocation4 + $0x80] sm:$0xff] %v2400
      %2433 = vst [vmem:[#allocation4 + $0x88] sm:$0xff] %v2401
      %2434 = vst [vmem:[#allocation4 + $0x90] sm:$0xff] %v2402
      %2435 = vst [vmem:[#allocation4 + $0x98] sm:$0xff] %v2403
      %2436 = vst [vmem:[#allocation4 + $0xa0] sm:$0xff] %v2404
      %2437 = vst [vmem:[#allocation4 + $0xa8] sm:$0xff] %v2405
      %2438 = vst [vmem:[#allocation4 + $0xb0] sm:$0xff] %v2406
      %2439 = vst [vmem:[#allocation4 + $0xb8] sm:$0xff] %v2407
      %2440 = vst [vmem:[#allocation4 + $0xc0] sm:$0xff] %v2408
      %2441 = vst [vmem:[#allocation4 + $0xc8] sm:$0xff] %v2409
      %2442 = vst [vmem:[#allocation4 + $0xd0] sm:$0xff] %v2410
      %2443 = vst [vmem:[#allocation4 + $0xd8] sm:$0xff] %v2411
      %2444 = vst [vmem:[#allocation4 + $0xe0] sm:$0xff] %v2412
      %2445 = vst [vmem:[#allocation4 + $0xe8] sm:$0xff] %v2413
      %2446 = vst [vmem:[#allocation4 + $0xf0] sm:$0xff] %v2414
      %2447 = vst [vmem:[#allocation4 + $0xf8] sm:$0xff] %v2415
      %2448 = vst.msk [vmem:[#allocation2] sm:$0xff] %vm1821, %v957
      %2449 = vst.msk [vmem:[#allocation2 + $0x8] sm:$0xff] %vm1821, %v958
      %2450 = vst.msk [vmem:[#allocation2 + $0x10] sm:$0xff] %vm1821, %v959
      %2451 = vst.msk [vmem:[#allocation2 + $0x18] sm:$0xff] %vm1821, %v960
      %2452 = vst.msk [vmem:[#allocation2 + $0x20] sm:$0xff] %vm1821, %v961
      %2453 = vst.msk [vmem:[#allocation2 + $0x28] sm:$0xff] %vm1821, %v962
      %2454 = vst.msk [vmem:[#allocation2 + $0x30] sm:$0xff] %vm1821, %v963
      %2455 = vst.msk [vmem:[#allocation2 + $0x38] sm:$0xff] %vm1821, %v964
      %2456 = vst.msk [vmem:[#allocation2 + $0x40] sm:$0xff] %vm1821, %v965
      %2457 = vst.msk [vmem:[#allocation2 + $0x48] sm:$0xff] %vm1821, %v966
      %2458 = vst.msk [vmem:[#allocation2 + $0x50] sm:$0xff] %vm1821, %v967
      %2459 = vst.msk [vmem:[#allocation2 + $0x58] sm:$0xff] %vm1821, %v968
      %2460 = vst.msk [vmem:[#allocation2 + $0x60] sm:$0xff] %vm1821, %v969
      %2461 = vst.msk [vmem:[#allocation2 + $0x68] sm:$0xff] %vm1821, %v970
      %2462 = vst.msk [vmem:[#allocation2 + $0x70] sm:$0xff] %vm1821, %v971
      %2463 = vst.msk [vmem:[#allocation2 + $0x78] sm:$0xff] %vm1821, %v972
      %2464 = vst.msk [vmem:[#allocation2 + $0x80] sm:$0xff] %vm1821, %v973
      %2465 = vst.msk [vmem:[#allocation2 + $0x88] sm:$0xff] %vm1821, %v974
      %2466 = vst.msk [vmem:[#allocation2 + $0x90] sm:$0xff] %vm1821, %v975
      %2467 = vst.msk [vmem:[#allocation2 + $0x98] sm:$0xff] %vm1821, %v976
      %2468 = vst.msk [vmem:[#allocation2 + $0xa0] sm:$0xff] %vm1821, %v977
      %2469 = vst.msk [vmem:[#allocation2 + $0xa8] sm:$0xff] %vm1821, %v978
      %2470 = vst.msk [vmem:[#allocation2 + $0xb0] sm:$0xff] %vm1821, %v979
      %2471 = vst.msk [vmem:[#allocation2 + $0xb8] sm:$0xff] %vm1821, %v980
      %2472 = vst.msk [vmem:[#allocation2 + $0xc0] sm:$0xff] %vm1821, %v981
      %2473 = vst.msk [vmem:[#allocation2 + $0xc8] sm:$0xff] %vm1821, %v982
      %2474 = vst.msk [vmem:[#allocation2 + $0xd0] sm:$0xff] %vm1821, %v983
      %2475 = vst.msk [vmem:[#allocation2 + $0xd8] sm:$0xff] %vm1821, %v984
      %2476 = vst.msk [vmem:[#allocation2 + $0xe0] sm:$0xff] %vm1821, %v985
      %2477 = vst.msk [vmem:[#allocation2 + $0xe8] sm:$0xff] %vm1821, %v986
      %2478 = vst.msk [vmem:[#allocation2 + $0xf0] sm:$0xff] %vm1821, %v987
      %2479 = vst.msk [vmem:[#allocation2 + $0xf8] sm:$0xff] %vm1821, %v988
    $region41: #{tpu_custom_call.1} parent=1 // pred_fallthru
      _
    // Predicated region
    $region42: #{tpu_custom_call.1} parent=1 // pred_check
      %p2480 = pneg %p58
    $region43: #{tpu_custom_call.1} parent=1 // pred_check_branch
      %2482 = sbr.rel (%p2480) target = $region45
    $region44: #{tpu_custom_call.1} parent=1 // pred_region
      %v2483 = vld [vmem:[#allocation4] sm:$0xff]
      %v2484 = vld [vmem:[#allocation4 + $0x8] sm:$0xff]
      %v2485 = vld [vmem:[#allocation4 + $0x10] sm:$0xff]
      %v2486 = vld [vmem:[#allocation4 + $0x18] sm:$0xff]
      %v2487 = vld [vmem:[#allocation4 + $0x20] sm:$0xff]
      %v2488 = vld [vmem:[#allocation4 + $0x28] sm:$0xff]
      %v2489 = vld [vmem:[#allocation4 + $0x30] sm:$0xff]
      %v2490 = vld [vmem:[#allocation4 + $0x38] sm:$0xff]
      %v2491 = vld [vmem:[#allocation4 + $0x40] sm:$0xff]
      %v2492 = vld [vmem:[#allocation4 + $0x48] sm:$0xff]
      %v2493 = vld [vmem:[#allocation4 + $0x50] sm:$0xff]
      %v2494 = vld [vmem:[#allocation4 + $0x58] sm:$0xff]
      %v2495 = vld [vmem:[#allocation4 + $0x60] sm:$0xff]
      %v2496 = vld [vmem:[#allocation4 + $0x68] sm:$0xff]
      %v2497 = vld [vmem:[#allocation4 + $0x70] sm:$0xff]
      %v2498 = vld [vmem:[#allocation4 + $0x78] sm:$0xff]
      %v2499 = vld [vmem:[#allocation4 + $0x80] sm:$0xff]
      %v2500 = vld [vmem:[#allocation4 + $0x88] sm:$0xff]
      %v2501 = vld [vmem:[#allocation4 + $0x90] sm:$0xff]
      %v2502 = vld [vmem:[#allocation4 + $0x98] sm:$0xff]
      %v2503 = vld [vmem:[#allocation4 + $0xa0] sm:$0xff]
      %v2504 = vld [vmem:[#allocation4 + $0xa8] sm:$0xff]
      %v2505 = vld [vmem:[#allocation4 + $0xb0] sm:$0xff]
      %v2506 = vld [vmem:[#allocation4 + $0xb8] sm:$0xff]
      %v2507 = vld [vmem:[#allocation4 + $0xc0] sm:$0xff]
      %v2508 = vld [vmem:[#allocation4 + $0xc8] sm:$0xff]
      %v2509 = vld [vmem:[#allocation4 + $0xd0] sm:$0xff]
      %v2510 = vld [vmem:[#allocation4 + $0xd8] sm:$0xff]
      %v2511 = vld [vmem:[#allocation4 + $0xe0] sm:$0xff]
      %v2512 = vld [vmem:[#allocation4 + $0xe8] sm:$0xff]
      %v2513 = vld [vmem:[#allocation4 + $0xf0] sm:$0xff]
      %v2514 = vld [vmem:[#allocation4 + $0xf8] sm:$0xff]
      %v2515 = vld [vmem:[#allocation3] sm:$0xff]
      %v2516 = vld [vmem:[#allocation3 + $0x8] sm:$0xff]
      %v2517 = vld [vmem:[#allocation3 + $0x10] sm:$0xff]
      %v2518 = vld [vmem:[#allocation3 + $0x18] sm:$0xff]
      %v2519 = vld [vmem:[#allocation3 + $0x20] sm:$0xff]
      %v2520 = vld [vmem:[#allocation3 + $0x28] sm:$0xff]
      %v2521 = vld [vmem:[#allocation3 + $0x30] sm:$0xff]
      %v2522 = vld [vmem:[#allocation3 + $0x38] sm:$0xff]
      %v2523 = vld [vmem:[#allocation3 + $0x40] sm:$0xff]
      %v2524 = vld [vmem:[#allocation3 + $0x48] sm:$0xff]
      %v2525 = vld [vmem:[#allocation3 + $0x50] sm:$0xff]
      %v2526 = vld [vmem:[#allocation3 + $0x58] sm:$0xff]
      %v2527 = vld [vmem:[#allocation3 + $0x60] sm:$0xff]
      %v2528 = vld [vmem:[#allocation3 + $0x68] sm:$0xff]
      %v2529 = vld [vmem:[#allocation3 + $0x70] sm:$0xff]
      %v2530 = vld [vmem:[#allocation3 + $0x78] sm:$0xff]
      %v2531 = vld [vmem:[#allocation3 + $0x80] sm:$0xff]
      %v2532 = vld [vmem:[#allocation3 + $0x88] sm:$0xff]
      %v2533 = vld [vmem:[#allocation3 + $0x90] sm:$0xff]
      %v2534 = vld [vmem:[#allocation3 + $0x98] sm:$0xff]
      %v2535 = vld [vmem:[#allocation3 + $0xa0] sm:$0xff]
      %v2536 = vld [vmem:[#allocation3 + $0xa8] sm:$0xff]
      %v2537 = vld [vmem:[#allocation3 + $0xb0] sm:$0xff]
      %v2538 = vld [vmem:[#allocation3 + $0xb8] sm:$0xff]
      %v2539 = vld [vmem:[#allocation3 + $0xc0] sm:$0xff]
      %v2540 = vld [vmem:[#allocation3 + $0xc8] sm:$0xff]
      %v2541 = vld [vmem:[#allocation3 + $0xd0] sm:$0xff]
      %v2542 = vld [vmem:[#allocation3 + $0xd8] sm:$0xff]
      %v2543 = vld [vmem:[#allocation3 + $0xe0] sm:$0xff]
      %v2544 = vld [vmem:[#allocation3 + $0xe8] sm:$0xff]
      %v2545 = vld [vmem:[#allocation3 + $0xf0] sm:$0xff]
      %v2546 = vld [vmem:[#allocation3 + $0xf8] sm:$0xff]
      %v2547 = vrcp.pop %v2515
      %v2548 = vrcp.pop %v2516
      %v2549 = vrcp.pop %v2517
      %v2550 = vrcp.pop %v2518
      %v2551 = vrcp.pop %v2519
      %v2552 = vrcp.pop %v2520
      %v2553 = vrcp.pop %v2521
      %v2554 = vrcp.pop %v2522
      %v2555 = vrcp.pop %v2523
      %v2556 = vrcp.pop %v2524
      %v2557 = vrcp.pop %v2525
      %v2558 = vrcp.pop %v2526
      %v2559 = vrcp.pop %v2527
      %v2560 = vrcp.pop %v2528
      %v2561 = vrcp.pop %v2529
      %v2562 = vrcp.pop %v2530
      %v2563 = vrcp.pop %v2531
      %v2564 = vrcp.pop %v2532
      %v2565 = vrcp.pop %v2533
      %v2566 = vrcp.pop %v2534
      %v2567 = vrcp.pop %v2535
      %v2568 = vrcp.pop %v2536
      %v2569 = vrcp.pop %v2537
      %v2570 = vrcp.pop %v2538
      %v2571 = vrcp.pop %v2539
      %v2572 = vrcp.pop %v2540
      %v2573 = vrcp.pop %v2541
      %v2574 = vrcp.pop %v2542
      %v2575 = vrcp.pop %v2543
      %v2576 = vrcp.pop %v2544
      %v2577 = vrcp.pop %v2545
      %v2578 = vrcp.pop %v2546
      %2580 = vset.pattern.permute.xlu0 0
      %2581 = vperm.xlu0 %2580, %v2547
      %v2582 = vpop.permute.xlu0 %2581
      %2585 = vset.pattern.permute.xlu0 0
      %2586 = vperm.xlu0 %2585, %v2548
      %v2587 = vpop.permute.xlu0 %2586
      %2590 = vset.pattern.permute.xlu0 0
      %2591 = vperm.xlu0 %2590, %v2549
      %v2592 = vpop.permute.xlu0 %2591
      %2595 = vset.pattern.permute.xlu0 0
      %2596 = vperm.xlu0 %2595, %v2550
      %v2597 = vpop.permute.xlu0 %2596
      %2600 = vset.pattern.permute.xlu0 0
      %2601 = vperm.xlu0 %2600, %v2551
      %v2602 = vpop.permute.xlu0 %2601
      %2605 = vset.pattern.permute.xlu0 0
      %2606 = vperm.xlu0 %2605, %v2552
      %v2607 = vpop.permute.xlu0 %2606
      %2610 = vset.pattern.permute.xlu0 0
      %2611 = vperm.xlu0 %2610, %v2553
      %v2612 = vpop.permute.xlu0 %2611
      %2615 = vset.pattern.permute.xlu0 0
      %2616 = vperm.xlu0 %2615, %v2554
      %v2617 = vpop.permute.xlu0 %2616
      %2620 = vset.pattern.permute.xlu0 0
      %2621 = vperm.xlu0 %2620, %v2555
      %v2622 = vpop.permute.xlu0 %2621
      %2625 = vset.pattern.permute.xlu0 0
      %2626 = vperm.xlu0 %2625, %v2556
      %v2627 = vpop.permute.xlu0 %2626
      %2630 = vset.pattern.permute.xlu0 0
      %2631 = vperm.xlu0 %2630, %v2557
      %v2632 = vpop.permute.xlu0 %2631
      %2635 = vset.pattern.permute.xlu0 0
      %2636 = vperm.xlu0 %2635, %v2558
      %v2637 = vpop.permute.xlu0 %2636
      %2640 = vset.pattern.permute.xlu0 0
      %2641 = vperm.xlu0 %2640, %v2559
      %v2642 = vpop.permute.xlu0 %2641
      %2645 = vset.pattern.permute.xlu0 0
      %2646 = vperm.xlu0 %2645, %v2560
      %v2647 = vpop.permute.xlu0 %2646
      %2650 = vset.pattern.permute.xlu0 0
      %2651 = vperm.xlu0 %2650, %v2561
      %v2652 = vpop.permute.xlu0 %2651
      %2655 = vset.pattern.permute.xlu0 0
      %2656 = vperm.xlu0 %2655, %v2562
      %v2657 = vpop.permute.xlu0 %2656
      %2660 = vset.pattern.permute.xlu0 0
      %2661 = vperm.xlu0 %2660, %v2563
      %v2662 = vpop.permute.xlu0 %2661
      %2665 = vset.pattern.permute.xlu0 0
      %2666 = vperm.xlu0 %2665, %v2564
      %v2667 = vpop.permute.xlu0 %2666
      %2670 = vset.pattern.permute.xlu0 0
      %2671 = vperm.xlu0 %2670, %v2565
      %v2672 = vpop.permute.xlu0 %2671
      %2675 = vset.pattern.permute.xlu0 0
      %2676 = vperm.xlu0 %2675, %v2566
      %v2677 = vpop.permute.xlu0 %2676
      %2680 = vset.pattern.permute.xlu0 0
      %2681 = vperm.xlu0 %2680, %v2567
      %v2682 = vpop.permute.xlu0 %2681
      %2685 = vset.pattern.permute.xlu0 0
      %2686 = vperm.xlu0 %2685, %v2568
      %v2687 = vpop.permute.xlu0 %2686
      %2690 = vset.pattern.permute.xlu0 0
      %2691 = vperm.xlu0 %2690, %v2569
      %v2692 = vpop.permute.xlu0 %2691
      %2695 = vset.pattern.permute.xlu0 0
      %2696 = vperm.xlu0 %2695, %v2570
      %v2697 = vpop.permute.xlu0 %2696
      %2700 = vset.pattern.permute.xlu0 0
      %2701 = vperm.xlu0 %2700, %v2571
      %v2702 = vpop.permute.xlu0 %2701
      %2705 = vset.pattern.permute.xlu0 0
      %2706 = vperm.xlu0 %2705, %v2572
      %v2707 = vpop.permute.xlu0 %2706
      %2710 = vset.pattern.permute.xlu0 0
      %2711 = vperm.xlu0 %2710, %v2573
      %v2712 = vpop.permute.xlu0 %2711
      %2715 = vset.pattern.permute.xlu0 0
      %2716 = vperm.xlu0 %2715, %v2574
      %v2717 = vpop.permute.xlu0 %2716
      %2720 = vset.pattern.permute.xlu0 0
      %2721 = vperm.xlu0 %2720, %v2575
      %v2722 = vpop.permute.xlu0 %2721
      %2725 = vset.pattern.permute.xlu0 0
      %2726 = vperm.xlu0 %2725, %v2576
      %v2727 = vpop.permute.xlu0 %2726
      %2730 = vset.pattern.permute.xlu0 0
      %2731 = vperm.xlu0 %2730, %v2577
      %v2732 = vpop.permute.xlu0 %2731
      %2735 = vset.pattern.permute.xlu0 0
      %2736 = vperm.xlu0 %2735, %v2578
      %v2737 = vpop.permute.xlu0 %2736
      %v2739 = vmul.f32 %v2483, %v2582
      %v2740 = vmul.f32 %v2484, %v2587
      %v2741 = vmul.f32 %v2485, %v2592
      %v2742 = vmul.f32 %v2486, %v2597
      %v2743 = vmul.f32 %v2487, %v2602
      %v2744 = vmul.f32 %v2488, %v2607
      %v2745 = vmul.f32 %v2489, %v2612
      %v2746 = vmul.f32 %v2490, %v2617
      %v2747 = vmul.f32 %v2491, %v2622
      %v2748 = vmul.f32 %v2492, %v2627
      %v2749 = vmul.f32 %v2493, %v2632
      %v2750 = vmul.f32 %v2494, %v2637
      %v2751 = vmul.f32 %v2495, %v2642
      %v2752 = vmul.f32 %v2496, %v2647
      %v2753 = vmul.f32 %v2497, %v2652
      %v2754 = vmul.f32 %v2498, %v2657
      %v2755 = vmul.f32 %v2499, %v2662
      %v2756 = vmul.f32 %v2500, %v2667
      %v2757 = vmul.f32 %v2501, %v2672
      %v2758 = vmul.f32 %v2502, %v2677
      %v2759 = vmul.f32 %v2503, %v2682
      %v2760 = vmul.f32 %v2504, %v2687
      %v2761 = vmul.f32 %v2505, %v2692
      %v2762 = vmul.f32 %v2506, %v2697
      %v2763 = vmul.f32 %v2507, %v2702
      %v2764 = vmul.f32 %v2508, %v2707
      %v2765 = vmul.f32 %v2509, %v2712
      %v2766 = vmul.f32 %v2510, %v2717
      %v2767 = vmul.f32 %v2511, %v2722
      %v2768 = vmul.f32 %v2512, %v2727
      %v2769 = vmul.f32 %v2513, %v2732
      %v2770 = vmul.f32 %v2514, %v2737
      %v2771 = vld [vmem:[%s6] sm:$0x1]
      %v2773 = vperm.slane %v2771, 0
      %v2775 = vadd.f32 %v2739, %v2773
      %v2776 = vadd.f32 %v2740, %v2773
      %v2777 = vadd.f32 %v2741, %v2773
      %v2778 = vadd.f32 %v2742, %v2773
      %v2779 = vadd.f32 %v2743, %v2773
      %v2780 = vadd.f32 %v2744, %v2773
      %v2781 = vadd.f32 %v2745, %v2773
      %v2782 = vadd.f32 %v2746, %v2773
      %v2783 = vadd.f32 %v2747, %v2773
      %v2784 = vadd.f32 %v2748, %v2773
      %v2785 = vadd.f32 %v2749, %v2773
      %v2786 = vadd.f32 %v2750, %v2773
      %v2787 = vadd.f32 %v2751, %v2773
      %v2788 = vadd.f32 %v2752, %v2773
      %v2789 = vadd.f32 %v2753, %v2773
      %v2790 = vadd.f32 %v2754, %v2773
      %v2791 = vadd.f32 %v2755, %v2773
      %v2792 = vadd.f32 %v2756, %v2773
      %v2793 = vadd.f32 %v2757, %v2773
      %v2794 = vadd.f32 %v2758, %v2773
      %v2795 = vadd.f32 %v2759, %v2773
      %v2796 = vadd.f32 %v2760, %v2773
      %v2797 = vadd.f32 %v2761, %v2773
      %v2798 = vadd.f32 %v2762, %v2773
      %v2799 = vadd.f32 %v2763, %v2773
      %v2800 = vadd.f32 %v2764, %v2773
      %v2801 = vadd.f32 %v2765, %v2773
      %v2802 = vadd.f32 %v2766, %v2773
      %v2803 = vadd.f32 %v2767, %v2773
      %v2804 = vadd.f32 %v2768, %v2773
      %v2805 = vadd.f32 %v2769, %v2773
      %v2806 = vadd.f32 %v2770, %v2773
      %vm2807 = vcmp.gt.f32.partialorder %v2775, 0.0
      %vm2808 = vcmp.gt.f32.partialorder %v2776, 0.0
      %vm2809 = vcmp.gt.f32.partialorder %v2777, 0.0
      %vm2810 = vcmp.gt.f32.partialorder %v2778, 0.0
      %vm2811 = vcmp.gt.f32.partialorder %v2779, 0.0
      %vm2812 = vcmp.gt.f32.partialorder %v2780, 0.0
      %vm2813 = vcmp.gt.f32.partialorder %v2781, 0.0
      %vm2814 = vcmp.gt.f32.partialorder %v2782, 0.0
      %vm2815 = vcmp.gt.f32.partialorder %v2783, 0.0
      %vm2816 = vcmp.gt.f32.partialorder %v2784, 0.0
      %vm2817 = vcmp.gt.f32.partialorder %v2785, 0.0
      %vm2818 = vcmp.gt.f32.partialorder %v2786, 0.0
      %vm2819 = vcmp.gt.f32.partialorder %v2787, 0.0
      %vm2820 = vcmp.gt.f32.partialorder %v2788, 0.0
      %vm2821 = vcmp.gt.f32.partialorder %v2789, 0.0
      %vm2822 = vcmp.gt.f32.partialorder %v2790, 0.0
      %vm2823 = vcmp.gt.f32.partialorder %v2791, 0.0
      %vm2824 = vcmp.gt.f32.partialorder %v2792, 0.0
      %vm2825 = vcmp.gt.f32.partialorder %v2793, 0.0
      %vm2826 = vcmp.gt.f32.partialorder %v2794, 0.0
      %vm2827 = vcmp.gt.f32.partialorder %v2795, 0.0
      %vm2828 = vcmp.gt.f32.partialorder %v2796, 0.0
      %vm2829 = vcmp.gt.f32.partialorder %v2797, 0.0
      %vm2830 = vcmp.gt.f32.partialorder %v2798, 0.0
      %vm2831 = vcmp.gt.f32.partialorder %v2799, 0.0
      %vm2832 = vcmp.gt.f32.partialorder %v2800, 0.0
      %vm2833 = vcmp.gt.f32.partialorder %v2801, 0.0
      %vm2834 = vcmp.gt.f32.partialorder %v2802, 0.0
      %vm2835 = vcmp.gt.f32.partialorder %v2803, 0.0
      %vm2836 = vcmp.gt.f32.partialorder %v2804, 0.0
      %vm2837 = vcmp.gt.f32.partialorder %v2805, 0.0
      %vm2838 = vcmp.gt.f32.partialorder %v2806, 0.0
      %v2839 = vmin.f32 %v2775, 0.0
      %v2840 = vmin.f32 %v2776, 0.0
      %v2841 = vmin.f32 %v2777, 0.0
      %v2842 = vmin.f32 %v2778, 0.0
      %v2843 = vmin.f32 %v2779, 0.0
      %v2844 = vmin.f32 %v2780, 0.0
      %v2845 = vmin.f32 %v2781, 0.0
      %v2846 = vmin.f32 %v2782, 0.0
      %v2847 = vmin.f32 %v2783, 0.0
      %v2848 = vmin.f32 %v2784, 0.0
      %v2849 = vmin.f32 %v2785, 0.0
      %v2850 = vmin.f32 %v2786, 0.0
      %v2851 = vmin.f32 %v2787, 0.0
      %v2852 = vmin.f32 %v2788, 0.0
      %v2853 = vmin.f32 %v2789, 0.0
      %v2854 = vmin.f32 %v2790, 0.0
      %v2855 = vmin.f32 %v2791, 0.0
      %v2856 = vmin.f32 %v2792, 0.0
      %v2857 = vmin.f32 %v2793, 0.0
      %v2858 = vmin.f32 %v2794, 0.0
      %v2859 = vmin.f32 %v2795, 0.0
      %v2860 = vmin.f32 %v2796, 0.0
      %v2861 = vmin.f32 %v2797, 0.0
      %v2862 = vmin.f32 %v2798, 0.0
      %v2863 = vmin.f32 %v2799, 0.0
      %v2864 = vmin.f32 %v2800, 0.0
      %v2865 = vmin.f32 %v2801, 0.0
      %v2866 = vmin.f32 %v2802, 0.0
      %v2867 = vmin.f32 %v2803, 0.0
      %v2868 = vmin.f32 %v2804, 0.0
      %v2869 = vmin.f32 %v2805, 0.0
      %v2870 = vmin.f32 %v2806, 0.0
      %v2871 = vmul.f32 %v2839, 1.442695
      %v2872 = vpow.pop %v2871
      %v2873 = vmul.f32 %v2840, 1.442695
      %v2874 = vpow.pop %v2873
      %v2875 = vmul.f32 %v2841, 1.442695
      %v2876 = vpow.pop %v2875
      %v2877 = vmul.f32 %v2842, 1.442695
      %v2878 = vpow.pop %v2877
      %v2879 = vmul.f32 %v2843, 1.442695
      %v2880 = vpow.pop %v2879
      %v2881 = vmul.f32 %v2844, 1.442695
      %v2882 = vpow.pop %v2881
      %v2883 = vmul.f32 %v2845, 1.442695
      %v2884 = vpow.pop %v2883
      %v2885 = vmul.f32 %v2846, 1.442695
      %v2886 = vpow.pop %v2885
      %v2887 = vmul.f32 %v2847, 1.442695
      %v2888 = vpow.pop %v2887
      %v2889 = vmul.f32 %v2848, 1.442695
      %v2890 = vpow.pop %v2889
      %v2891 = vmul.f32 %v2849, 1.442695
      %v2892 = vpow.pop %v2891
      %v2893 = vmul.f32 %v2850, 1.442695
      %v2894 = vpow.pop %v2893
      %v2895 = vmul.f32 %v2851, 1.442695
      %v2896 = vpow.pop %v2895
      %v2897 = vmul.f32 %v2852, 1.442695
      %v2898 = vpow.pop %v2897
      %v2899 = vmul.f32 %v2853, 1.442695
      %v2900 = vpow.pop %v2899
      %v2901 = vmul.f32 %v2854, 1.442695
      %v2902 = vpow.pop %v2901
      %v2903 = vmul.f32 %v2855, 1.442695
      %v2904 = vpow.pop %v2903
      %v2905 = vmul.f32 %v2856, 1.442695
      %v2906 = vpow.pop %v2905
      %v2907 = vmul.f32 %v2857, 1.442695
      %v2908 = vpow.pop %v2907
      %v2909 = vmul.f32 %v2858, 1.442695
      %v2910 = vpow.pop %v2909
      %v2911 = vmul.f32 %v2859, 1.442695
      %v2912 = vpow.pop %v2911
      %v2913 = vmul.f32 %v2860, 1.442695
      %v2914 = vpow.pop %v2913
      %v2915 = vmul.f32 %v2861, 1.442695
      %v2916 = vpow.pop %v2915
      %v2917 = vmul.f32 %v2862, 1.442695
      %v2918 = vpow.pop %v2917
      %v2919 = vmul.f32 %v2863, 1.442695
      %v2920 = vpow.pop %v2919
      %v2921 = vmul.f32 %v2864, 1.442695
      %v2922 = vpow.pop %v2921
      %v2923 = vmul.f32 %v2865, 1.442695
      %v2924 = vpow.pop %v2923
      %v2925 = vmul.f32 %v2866, 1.442695
      %v2926 = vpow.pop %v2925
      %v2927 = vmul.f32 %v2867, 1.442695
      %v2928 = vpow.pop %v2927
      %v2929 = vmul.f32 %v2868, 1.442695
      %v2930 = vpow.pop %v2929
      %v2931 = vmul.f32 %v2869, 1.442695
      %v2932 = vpow.pop %v2931
      %v2933 = vmul.f32 %v2870, 1.442695
      %v2934 = vpow.pop %v2933
      %v2935 = vsub.f32 %v2872, 1.0
      %v2936 = vsub.f32 %v2874, 1.0
      %v2937 = vsub.f32 %v2876, 1.0
      %v2938 = vsub.f32 %v2878, 1.0
      %v2939 = vsub.f32 %v2880, 1.0
      %v2940 = vsub.f32 %v2882, 1.0
      %v2941 = vsub.f32 %v2884, 1.0
      %v2942 = vsub.f32 %v2886, 1.0
      %v2943 = vsub.f32 %v2888, 1.0
      %v2944 = vsub.f32 %v2890, 1.0
      %v2945 = vsub.f32 %v2892, 1.0
      %v2946 = vsub.f32 %v2894, 1.0
      %v2947 = vsub.f32 %v2896, 1.0
      %v2948 = vsub.f32 %v2898, 1.0
      %v2949 = vsub.f32 %v2900, 1.0
      %v2950 = vsub.f32 %v2902, 1.0
      %v2951 = vsub.f32 %v2904, 1.0
      %v2952 = vsub.f32 %v2906, 1.0
      %v2953 = vsub.f32 %v2908, 1.0
      %v2954 = vsub.f32 %v2910, 1.0
      %v2955 = vsub.f32 %v2912, 1.0
      %v2956 = vsub.f32 %v2914, 1.0
      %v2957 = vsub.f32 %v2916, 1.0
      %v2958 = vsub.f32 %v2918, 1.0
      %v2959 = vsub.f32 %v2920, 1.0
      %v2960 = vsub.f32 %v2922, 1.0
      %v2961 = vsub.f32 %v2924, 1.0
      %v2962 = vsub.f32 %v2926, 1.0
      %v2963 = vsub.f32 %v2928, 1.0
      %v2964 = vsub.f32 %v2930, 1.0
      %v2965 = vsub.f32 %v2932, 1.0
      %v2966 = vsub.f32 %v2934, 1.0
      %v2967 = vsel %vm2807, %v2775, %v2935
      %v2968 = vsel %vm2808, %v2776, %v2936
      %v2969 = vsel %vm2809, %v2777, %v2937
      %v2970 = vsel %vm2810, %v2778, %v2938
      %v2971 = vsel %vm2811, %v2779, %v2939
      %v2972 = vsel %vm2812, %v2780, %v2940
      %v2973 = vsel %vm2813, %v2781, %v2941
      %v2974 = vsel %vm2814, %v2782, %v2942
      %v2975 = vsel %vm2815, %v2783, %v2943
      %v2976 = vsel %vm2816, %v2784, %v2944
      %v2977 = vsel %vm2817, %v2785, %v2945
      %v2978 = vsel %vm2818, %v2786, %v2946
      %v2979 = vsel %vm2819, %v2787, %v2947
      %v2980 = vsel %vm2820, %v2788, %v2948
      %v2981 = vsel %vm2821, %v2789, %v2949
      %v2982 = vsel %vm2822, %v2790, %v2950
      %v2983 = vsel %vm2823, %v2791, %v2951
      %v2984 = vsel %vm2824, %v2792, %v2952
      %v2985 = vsel %vm2825, %v2793, %v2953
      %v2986 = vsel %vm2826, %v2794, %v2954
      %v2987 = vsel %vm2827, %v2795, %v2955
      %v2988 = vsel %vm2828, %v2796, %v2956
      %v2989 = vsel %vm2829, %v2797, %v2957
      %v2990 = vsel %vm2830, %v2798, %v2958
      %v2991 = vsel %vm2831, %v2799, %v2959
      %v2992 = vsel %vm2832, %v2800, %v2960
      %v2993 = vsel %vm2833, %v2801, %v2961
      %v2994 = vsel %vm2834, %v2802, %v2962
      %v2995 = vsel %vm2835, %v2803, %v2963
      %v2996 = vsel %vm2836, %v2804, %v2964
      %v2997 = vsel %vm2837, %v2805, %v2965
      %v2998 = vsel %vm2838, %v2806, %v2966
      %v2999 = vld [vmem:[%s5] sm:$0xff]
      %v3000 = vld [vmem:[%s5 + $0x8] sm:$0xff]
      %v3001 = vld [vmem:[%s5 + $0x10] sm:$0xff]
      %v3002 = vld [vmem:[%s5 + $0x18] sm:$0xff]
      %v3003 = vld [vmem:[%s5 + $0x20] sm:$0xff]
      %v3004 = vld [vmem:[%s5 + $0x28] sm:$0xff]
      %v3005 = vld [vmem:[%s5 + $0x30] sm:$0xff]
      %v3006 = vld [vmem:[%s5 + $0x38] sm:$0xff]
      %v3007 = vld [vmem:[%s5 + $0x40] sm:$0xff]
      %v3008 = vld [vmem:[%s5 + $0x48] sm:$0xff]
      %v3009 = vld [vmem:[%s5 + $0x50] sm:$0xff]
      %v3010 = vld [vmem:[%s5 + $0x58] sm:$0xff]
      %v3011 = vld [vmem:[%s5 + $0x60] sm:$0xff]
      %v3012 = vld [vmem:[%s5 + $0x68] sm:$0xff]
      %v3013 = vld [vmem:[%s5 + $0x70] sm:$0xff]
      %v3014 = vld [vmem:[%s5 + $0x78] sm:$0xff]
      %v3015 = vld [vmem:[%s5 + $0x80] sm:$0xff]
      %v3016 = vld [vmem:[%s5 + $0x88] sm:$0xff]
      %v3017 = vld [vmem:[%s5 + $0x90] sm:$0xff]
      %v3018 = vld [vmem:[%s5 + $0x98] sm:$0xff]
      %v3019 = vld [vmem:[%s5 + $0xa0] sm:$0xff]
      %v3020 = vld [vmem:[%s5 + $0xa8] sm:$0xff]
      %v3021 = vld [vmem:[%s5 + $0xb0] sm:$0xff]
      %v3022 = vld [vmem:[%s5 + $0xb8] sm:$0xff]
      %v3023 = vld [vmem:[%s5 + $0xc0] sm:$0xff]
      %v3024 = vld [vmem:[%s5 + $0xc8] sm:$0xff]
      %v3025 = vld [vmem:[%s5 + $0xd0] sm:$0xff]
      %v3026 = vld [vmem:[%s5 + $0xd8] sm:$0xff]
      %v3027 = vld [vmem:[%s5 + $0xe0] sm:$0xff]
      %v3028 = vld [vmem:[%s5 + $0xe8] sm:$0xff]
      %v3029 = vld [vmem:[%s5 + $0xf0] sm:$0xff]
      %v3030 = vld [vmem:[%s5 + $0xf8] sm:$0xff]
      %v3031 = vadd.f32 %v2967, %v2999
      %v3032 = vadd.f32 %v2968, %v3000
      %v3033 = vadd.f32 %v2969, %v3001
      %v3034 = vadd.f32 %v2970, %v3002
      %v3035 = vadd.f32 %v2971, %v3003
      %v3036 = vadd.f32 %v2972, %v3004
      %v3037 = vadd.f32 %v2973, %v3005
      %v3038 = vadd.f32 %v2974, %v3006
      %v3039 = vadd.f32 %v2975, %v3007
      %v3040 = vadd.f32 %v2976, %v3008
      %v3041 = vadd.f32 %v2977, %v3009
      %v3042 = vadd.f32 %v2978, %v3010
      %v3043 = vadd.f32 %v2979, %v3011
      %v3044 = vadd.f32 %v2980, %v3012
      %v3045 = vadd.f32 %v2981, %v3013
      %v3046 = vadd.f32 %v2982, %v3014
      %v3047 = vadd.f32 %v2983, %v3015
      %v3048 = vadd.f32 %v2984, %v3016
      %v3049 = vadd.f32 %v2985, %v3017
      %v3050 = vadd.f32 %v2986, %v3018
      %v3051 = vadd.f32 %v2987, %v3019
      %v3052 = vadd.f32 %v2988, %v3020
      %v3053 = vadd.f32 %v2989, %v3021
      %v3054 = vadd.f32 %v2990, %v3022
      %v3055 = vadd.f32 %v2991, %v3023
      %v3056 = vadd.f32 %v2992, %v3024
      %v3057 = vadd.f32 %v2993, %v3025
      %v3058 = vadd.f32 %v2994, %v3026
      %v3059 = vadd.f32 %v2995, %v3027
      %v3060 = vadd.f32 %v2996, %v3028
      %v3061 = vadd.f32 %v2997, %v3029
      %v3062 = vadd.f32 %v2998, %v3030
      %3063 = vst [vmem:[#allocation12] sm:$0xff] %v3031
      %3064 = vst [vmem:[#allocation12 + $0x8] sm:$0xff] %v3032
      %3065 = vst [vmem:[#allocation12 + $0x10] sm:$0xff] %v3033
      %3066 = vst [vmem:[#allocation12 + $0x18] sm:$0xff] %v3034
      %3067 = vst [vmem:[#allocation12 + $0x20] sm:$0xff] %v3035
      %3068 = vst [vmem:[#allocation12 + $0x28] sm:$0xff] %v3036
      %3069 = vst [vmem:[#allocation12 + $0x30] sm:$0xff] %v3037
      %3070 = vst [vmem:[#allocation12 + $0x38] sm:$0xff] %v3038
      %3071 = vst [vmem:[#allocation12 + $0x40] sm:$0xff] %v3039
      %3072 = vst [vmem:[#allocation12 + $0x48] sm:$0xff] %v3040
      %3073 = vst [vmem:[#allocation12 + $0x50] sm:$0xff] %v3041
      %3074 = vst [vmem:[#allocation12 + $0x58] sm:$0xff] %v3042
      %3075 = vst [vmem:[#allocation12 + $0x60] sm:$0xff] %v3043
      %3076 = vst [vmem:[#allocation12 + $0x68] sm:$0xff] %v3044
      %3077 = vst [vmem:[#allocation12 + $0x70] sm:$0xff] %v3045
      %3078 = vst [vmem:[#allocation12 + $0x78] sm:$0xff] %v3046
      %3079 = vst [vmem:[#allocation12 + $0x80] sm:$0xff] %v3047
      %3080 = vst [vmem:[#allocation12 + $0x88] sm:$0xff] %v3048
      %3081 = vst [vmem:[#allocation12 + $0x90] sm:$0xff] %v3049
      %3082 = vst [vmem:[#allocation12 + $0x98] sm:$0xff] %v3050
      %3083 = vst [vmem:[#allocation12 + $0xa0] sm:$0xff] %v3051
      %3084 = vst [vmem:[#allocation12 + $0xa8] sm:$0xff] %v3052
      %3085 = vst [vmem:[#allocation12 + $0xb0] sm:$0xff] %v3053
      %3086 = vst [vmem:[#allocation12 + $0xb8] sm:$0xff] %v3054
      %3087 = vst [vmem:[#allocation12 + $0xc0] sm:$0xff] %v3055
      %3088 = vst [vmem:[#allocation12 + $0xc8] sm:$0xff] %v3056
      %3089 = vst [vmem:[#allocation12 + $0xd0] sm:$0xff] %v3057
      %3090 = vst [vmem:[#allocation12 + $0xd8] sm:$0xff] %v3058
      %3091 = vst [vmem:[#allocation12 + $0xe0] sm:$0xff] %v3059
      %3092 = vst [vmem:[#allocation12 + $0xe8] sm:$0xff] %v3060
      %3093 = vst [vmem:[#allocation12 + $0xf0] sm:$0xff] %v3061
      %3094 = vst [vmem:[#allocation12 + $0xf8] sm:$0xff] %v3062
    $region45: #{tpu_custom_call.1} parent=1 // pred_fallthru
      _
    // Predicated region
    $region46: #{tpu_custom_call.1} parent=1 // pred_check
      _
    $region47: #{tpu_custom_call.1} parent=1 // pred_check_branch
      %3096 = sbr.rel (0) target = $region49
    $region48: #{tpu_custom_call.1} parent=1 // pred_region
      %3098 = vsyncadd [#allocation9], 0
      %s3099 = sshll.u32 [#allocation12], 4
      %s3100 = int_to_ptr.vmem [resolvable:$true] %s3099
      %s3101 = sshll.u32 %s7, 4
      %s3102 = int_to_ptr.hbm [resolvable:$true] %s3101
      %3107 = dma.vmem_to_hbm [thread:$0]  %s3100, 4096, %s3102, [#allocation9], 128, 128, 8
    $region49: #{tpu_custom_call.1} parent=1 // pred_fallthru
      _
    // Predicated region
    $region50: #{tpu_custom_call.1} parent=1 // pred_check
      _
    $region51: #{tpu_custom_call.1} parent=1 // pred_check_branch
      %3109 = sbr.rel (0) target = $region53
    $region52: #{tpu_custom_call.1} parent=1 // pred_region
      %3111 = dma.done [#allocation9], 4096
    $region53: #{tpu_custom_call.1} parent=1 // pred_fallthru
      _
    %3112 = vsyncpa [#allocation8], 1
    %3113 = vsyncpa [#allocation11], 1
    %3114 = vsyncpa [#allocation9], 1

</llo_original>
